<compile_context>
chip_gen: v7x
topology: tpu7x:2x2x1
jax: 0.10.0
libtpu: 0.0.40
codegen_flags: <defaults>
</compile_context>

<pallas_src>
import math

import jax
import jax.numpy as jnp
from jax import lax
from jax.experimental import pallas as pl
from jax.experimental.pallas import tpu as pltpu

# ---- small, BERT-like synthetic config ----
VOCAB = 100
MAX_POS = 16
HIDDEN = 32
N_HEADS = 2
HEAD_DIM = HIDDEN // N_HEADS
N_LAYERS = 2
INTERMEDIATE = 64
NUM_CLASSES = 2
CLS_PAD = 128            # lane-dense logits slab; sliced back to NUM_CLASSES
LN_EPS = 1e-12
NEG_INF = -1e9

# weight slab page geometry (every weight lives in one zero-padded page)
PAGE_R, PAGE_C = 64, 128
W_PER_LAYER = 4 + 2 * N_HEADS        # wq, wk_h*, wv_h*, wo, w1, w2  -> 8
B_PER_LAYER = 8 + 2 * N_HEADS        # bq, bk_h*, bv_h*, bo, b1, b2, 4x LN -> 12
BLN_BASE = 3                         # rows 0,1: emb LN gamma/beta; row 2: cls_b


def _vmem():
    return pl.BlockSpec(memory_space=pltpu.MemorySpace.VMEM)


# ---------------- fused encoder kernel ----------------

def _layer_norm(x, g, b):
    mean = jnp.mean(x, axis=-1, keepdims=True)
    var = jnp.mean(jnp.square(x - mean), axis=-1, keepdims=True)
    return (x - mean) * lax.rsqrt(var + LN_EPS) * g + b


def _gelu_erf(x):
    # exact (erf) GELU, matches torch / HF default
    return 0.5 * x * (1.0 + lax.erf(x / math.sqrt(2.0)))


def _encoder_kernel(x_ref, ab_ref, w_ref, bln_ref, out_ref):
    H, I = HIDDEN, INTERMEDIATE

    def w(page, r, c):
        # offset-0 sub-window of one weight page (no lane/sublane shifts)
        return w_ref[page, 0:r, 0:c]

    def b(row, c=HIDDEN):
        return bln_ref[row:row + 1, 0:c]          # (1, c) broadcast row

    # Embeddings LayerNorm (embedding gathers happen in the wrapper).
    x = _layer_norm(x_ref[...].astype(jnp.float32), b(0), b(1))   # (B*S, H)
    attn_bias = ab_ref[...]                                       # (B*S, B*S)

    for l in range(N_LAYERS):                     # static unroll (N_LAYERS == 2)
        wp = l * W_PER_LAYER
        bp = BLN_BASE + l * B_PER_LAYER

        # Q projection (1/sqrt(dH) pre-folded into weights & bias).
        q = jnp.dot(x, w(wp, H, H), preferred_element_type=jnp.float32) + b(bp)

        # Attention over the full (B*S) slab; per-head K/V are produced by
        # head-masked weights, so no lane slices or concatenates are needed.
        ctx = jnp.zeros_like(x)
        for h in range(N_HEADS):
            k_h = jnp.dot(x, w(wp + 1 + h, H, H),
                          preferred_element_type=jnp.float32) + b(bp + 1 + h)
            v_h = jnp.dot(x, w(wp + 1 + N_HEADS + h, H, H),
                          preferred_element_type=jnp.float32) + b(bp + 1 + N_HEADS + h)
            # Q . K_h^T : non-head-h dims of K_h are zero, so this contracts
            # only over head-h features.  (B*S, B*S) scores.
            s = lax.dot_general(q, k_h, (((1,), (1,)), ((), ())),
                                preferred_element_type=jnp.float32)
            s = s + attn_bias                     # kills cross-batch + padded keys
            s = s - jnp.max(s, axis=-1, keepdims=True)
            p = jnp.exp(s)
            p = p * pl.reciprocal(jnp.sum(p, axis=-1, keepdims=True))  # exact
            # masked V -> head-h context lands in its own lanes; just add.
            ctx = ctx + jnp.dot(p, v_h, preferred_element_type=jnp.float32)

        wo_i = wp + 1 + 2 * N_HEADS
        bo_i = bp + 1 + 2 * N_HEADS

        # Output projection + residual + post-LN (BERT style).
        attn_out = jnp.dot(ctx, w(wo_i, H, H),
                           preferred_element_type=jnp.float32) + b(bo_i)
        x = _layer_norm(x + attn_out, b(bo_i + 3), b(bo_i + 4))

        # FFN (exact GELU) + residual + post-LN.
        ff = _gelu_erf(jnp.dot(x, w(wo_i + 1, H, I),
                               preferred_element_type=jnp.float32) + b(bo_i + 1, I))
        ff = jnp.dot(ff, w(wo_i + 2, I, H),
                     preferred_element_type=jnp.float32) + b(bo_i + 2)
        x = _layer_norm(x + ff, b(bo_i + 5), b(bo_i + 6))

    # Classifier head on the FULL slab (lane-dense, no CLS-row gather here);
    # the wrapper selects position-0 rows and slices off the lane padding.
    cls_page = N_LAYERS * W_PER_LAYER
    logits = jnp.dot(x, w(cls_page, H, CLS_PAD),
                     preferred_element_type=jnp.float32) + b(2, CLS_PAD)
    out_ref[...] = logits.astype(out_ref.dtype)


# ---------------- parameters (deterministic synthetic init) ----------------

def init_params(key):
    def normal(k, shape):
        return (0.02 * jax.random.normal(k, shape)).astype(jnp.float32)

    keys = iter(jax.random.split(key, 64))
    params = {
        "word_emb": normal(next(keys), (VOCAB, HIDDEN)),
        "pos_emb": normal(next(keys), (MAX_POS, HIDDEN)),
        "type_emb": normal(next(keys), (2, HIDDEN)),
        "emb_ln_g": jnp.ones((HIDDEN,), jnp.float32),
        "emb_ln_b": jnp.zeros((HIDDEN,), jnp.float32),
        "cls_w": normal(next(keys), (HIDDEN, NUM_CLASSES)),
        "cls_b": jnp.zeros((NUM_CLASSES,), jnp.float32),
        "layers": [],
    }
    for _ in range(N_LAYERS):
        params["layers"].append({
            "wq": normal(next(keys), (HIDDEN, HIDDEN)),
            "bq": jnp.zeros((HIDDEN,), jnp.float32),
            "wk": normal(next(keys), (HIDDEN, HIDDEN)),
            "bk": jnp.zeros((HIDDEN,), jnp.float32),
            "wv": normal(next(keys), (HIDDEN, HIDDEN)),
            "bv": jnp.zeros((HIDDEN,), jnp.float32),
            "wo": normal(next(keys), (HIDDEN, HIDDEN)),
            "bo": jnp.zeros((HIDDEN,), jnp.float32),
            "ln1_g": jnp.ones((HIDDEN,), jnp.float32),
            "ln1_b": jnp.zeros((HIDDEN,), jnp.float32),
            "w1": normal(next(keys), (HIDDEN, INTERMEDIATE)),
            "b1": jnp.zeros((INTERMEDIATE,), jnp.float32),
            "w2": normal(next(keys), (INTERMEDIATE, HIDDEN)),
            "b2": jnp.zeros((HIDDEN,), jnp.float32),
            "ln2_g": jnp.ones((HIDDEN,), jnp.float32),
            "ln2_b": jnp.zeros((HIDDEN,), jnp.float32),
        })
    return params


def _pack_params(params):
    """Pack every matmul weight into one (pages, 64, 128) slab and every
    bias / LayerNorm vector into one (rows, 128) slab.

    Folds at pack time (zero in-kernel cost):
      * 1/sqrt(dH) attention scale into the Q weights/bias,
      * per-head masking into the K/V weights/biases,
      * lane padding of the classifier head to 128."""
    scale = 1.0 / math.sqrt(HEAD_DIM)

    def page(mat):
        r, c = mat.shape
        return jnp.pad(mat, ((0, PAGE_R - r), (0, PAGE_C - c)))

    def row(vec):
        return jnp.pad(vec, (0, PAGE_C - vec.shape[0]))

    def hmask(h):
        m = jnp.zeros((HIDDEN,), jnp.float32)
        return m.at[h * HEAD_DIM:(h + 1) * HEAD_DIM].set(1.0)

    pages = []
    rows = [params["emb_ln_g"], params["emb_ln_b"],
            jnp.pad(params["cls_b"], (0, CLS_PAD - NUM_CLASSES))]

    for l in params["layers"]:
        pages.append(page(l["wq"] * scale))
        pages += [page(l["wk"] * hmask(h)[None, :]) for h in range(N_HEADS)]
        pages += [page(l["wv"] * hmask(h)[None, :]) for h in range(N_HEADS)]
        pages += [page(l["wo"]), page(l["w1"]), page(l["w2"])]

        rows.append(l["bq"] * scale)
        rows += [l["bk"] * hmask(h) for h in range(N_HEADS)]
        rows += [l["bv"] * hmask(h) for h in range(N_HEADS)]
        rows += [l["bo"], l["b1"], l["b2"],
                 l["ln1_g"], l["ln1_b"], l["ln2_g"], l["ln2_b"]]

    pages.append(page(jnp.pad(params["cls_w"],
                              ((0, 0), (0, CLS_PAD - NUM_CLASSES)))))

    return {
        "wslab": jnp.stack(pages),                 # (L*8 + 1, 64, 128)
        "bln": jnp.stack([row(r) for r in rows]),  # (3 + L*12, 128)
    }


# ---------------- forward (== ColaClassifier.forward) ----------------

def cola_classifier_forward(params, input_ids, attention_mask):
    B, S = input_ids.shape
    H = HIDDEN
    packed = _pack_params(params)

    # BERT embeddings: word + position + token-type(0) (gathers are JAX glue;
    # the embeddings LayerNorm runs inside the kernel).
    x = (jnp.take(params["word_emb"], input_ids, axis=0)
         + params["pos_emb"][:S][None, :, :]
         + params["type_emb"][0][None, None, :]).reshape(B * S, H)

    # Combined additive attention bias over the flattened (B*S) key axis:
    # 0 where query/key share a batch AND the key is not padding, -1e9 otherwise
    # (HF-style extended mask + batch block-diagonal structure).
    key_valid = attention_mask.reshape(-1).astype(jnp.float32)        # (B*S,)
    row_batch = jnp.repeat(jnp.arange(B), S)                          # (B*S,)
    same_batch = (row_batch[:, None] == row_batch[None, :]).astype(jnp.float32)
    attn_bias = (1.0 - same_batch * key_valid[None, :]) * NEG_INF     # (B*S, B*S)

    logits_full = pl.pallas_call(
        _encoder_kernel,
        out_shape=jax.ShapeDtypeStruct((B * S, CLS_PAD), jnp.float32),
        in_specs=[_vmem()] * 4,
        out_specs=_vmem(),
        # grid=() : whole problem fits in VMEM, nothing to pipeline at this
        # size; add a batch grid axis with dimension_semantics=("parallel",)
        # only if B*S grows (v7x second TensorCore / VMEM budget).
    )(x, attn_bias, packed["wslab"], packed["bln"])

    # CLS token = position 0 of each sequence; drop lane padding.
    return logits_full.reshape(B, S, CLS_PAD)[:, 0, :NUM_CLASSES]


if __name__ == "__main__":
    key = jax.random.PRNGKey(0)
    k_params, k_ids = jax.random.split(key)

    params = init_params(k_params)

    B, S = 2, 8
    input_ids = jax.random.randint(k_ids, (B, S), 0, VOCAB, dtype=jnp.int32)
    attention_mask = jnp.array([[1, 1, 1, 1, 1, 1, 1, 1],
                                [1, 1, 1, 1, 1, 1, 0, 0]], dtype=jnp.int32)

    logits = jax.jit(cola_classifier_forward)(params, input_ids, attention_mask)
    logits = jax.block_until_ready(logits)

    assert logits.shape == (B, NUM_CLASSES)
    assert bool(jnp.all(jnp.isfinite(logits)))
    print("KERNEL_OK")
</pallas_src>

<mosaic_0001>
module attributes {stable_mosaic.version = 11 : i64} {
  func.func @_encoder_kernel(%arg0: memref<16x32xf32, #tpu.memory_space<vmem>>, %arg1: memref<16x16xf32, #tpu.memory_space<vmem>>, %arg2: memref<17x64x128xf32, #tpu.memory_space<vmem>>, %arg3: memref<27x128xf32, #tpu.memory_space<vmem>>, %arg4: memref<16x128xf32, #tpu.memory_space<vmem>>) attributes {dimension_semantics = [], scalar_prefetch = 0 : i64, scratch_operands = 0 : i64, tpu.core_type = #tpu.core_type<tc>} {
    %c0 = arith.constant 0 : index
    %c0_0 = arith.constant 0 : index
    %0 = vector.load %arg0[%c0, %c0_0] : memref<16x32xf32, #tpu.memory_space<vmem>>, vector<16x32xf32>
    %c0_1 = arith.constant 0 : index
    %c0_2 = arith.constant 0 : index
    %1 = vector.load %arg3[%c0_1, %c0_2] : memref<27x128xf32, #tpu.memory_space<vmem>>, vector<1x32xf32>
    %c1 = arith.constant 1 : index
    %c0_3 = arith.constant 0 : index
    %2 = vector.load %arg3[%c1, %c0_3] : memref<27x128xf32, #tpu.memory_space<vmem>>, vector<1x32xf32>
    %cst = arith.constant dense<0.000000e+00> : vector<16xf32>
    %3 = vector.multi_reduction <add>, %0, %cst [1] : vector<16x32xf32> to vector<16xf32>
    %4 = vector.shape_cast %3 : vector<16xf32> to vector<16x1xf32>
    %cst_4 = arith.constant 3.200000e+01 : f32
    %5 = vector.broadcast %cst_4 : f32 to vector<16x1xf32>
    %6 = arith.divf %4, %5 : vector<16x1xf32>
    %7 = vector.broadcast %6 : vector<16x1xf32> to vector<16x32xf32>
    %8 = arith.subf %0, %7 : vector<16x32xf32>
    %9 = arith.mulf %8, %8 : vector<16x32xf32>
    %cst_5 = arith.constant dense<0.000000e+00> : vector<16xf32>
    %10 = vector.multi_reduction <add>, %9, %cst_5 [1] : vector<16x32xf32> to vector<16xf32>
    %11 = vector.shape_cast %10 : vector<16xf32> to vector<16x1xf32>
    %cst_6 = arith.constant 3.200000e+01 : f32
    %12 = vector.broadcast %cst_6 : f32 to vector<16x1xf32>
    %13 = arith.divf %11, %12 : vector<16x1xf32>
    %14 = vector.broadcast %6 : vector<16x1xf32> to vector<16x32xf32>
    %15 = arith.subf %0, %14 : vector<16x32xf32>
    %cst_7 = arith.constant 9.99999996E-13 : f32
    %16 = vector.broadcast %cst_7 : f32 to vector<16x1xf32>
    %17 = arith.addf %13, %16 : vector<16x1xf32>
    %18 = math.rsqrt %17 : vector<16x1xf32>
    %19 = vector.broadcast %18 : vector<16x1xf32> to vector<16x32xf32>
    %20 = arith.mulf %15, %19 : vector<16x32xf32>
    %21 = vector.broadcast %1 : vector<1x32xf32> to vector<16x32xf32>
    %22 = arith.mulf %20, %21 : vector<16x32xf32>
    %23 = vector.broadcast %2 : vector<1x32xf32> to vector<16x32xf32>
    %24 = arith.addf %22, %23 : vector<16x32xf32>
    %c0_8 = arith.constant 0 : index
    %c0_9 = arith.constant 0 : index
    %25 = vector.load %arg1[%c0_8, %c0_9] : memref<16x16xf32, #tpu.memory_space<vmem>>, vector<16x16xf32>
    %c0_10 = arith.constant 0 : index
    %c0_11 = arith.constant 0 : index
    %c0_12 = arith.constant 0 : index
    %26 = vector.load %arg2[%c0_10, %c0_11, %c0_12] : memref<17x64x128xf32, #tpu.memory_space<vmem>>, vector<1x32x32xf32>
    %27 = vector.shape_cast %26 : vector<1x32x32xf32> to vector<32x32xf32>
    %cst_13 = arith.constant dense<0.000000e+00> : vector<16x32xf32>
    %28 = tpu.matmul %24, %27, %cst_13 {dimension_numbers = #tpu.dot_dimension_numbers<[1], [0], [0], [1], [0, 0, 1, 1], [], []>} : vector<16x32xf32>, vector<32x32xf32>, vector<16x32xf32> -> vector<16x32xf32>
    %c3 = arith.constant 3 : index
    %c0_14 = arith.constant 0 : index
    %29 = vector.load %arg3[%c3, %c0_14] : memref<27x128xf32, #tpu.memory_space<vmem>>, vector<1x32xf32>
    %30 = vector.broadcast %29 : vector<1x32xf32> to vector<16x32xf32>
    %31 = arith.addf %28, %30 : vector<16x32xf32>
    %cst_15 = arith.constant 0.000000e+00 : f32
    %32 = vector.broadcast %cst_15 : f32 to vector<16x32xf32>
    %c1_16 = arith.constant 1 : index
    %c0_17 = arith.constant 0 : index
    %c0_18 = arith.constant 0 : index
    %33 = vector.load %arg2[%c1_16, %c0_17, %c0_18] : memref<17x64x128xf32, #tpu.memory_space<vmem>>, vector<1x32x32xf32>
    %34 = vector.shape_cast %33 : vector<1x32x32xf32> to vector<32x32xf32>
    %cst_19 = arith.constant dense<0.000000e+00> : vector<16x32xf32>
    %35 = tpu.matmul %24, %34, %cst_19 {dimension_numbers = #tpu.dot_dimension_numbers<[1], [0], [0], [1], [0, 0, 1, 1], [], []>} : vector<16x32xf32>, vector<32x32xf32>, vector<16x32xf32> -> vector<16x32xf32>
    %c4 = arith.constant 4 : index
    %c0_20 = arith.constant 0 : index
    %36 = vector.load %arg3[%c4, %c0_20] : memref<27x128xf32, #tpu.memory_space<vmem>>, vector<1x32xf32>
    %37 = vector.broadcast %36 : vector<1x32xf32> to vector<16x32xf32>
    %38 = arith.addf %35, %37 : vector<16x32xf32>
    %c3_21 = arith.constant 3 : index
    %c0_22 = arith.constant 0 : index
    %c0_23 = arith.constant 0 : index
    %39 = vector.load %arg2[%c3_21, %c0_22, %c0_23] : memref<17x64x128xf32, #tpu.memory_space<vmem>>, vector<1x32x32xf32>
    %40 = vector.shape_cast %39 : vector<1x32x32xf32> to vector<32x32xf32>
    %cst_24 = arith.constant dense<0.000000e+00> : vector<16x32xf32>
    %41 = tpu.matmul %24, %40, %cst_24 {dimension_numbers = #tpu.dot_dimension_numbers<[1], [0], [0], [1], [0, 0, 1, 1], [], []>} : vector<16x32xf32>, vector<32x32xf32>, vector<16x32xf32> -> vector<16x32xf32>
    %c6 = arith.constant 6 : index
    %c0_25 = arith.constant 0 : index
    %42 = vector.load %arg3[%c6, %c0_25] : memref<27x128xf32, #tpu.memory_space<vmem>>, vector<1x32xf32>
    %43 = vector.broadcast %42 : vector<1x32xf32> to vector<16x32xf32>
    %44 = arith.addf %41, %43 : vector<16x32xf32>
    %cst_26 = arith.constant dense<0.000000e+00> : vector<16x16xf32>
    %45 = tpu.matmul %31, %38, %cst_26 {dimension_numbers = #tpu.dot_dimension_numbers<[1], [1], [0], [0], [0, 0, 1, 0], [], []>} : vector<16x32xf32>, vector<16x32xf32>, vector<16x16xf32> -> vector<16x16xf32>
    %46 = arith.addf %45, %25 : vector<16x16xf32>
    %cst_27 = arith.constant dense<0xFF800000> : vector<16xf32>
    %47 = vector.multi_reduction <maximumf>, %46, %cst_27 [1] : vector<16x16xf32> to vector<16xf32>
    %48 = vector.shape_cast %47 : vector<16xf32> to vector<16x1xf32>
    %49 = vector.broadcast %48 : vector<16x1xf32> to vector<16x16xf32>
    %50 = arith.subf %46, %49 : vector<16x16xf32>
    %51 = math.exp %50 : vector<16x16xf32>
    %cst_28 = arith.constant dense<0.000000e+00> : vector<16xf32>
    %52 = vector.multi_reduction <add>, %51, %cst_28 [1] : vector<16x16xf32> to vector<16xf32>
    %53 = vector.shape_cast %52 : vector<16xf32> to vector<16x1xf32>
    %54 = tpu.reciprocal %53 : vector<16x1xf32> -> vector<16x1xf32>
    %55 = vector.broadcast %54 : vector<16x1xf32> to vector<16x16xf32>
    %56 = arith.mulf %51, %55 : vector<16x16xf32>
    %cst_29 = arith.constant dense<0.000000e+00> : vector<16x32xf32>
    %57 = tpu.matmul %56, %44, %cst_29 {dimension_numbers = #tpu.dot_dimension_numbers<[1], [0], [0], [1], [0, 0, 1, 1], [], []>} : vector<16x16xf32>, vector<16x32xf32>, vector<16x32xf32> -> vector<16x32xf32>
    %58 = arith.addf %32, %57 : vector<16x32xf32>
    %c2 = arith.constant 2 : index
    %c0_30 = arith.constant 0 : index
    %c0_31 = arith.constant 0 : index
    %59 = vector.load %arg2[%c2, %c0_30, %c0_31] : memref<17x64x128xf32, #tpu.memory_space<vmem>>, vector<1x32x32xf32>
    %60 = vector.shape_cast %59 : vector<1x32x32xf32> to vector<32x32xf32>
    %cst_32 = arith.constant dense<0.000000e+00> : vector<16x32xf32>
    %61 = tpu.matmul %24, %60, %cst_32 {dimension_numbers = #tpu.dot_dimension_numbers<[1], [0], [0], [1], [0, 0, 1, 1], [], []>} : vector<16x32xf32>, vector<32x32xf32>, vector<16x32xf32> -> vector<16x32xf32>
    %c5 = arith.constant 5 : index
    %c0_33 = arith.constant 0 : index
    %62 = vector.load %arg3[%c5, %c0_33] : memref<27x128xf32, #tpu.memory_space<vmem>>, vector<1x32xf32>
    %63 = vector.broadcast %62 : vector<1x32xf32> to vector<16x32xf32>
    %64 = arith.addf %61, %63 : vector<16x32xf32>
    %c4_34 = arith.constant 4 : index
    %c0_35 = arith.constant 0 : index
    %c0_36 = arith.constant 0 : index
    %65 = vector.load %arg2[%c4_34, %c0_35, %c0_36] : memref<17x64x128xf32, #tpu.memory_space<vmem>>, vector<1x32x32xf32>
    %66 = vector.shape_cast %65 : vector<1x32x32xf32> to vector<32x32xf32>
    %cst_37 = arith.constant dense<0.000000e+00> : vector<16x32xf32>
    %67 = tpu.matmul %24, %66, %cst_37 {dimension_numbers = #tpu.dot_dimension_numbers<[1], [0], [0], [1], [0, 0, 1, 1], [], []>} : vector<16x32xf32>, vector<32x32xf32>, vector<16x32xf32> -> vector<16x32xf32>
    %c7 = arith.constant 7 : index
    %c0_38 = arith.constant 0 : index
    %68 = vector.load %arg3[%c7, %c0_38] : memref<27x128xf32, #tpu.memory_space<vmem>>, vector<1x32xf32>
    %69 = vector.broadcast %68 : vector<1x32xf32> to vector<16x32xf32>
    %70 = arith.addf %67, %69 : vector<16x32xf32>
    %cst_39 = arith.constant dense<0.000000e+00> : vector<16x16xf32>
    %71 = tpu.matmul %31, %64, %cst_39 {dimension_numbers = #tpu.dot_dimension_numbers<[1], [1], [0], [0], [0, 0, 1, 0], [], []>} : vector<16x32xf32>, vector<16x32xf32>, vector<16x16xf32> -> vector<16x16xf32>
    %72 = arith.addf %71, %25 : vector<16x16xf32>
    %cst_40 = arith.constant dense<0xFF800000> : vector<16xf32>
    %73 = vector.multi_reduction <maximumf>, %72, %cst_40 [1] : vector<16x16xf32> to vector<16xf32>
    %74 = vector.shape_cast %73 : vector<16xf32> to vector<16x1xf32>
    %75 = vector.broadcast %74 : vector<16x1xf32> to vector<16x16xf32>
    %76 = arith.subf %72, %75 : vector<16x16xf32>
    %77 = math.exp %76 : vector<16x16xf32>
    %cst_41 = arith.constant dense<0.000000e+00> : vector<16xf32>
    %78 = vector.multi_reduction <add>, %77, %cst_41 [1] : vector<16x16xf32> to vector<16xf32>
    %79 = vector.shape_cast %78 : vector<16xf32> to vector<16x1xf32>
    %80 = tpu.reciprocal %79 : vector<16x1xf32> -> vector<16x1xf32>
    %81 = vector.broadcast %80 : vector<16x1xf32> to vector<16x16xf32>
    %82 = arith.mulf %77, %81 : vector<16x16xf32>
    %cst_42 = arith.constant dense<0.000000e+00> : vector<16x32xf32>
    %83 = tpu.matmul %82, %70, %cst_42 {dimension_numbers = #tpu.dot_dimension_numbers<[1], [0], [0], [1], [0, 0, 1, 1], [], []>} : vector<16x16xf32>, vector<16x32xf32>, vector<16x32xf32> -> vector<16x32xf32>
    %84 = arith.addf %58, %83 : vector<16x32xf32>
    %c5_43 = arith.constant 5 : index
    %c0_44 = arith.constant 0 : index
    %c0_45 = arith.constant 0 : index
    %85 = vector.load %arg2[%c5_43, %c0_44, %c0_45] : memref<17x64x128xf32, #tpu.memory_space<vmem>>, vector<1x32x32xf32>
    %86 = vector.shape_cast %85 : vector<1x32x32xf32> to vector<32x32xf32>
    %cst_46 = arith.constant dense<0.000000e+00> : vector<16x32xf32>
    %87 = tpu.matmul %84, %86, %cst_46 {dimension_numbers = #tpu.dot_dimension_numbers<[1], [0], [0], [1], [0, 0, 1, 1], [], []>} : vector<16x32xf32>, vector<32x32xf32>, vector<16x32xf32> -> vector<16x32xf32>
    %c8 = arith.constant 8 : index
    %c0_47 = arith.constant 0 : index
    %88 = vector.load %arg3[%c8, %c0_47] : memref<27x128xf32, #tpu.memory_space<vmem>>, vector<1x32xf32>
    %89 = vector.broadcast %88 : vector<1x32xf32> to vector<16x32xf32>
    %90 = arith.addf %87, %89 : vector<16x32xf32>
    %91 = arith.addf %24, %90 : vector<16x32xf32>
    %c11 = arith.constant 11 : index
    %c0_48 = arith.constant 0 : index
    %92 = vector.load %arg3[%c11, %c0_48] : memref<27x128xf32, #tpu.memory_space<vmem>>, vector<1x32xf32>
    %c12 = arith.constant 12 : index
    %c0_49 = arith.constant 0 : index
    %93 = vector.load %arg3[%c12, %c0_49] : memref<27x128xf32, #tpu.memory_space<vmem>>, vector<1x32xf32>
    %cst_50 = arith.constant dense<0.000000e+00> : vector<16xf32>
    %94 = vector.multi_reduction <add>, %91, %cst_50 [1] : vector<16x32xf32> to vector<16xf32>
    %95 = vector.shape_cast %94 : vector<16xf32> to vector<16x1xf32>
    %cst_51 = arith.constant 3.200000e+01 : f32
    %96 = vector.broadcast %cst_51 : f32 to vector<16x1xf32>
    %97 = arith.divf %95, %96 : vector<16x1xf32>
    %98 = vector.broadcast %97 : vector<16x1xf32> to vector<16x32xf32>
    %99 = arith.subf %91, %98 : vector<16x32xf32>
    %100 = arith.mulf %99, %99 : vector<16x32xf32>
    %cst_52 = arith.constant dense<0.000000e+00> : vector<16xf32>
    %101 = vector.multi_reduction <add>, %100, %cst_52 [1] : vector<16x32xf32> to vector<16xf32>
    %102 = vector.shape_cast %101 : vector<16xf32> to vector<16x1xf32>
    %cst_53 = arith.constant 3.200000e+01 : f32
    %103 = vector.broadcast %cst_53 : f32 to vector<16x1xf32>
    %104 = arith.divf %102, %103 : vector<16x1xf32>
    %105 = vector.broadcast %97 : vector<16x1xf32> to vector<16x32xf32>
    %106 = arith.subf %91, %105 : vector<16x32xf32>
    %cst_54 = arith.constant 9.99999996E-13 : f32
    %107 = vector.broadcast %cst_54 : f32 to vector<16x1xf32>
    %108 = arith.addf %104, %107 : vector<16x1xf32>
    %109 = math.rsqrt %108 : vector<16x1xf32>
    %110 = vector.broadcast %109 : vector<16x1xf32> to vector<16x32xf32>
    %111 = arith.mulf %106, %110 : vector<16x32xf32>
    %112 = vector.broadcast %92 : vector<1x32xf32> to vector<16x32xf32>
    %113 = arith.mulf %111, %112 : vector<16x32xf32>
    %114 = vector.broadcast %93 : vector<1x32xf32> to vector<16x32xf32>
    %115 = arith.addf %113, %114 : vector<16x32xf32>
    %c6_55 = arith.constant 6 : index
    %c0_56 = arith.constant 0 : index
    %c0_57 = arith.constant 0 : index
    %116 = vector.load %arg2[%c6_55, %c0_56, %c0_57] : memref<17x64x128xf32, #tpu.memory_space<vmem>>, vector<1x32x64xf32>
    %117 = vector.shape_cast %116 : vector<1x32x64xf32> to vector<32x64xf32>
    %cst_58 = arith.constant dense<0.000000e+00> : vector<16x64xf32>
    %118 = tpu.matmul %115, %117, %cst_58 {dimension_numbers = #tpu.dot_dimension_numbers<[1], [0], [0], [1], [0, 0, 1, 1], [], []>} : vector<16x32xf32>, vector<32x64xf32>, vector<16x64xf32> -> vector<16x64xf32>
    %c9 = arith.constant 9 : index
    %c0_59 = arith.constant 0 : index
    %119 = vector.load %arg3[%c9, %c0_59] : memref<27x128xf32, #tpu.memory_space<vmem>>, vector<1x64xf32>
    %120 = vector.broadcast %119 : vector<1x64xf32> to vector<16x64xf32>
    %121 = arith.addf %118, %120 : vector<16x64xf32>
    %cst_60 = arith.constant 5.000000e-01 : f32
    %122 = vector.broadcast %cst_60 : f32 to vector<16x64xf32>
    %123 = arith.mulf %122, %121 : vector<16x64xf32>
    %cst_61 = arith.constant 1.41421354 : f32
    %124 = vector.broadcast %cst_61 : f32 to vector<16x64xf32>
    %125 = arith.divf %121, %124 : vector<16x64xf32>
    %126 = math.erf %125 : vector<16x64xf32>
    %cst_62 = arith.constant 1.000000e+00 : f32
    %127 = vector.broadcast %cst_62 : f32 to vector<16x64xf32>
    %128 = arith.addf %127, %126 : vector<16x64xf32>
    %129 = arith.mulf %123, %128 : vector<16x64xf32>
    %c7_63 = arith.constant 7 : index
    %c0_64 = arith.constant 0 : index
    %c0_65 = arith.constant 0 : index
    %130 = vector.load %arg2[%c7_63, %c0_64, %c0_65] : memref<17x64x128xf32, #tpu.memory_space<vmem>>, vector<1x64x32xf32>
    %131 = vector.shape_cast %130 : vector<1x64x32xf32> to vector<64x32xf32>
    %cst_66 = arith.constant dense<0.000000e+00> : vector<16x32xf32>
    %132 = tpu.matmul %129, %131, %cst_66 {dimension_numbers = #tpu.dot_dimension_numbers<[1], [0], [0], [1], [0, 0, 1, 1], [], []>} : vector<16x64xf32>, vector<64x32xf32>, vector<16x32xf32> -> vector<16x32xf32>
    %c10 = arith.constant 10 : index
    %c0_67 = arith.constant 0 : index
    %133 = vector.load %arg3[%c10, %c0_67] : memref<27x128xf32, #tpu.memory_space<vmem>>, vector<1x32xf32>
    %134 = vector.broadcast %133 : vector<1x32xf32> to vector<16x32xf32>
    %135 = arith.addf %132, %134 : vector<16x32xf32>
    %136 = arith.addf %115, %135 : vector<16x32xf32>
    %c13 = arith.constant 13 : index
    %c0_68 = arith.constant 0 : index
    %137 = vector.load %arg3[%c13, %c0_68] : memref<27x128xf32, #tpu.memory_space<vmem>>, vector<1x32xf32>
    %c14 = arith.constant 14 : index
    %c0_69 = arith.constant 0 : index
    %138 = vector.load %arg3[%c14, %c0_69] : memref<27x128xf32, #tpu.memory_space<vmem>>, vector<1x32xf32>
    %cst_70 = arith.constant dense<0.000000e+00> : vector<16xf32>
    %139 = vector.multi_reduction <add>, %136, %cst_70 [1] : vector<16x32xf32> to vector<16xf32>
    %140 = vector.shape_cast %139 : vector<16xf32> to vector<16x1xf32>
    %cst_71 = arith.constant 3.200000e+01 : f32
    %141 = vector.broadcast %cst_71 : f32 to vector<16x1xf32>
    %142 = arith.divf %140, %141 : vector<16x1xf32>
    %143 = vector.broadcast %142 : vector<16x1xf32> to vector<16x32xf32>
    %144 = arith.subf %136, %143 : vector<16x32xf32>
    %145 = arith.mulf %144, %144 : vector<16x32xf32>
    %cst_72 = arith.constant dense<0.000000e+00> : vector<16xf32>
    %146 = vector.multi_reduction <add>, %145, %cst_72 [1] : vector<16x32xf32> to vector<16xf32>
    %147 = vector.shape_cast %146 : vector<16xf32> to vector<16x1xf32>
    %cst_73 = arith.constant 3.200000e+01 : f32
    %148 = vector.broadcast %cst_73 : f32 to vector<16x1xf32>
    %149 = arith.divf %147, %148 : vector<16x1xf32>
    %150 = vector.broadcast %142 : vector<16x1xf32> to vector<16x32xf32>
    %151 = arith.subf %136, %150 : vector<16x32xf32>
    %cst_74 = arith.constant 9.99999996E-13 : f32
    %152 = vector.broadcast %cst_74 : f32 to vector<16x1xf32>
    %153 = arith.addf %149, %152 : vector<16x1xf32>
    %154 = math.rsqrt %153 : vector<16x1xf32>
    %155 = vector.broadcast %154 : vector<16x1xf32> to vector<16x32xf32>
    %156 = arith.mulf %151, %155 : vector<16x32xf32>
    %157 = vector.broadcast %137 : vector<1x32xf32> to vector<16x32xf32>
    %158 = arith.mulf %156, %157 : vector<16x32xf32>
    %159 = vector.broadcast %138 : vector<1x32xf32> to vector<16x32xf32>
    %160 = arith.addf %158, %159 : vector<16x32xf32>
    %c8_75 = arith.constant 8 : index
    %c0_76 = arith.constant 0 : index
    %c0_77 = arith.constant 0 : index
    %161 = vector.load %arg2[%c8_75, %c0_76, %c0_77] : memref<17x64x128xf32, #tpu.memory_space<vmem>>, vector<1x32x32xf32>
    %162 = vector.shape_cast %161 : vector<1x32x32xf32> to vector<32x32xf32>
    %cst_78 = arith.constant dense<0.000000e+00> : vector<16x32xf32>
    %163 = tpu.matmul %160, %162, %cst_78 {dimension_numbers = #tpu.dot_dimension_numbers<[1], [0], [0], [1], [0, 0, 1, 1], [], []>} : vector<16x32xf32>, vector<32x32xf32>, vector<16x32xf32> -> vector<16x32xf32>
    %c15 = arith.constant 15 : index
    %c0_79 = arith.constant 0 : index
    %164 = vector.load %arg3[%c15, %c0_79] : memref<27x128xf32, #tpu.memory_space<vmem>>, vector<1x32xf32>
    %165 = vector.broadcast %164 : vector<1x32xf32> to vector<16x32xf32>
    %166 = arith.addf %163, %165 : vector<16x32xf32>
    %cst_80 = arith.constant 0.000000e+00 : f32
    %167 = vector.broadcast %cst_80 : f32 to vector<16x32xf32>
    %c9_81 = arith.constant 9 : index
    %c0_82 = arith.constant 0 : index
    %c0_83 = arith.constant 0 : index
    %168 = vector.load %arg2[%c9_81, %c0_82, %c0_83] : memref<17x64x128xf32, #tpu.memory_space<vmem>>, vector<1x32x32xf32>
    %169 = vector.shape_cast %168 : vector<1x32x32xf32> to vector<32x32xf32>
    %cst_84 = arith.constant dense<0.000000e+00> : vector<16x32xf32>
    %170 = tpu.matmul %160, %169, %cst_84 {dimension_numbers = #tpu.dot_dimension_numbers<[1], [0], [0], [1], [0, 0, 1, 1], [], []>} : vector<16x32xf32>, vector<32x32xf32>, vector<16x32xf32> -> vector<16x32xf32>
    %c16 = arith.constant 16 : index
    %c0_85 = arith.constant 0 : index
    %171 = vector.load %arg3[%c16, %c0_85] : memref<27x128xf32, #tpu.memory_space<vmem>>, vector<1x32xf32>
    %172 = vector.broadcast %171 : vector<1x32xf32> to vector<16x32xf32>
    %173 = arith.addf %170, %172 : vector<16x32xf32>
    %c11_86 = arith.constant 11 : index
    %c0_87 = arith.constant 0 : index
    %c0_88 = arith.constant 0 : index
    %174 = vector.load %arg2[%c11_86, %c0_87, %c0_88] : memref<17x64x128xf32, #tpu.memory_space<vmem>>, vector<1x32x32xf32>
    %175 = vector.shape_cast %174 : vector<1x32x32xf32> to vector<32x32xf32>
    %cst_89 = arith.constant dense<0.000000e+00> : vector<16x32xf32>
    %176 = tpu.matmul %160, %175, %cst_89 {dimension_numbers = #tpu.dot_dimension_numbers<[1], [0], [0], [1], [0, 0, 1, 1], [], []>} : vector<16x32xf32>, vector<32x32xf32>, vector<16x32xf32> -> vector<16x32xf32>
    %c18 = arith.constant 18 : index
    %c0_90 = arith.constant 0 : index
    %177 = vector.load %arg3[%c18, %c0_90] : memref<27x128xf32, #tpu.memory_space<vmem>>, vector<1x32xf32>
    %178 = vector.broadcast %177 : vector<1x32xf32> to vector<16x32xf32>
    %179 = arith.addf %176, %178 : vector<16x32xf32>
    %cst_91 = arith.constant dense<0.000000e+00> : vector<16x16xf32>
    %180 = tpu.matmul %166, %173, %cst_91 {dimension_numbers = #tpu.dot_dimension_numbers<[1], [1], [0], [0], [0, 0, 1, 0], [], []>} : vector<16x32xf32>, vector<16x32xf32>, vector<16x16xf32> -> vector<16x16xf32>
    %181 = arith.addf %180, %25 : vector<16x16xf32>
    %cst_92 = arith.constant dense<0xFF800000> : vector<16xf32>
    %182 = vector.multi_reduction <maximumf>, %181, %cst_92 [1] : vector<16x16xf32> to vector<16xf32>
    %183 = vector.shape_cast %182 : vector<16xf32> to vector<16x1xf32>
    %184 = vector.broadcast %183 : vector<16x1xf32> to vector<16x16xf32>
    %185 = arith.subf %181, %184 : vector<16x16xf32>
    %186 = math.exp %185 : vector<16x16xf32>
    %cst_93 = arith.constant dense<0.000000e+00> : vector<16xf32>
    %187 = vector.multi_reduction <add>, %186, %cst_93 [1] : vector<16x16xf32> to vector<16xf32>
    %188 = vector.shape_cast %187 : vector<16xf32> to vector<16x1xf32>
    %189 = tpu.reciprocal %188 : vector<16x1xf32> -> vector<16x1xf32>
    %190 = vector.broadcast %189 : vector<16x1xf32> to vector<16x16xf32>
    %191 = arith.mulf %186, %190 : vector<16x16xf32>
    %cst_94 = arith.constant dense<0.000000e+00> : vector<16x32xf32>
    %192 = tpu.matmul %191, %179, %cst_94 {dimension_numbers = #tpu.dot_dimension_numbers<[1], [0], [0], [1], [0, 0, 1, 1], [], []>} : vector<16x16xf32>, vector<16x32xf32>, vector<16x32xf32> -> vector<16x32xf32>
    %193 = arith.addf %167, %192 : vector<16x32xf32>
    %c10_95 = arith.constant 10 : index
    %c0_96 = arith.constant 0 : index
    %c0_97 = arith.constant 0 : index
    %194 = vector.load %arg2[%c10_95, %c0_96, %c0_97] : memref<17x64x128xf32, #tpu.memory_space<vmem>>, vector<1x32x32xf32>
    %195 = vector.shape_cast %194 : vector<1x32x32xf32> to vector<32x32xf32>
    %cst_98 = arith.constant dense<0.000000e+00> : vector<16x32xf32>
    %196 = tpu.matmul %160, %195, %cst_98 {dimension_numbers = #tpu.dot_dimension_numbers<[1], [0], [0], [1], [0, 0, 1, 1], [], []>} : vector<16x32xf32>, vector<32x32xf32>, vector<16x32xf32> -> vector<16x32xf32>
    %c17 = arith.constant 17 : index
    %c0_99 = arith.constant 0 : index
    %197 = vector.load %arg3[%c17, %c0_99] : memref<27x128xf32, #tpu.memory_space<vmem>>, vector<1x32xf32>
    %198 = vector.broadcast %197 : vector<1x32xf32> to vector<16x32xf32>
    %199 = arith.addf %196, %198 : vector<16x32xf32>
    %c12_100 = arith.constant 12 : index
    %c0_101 = arith.constant 0 : index
    %c0_102 = arith.constant 0 : index
    %200 = vector.load %arg2[%c12_100, %c0_101, %c0_102] : memref<17x64x128xf32, #tpu.memory_space<vmem>>, vector<1x32x32xf32>
    %201 = vector.shape_cast %200 : vector<1x32x32xf32> to vector<32x32xf32>
    %cst_103 = arith.constant dense<0.000000e+00> : vector<16x32xf32>
    %202 = tpu.matmul %160, %201, %cst_103 {dimension_numbers = #tpu.dot_dimension_numbers<[1], [0], [0], [1], [0, 0, 1, 1], [], []>} : vector<16x32xf32>, vector<32x32xf32>, vector<16x32xf32> -> vector<16x32xf32>
    %c19 = arith.constant 19 : index
    %c0_104 = arith.constant 0 : index
    %203 = vector.load %arg3[%c19, %c0_104] : memref<27x128xf32, #tpu.memory_space<vmem>>, vector<1x32xf32>
    %204 = vector.broadcast %203 : vector<1x32xf32> to vector<16x32xf32>
    %205 = arith.addf %202, %204 : vector<16x32xf32>
    %cst_105 = arith.constant dense<0.000000e+00> : vector<16x16xf32>
    %206 = tpu.matmul %166, %199, %cst_105 {dimension_numbers = #tpu.dot_dimension_numbers<[1], [1], [0], [0], [0, 0, 1, 0], [], []>} : vector<16x32xf32>, vector<16x32xf32>, vector<16x16xf32> -> vector<16x16xf32>
    %207 = arith.addf %206, %25 : vector<16x16xf32>
    %cst_106 = arith.constant dense<0xFF800000> : vector<16xf32>
    %208 = vector.multi_reduction <maximumf>, %207, %cst_106 [1] : vector<16x16xf32> to vector<16xf32>
    %209 = vector.shape_cast %208 : vector<16xf32> to vector<16x1xf32>
    %210 = vector.broadcast %209 : vector<16x1xf32> to vector<16x16xf32>
    %211 = arith.subf %207, %210 : vector<16x16xf32>
    %212 = math.exp %211 : vector<16x16xf32>
    %cst_107 = arith.constant dense<0.000000e+00> : vector<16xf32>
    %213 = vector.multi_reduction <add>, %212, %cst_107 [1] : vector<16x16xf32> to vector<16xf32>
    %214 = vector.shape_cast %213 : vector<16xf32> to vector<16x1xf32>
    %215 = tpu.reciprocal %214 : vector<16x1xf32> -> vector<16x1xf32>
    %216 = vector.broadcast %215 : vector<16x1xf32> to vector<16x16xf32>
    %217 = arith.mulf %212, %216 : vector<16x16xf32>
    %cst_108 = arith.constant dense<0.000000e+00> : vector<16x32xf32>
    %218 = tpu.matmul %217, %205, %cst_108 {dimension_numbers = #tpu.dot_dimension_numbers<[1], [0], [0], [1], [0, 0, 1, 1], [], []>} : vector<16x16xf32>, vector<16x32xf32>, vector<16x32xf32> -> vector<16x32xf32>
    %219 = arith.addf %193, %218 : vector<16x32xf32>
    %c13_109 = arith.constant 13 : index
    %c0_110 = arith.constant 0 : index
    %c0_111 = arith.constant 0 : index
    %220 = vector.load %arg2[%c13_109, %c0_110, %c0_111] : memref<17x64x128xf32, #tpu.memory_space<vmem>>, vector<1x32x32xf32>
    %221 = vector.shape_cast %220 : vector<1x32x32xf32> to vector<32x32xf32>
    %cst_112 = arith.constant dense<0.000000e+00> : vector<16x32xf32>
    %222 = tpu.matmul %219, %221, %cst_112 {dimension_numbers = #tpu.dot_dimension_numbers<[1], [0], [0], [1], [0, 0, 1, 1], [], []>} : vector<16x32xf32>, vector<32x32xf32>, vector<16x32xf32> -> vector<16x32xf32>
    %c20 = arith.constant 20 : index
    %c0_113 = arith.constant 0 : index
    %223 = vector.load %arg3[%c20, %c0_113] : memref<27x128xf32, #tpu.memory_space<vmem>>, vector<1x32xf32>
    %224 = vector.broadcast %223 : vector<1x32xf32> to vector<16x32xf32>
    %225 = arith.addf %222, %224 : vector<16x32xf32>
    %226 = arith.addf %160, %225 : vector<16x32xf32>
    %c23 = arith.constant 23 : index
    %c0_114 = arith.constant 0 : index
    %227 = vector.load %arg3[%c23, %c0_114] : memref<27x128xf32, #tpu.memory_space<vmem>>, vector<1x32xf32>
    %c24 = arith.constant 24 : index
    %c0_115 = arith.constant 0 : index
    %228 = vector.load %arg3[%c24, %c0_115] : memref<27x128xf32, #tpu.memory_space<vmem>>, vector<1x32xf32>
    %cst_116 = arith.constant dense<0.000000e+00> : vector<16xf32>
    %229 = vector.multi_reduction <add>, %226, %cst_116 [1] : vector<16x32xf32> to vector<16xf32>
    %230 = vector.shape_cast %229 : vector<16xf32> to vector<16x1xf32>
    %cst_117 = arith.constant 3.200000e+01 : f32
    %231 = vector.broadcast %cst_117 : f32 to vector<16x1xf32>
    %232 = arith.divf %230, %231 : vector<16x1xf32>
    %233 = vector.broadcast %232 : vector<16x1xf32> to vector<16x32xf32>
    %234 = arith.subf %226, %233 : vector<16x32xf32>
    %235 = arith.mulf %234, %234 : vector<16x32xf32>
    %cst_118 = arith.constant dense<0.000000e+00> : vector<16xf32>
    %236 = vector.multi_reduction <add>, %235, %cst_118 [1] : vector<16x32xf32> to vector<16xf32>
    %237 = vector.shape_cast %236 : vector<16xf32> to vector<16x1xf32>
    %cst_119 = arith.constant 3.200000e+01 : f32
    %238 = vector.broadcast %cst_119 : f32 to vector<16x1xf32>
    %239 = arith.divf %237, %238 : vector<16x1xf32>
    %240 = vector.broadcast %232 : vector<16x1xf32> to vector<16x32xf32>
    %241 = arith.subf %226, %240 : vector<16x32xf32>
    %cst_120 = arith.constant 9.99999996E-13 : f32
    %242 = vector.broadcast %cst_120 : f32 to vector<16x1xf32>
    %243 = arith.addf %239, %242 : vector<16x1xf32>
    %244 = math.rsqrt %243 : vector<16x1xf32>
    %245 = vector.broadcast %244 : vector<16x1xf32> to vector<16x32xf32>
    %246 = arith.mulf %241, %245 : vector<16x32xf32>
    %247 = vector.broadcast %227 : vector<1x32xf32> to vector<16x32xf32>
    %248 = arith.mulf %246, %247 : vector<16x32xf32>
    %249 = vector.broadcast %228 : vector<1x32xf32> to vector<16x32xf32>
    %250 = arith.addf %248, %249 : vector<16x32xf32>
    %c14_121 = arith.constant 14 : index
    %c0_122 = arith.constant 0 : index
    %c0_123 = arith.constant 0 : index
    %251 = vector.load %arg2[%c14_121, %c0_122, %c0_123] : memref<17x64x128xf32, #tpu.memory_space<vmem>>, vector<1x32x64xf32>
    %252 = vector.shape_cast %251 : vector<1x32x64xf32> to vector<32x64xf32>
    %cst_124 = arith.constant dense<0.000000e+00> : vector<16x64xf32>
    %253 = tpu.matmul %250, %252, %cst_124 {dimension_numbers = #tpu.dot_dimension_numbers<[1], [0], [0], [1], [0, 0, 1, 1], [], []>} : vector<16x32xf32>, vector<32x64xf32>, vector<16x64xf32> -> vector<16x64xf32>
    %c21 = arith.constant 21 : index
    %c0_125 = arith.constant 0 : index
    %254 = vector.load %arg3[%c21, %c0_125] : memref<27x128xf32, #tpu.memory_space<vmem>>, vector<1x64xf32>
    %255 = vector.broadcast %254 : vector<1x64xf32> to vector<16x64xf32>
    %256 = arith.addf %253, %255 : vector<16x64xf32>
    %cst_126 = arith.constant 5.000000e-01 : f32
    %257 = vector.broadcast %cst_126 : f32 to vector<16x64xf32>
    %258 = arith.mulf %257, %256 : vector<16x64xf32>
    %cst_127 = arith.constant 1.41421354 : f32
    %259 = vector.broadcast %cst_127 : f32 to vector<16x64xf32>
    %260 = arith.divf %256, %259 : vector<16x64xf32>
    %261 = math.erf %260 : vector<16x64xf32>
    %cst_128 = arith.constant 1.000000e+00 : f32
    %262 = vector.broadcast %cst_128 : f32 to vector<16x64xf32>
    %263 = arith.addf %262, %261 : vector<16x64xf32>
    %264 = arith.mulf %258, %263 : vector<16x64xf32>
    %c15_129 = arith.constant 15 : index
    %c0_130 = arith.constant 0 : index
    %c0_131 = arith.constant 0 : index
    %265 = vector.load %arg2[%c15_129, %c0_130, %c0_131] : memref<17x64x128xf32, #tpu.memory_space<vmem>>, vector<1x64x32xf32>
    %266 = vector.shape_cast %265 : vector<1x64x32xf32> to vector<64x32xf32>
    %cst_132 = arith.constant dense<0.000000e+00> : vector<16x32xf32>
    %267 = tpu.matmul %264, %266, %cst_132 {dimension_numbers = #tpu.dot_dimension_numbers<[1], [0], [0], [1], [0, 0, 1, 1], [], []>} : vector<16x64xf32>, vector<64x32xf32>, vector<16x32xf32> -> vector<16x32xf32>
    %c22 = arith.constant 22 : index
    %c0_133 = arith.constant 0 : index
    %268 = vector.load %arg3[%c22, %c0_133] : memref<27x128xf32, #tpu.memory_space<vmem>>, vector<1x32xf32>
    %269 = vector.broadcast %268 : vector<1x32xf32> to vector<16x32xf32>
    %270 = arith.addf %267, %269 : vector<16x32xf32>
    %271 = arith.addf %250, %270 : vector<16x32xf32>
    %c25 = arith.constant 25 : index
    %c0_134 = arith.constant 0 : index
    %272 = vector.load %arg3[%c25, %c0_134] : memref<27x128xf32, #tpu.memory_space<vmem>>, vector<1x32xf32>
    %c26 = arith.constant 26 : index
    %c0_135 = arith.constant 0 : index
    %273 = vector.load %arg3[%c26, %c0_135] : memref<27x128xf32, #tpu.memory_space<vmem>>, vector<1x32xf32>
    %cst_136 = arith.constant dense<0.000000e+00> : vector<16xf32>
    %274 = vector.multi_reduction <add>, %271, %cst_136 [1] : vector<16x32xf32> to vector<16xf32>
    %275 = vector.shape_cast %274 : vector<16xf32> to vector<16x1xf32>
    %cst_137 = arith.constant 3.200000e+01 : f32
    %276 = vector.broadcast %cst_137 : f32 to vector<16x1xf32>
    %277 = arith.divf %275, %276 : vector<16x1xf32>
    %278 = vector.broadcast %277 : vector<16x1xf32> to vector<16x32xf32>
    %279 = arith.subf %271, %278 : vector<16x32xf32>
    %280 = arith.mulf %279, %279 : vector<16x32xf32>
    %cst_138 = arith.constant dense<0.000000e+00> : vector<16xf32>
    %281 = vector.multi_reduction <add>, %280, %cst_138 [1] : vector<16x32xf32> to vector<16xf32>
    %282 = vector.shape_cast %281 : vector<16xf32> to vector<16x1xf32>
    %cst_139 = arith.constant 3.200000e+01 : f32
    %283 = vector.broadcast %cst_139 : f32 to vector<16x1xf32>
    %284 = arith.divf %282, %283 : vector<16x1xf32>
    %285 = vector.broadcast %277 : vector<16x1xf32> to vector<16x32xf32>
    %286 = arith.subf %271, %285 : vector<16x32xf32>
    %cst_140 = arith.constant 9.99999996E-13 : f32
    %287 = vector.broadcast %cst_140 : f32 to vector<16x1xf32>
    %288 = arith.addf %284, %287 : vector<16x1xf32>
    %289 = math.rsqrt %288 : vector<16x1xf32>
    %290 = vector.broadcast %289 : vector<16x1xf32> to vector<16x32xf32>
    %291 = arith.mulf %286, %290 : vector<16x32xf32>
    %292 = vector.broadcast %272 : vector<1x32xf32> to vector<16x32xf32>
    %293 = arith.mulf %291, %292 : vector<16x32xf32>
    %294 = vector.broadcast %273 : vector<1x32xf32> to vector<16x32xf32>
    %295 = arith.addf %293, %294 : vector<16x32xf32>
    %c16_141 = arith.constant 16 : index
    %c0_142 = arith.constant 0 : index
    %c0_143 = arith.constant 0 : index
    %296 = vector.load %arg2[%c16_141, %c0_142, %c0_143] : memref<17x64x128xf32, #tpu.memory_space<vmem>>, vector<1x32x128xf32>
    %297 = vector.shape_cast %296 : vector<1x32x128xf32> to vector<32x128xf32>
    %cst_144 = arith.constant dense<0.000000e+00> : vector<16x128xf32>
    %298 = tpu.matmul %295, %297, %cst_144 {dimension_numbers = #tpu.dot_dimension_numbers<[1], [0], [0], [1], [0, 0, 1, 1], [], []>} : vector<16x32xf32>, vector<32x128xf32>, vector<16x128xf32> -> vector<16x128xf32>
    %c2_145 = arith.constant 2 : index
    %c0_146 = arith.constant 0 : index
    %299 = vector.load %arg3[%c2_145, %c0_146] : memref<27x128xf32, #tpu.memory_space<vmem>>, vector<1x128xf32>
    %300 = vector.broadcast %299 : vector<1x128xf32> to vector<16x128xf32>
    %301 = arith.addf %298, %300 : vector<16x128xf32>
    %c0_147 = arith.constant 0 : index
    %c0_148 = arith.constant 0 : index
    %302 = vector.load %arg4[%c0_147, %c0_148] : memref<16x128xf32, #tpu.memory_space<vmem>>, vector<16x128xf32>
    tpu.vector_store %arg4[%c0_147, %c0_148], %301 {strides = array<i32>} : memref<16x128xf32, #tpu.memory_space<vmem>>, vector<16x128xf32>,
    return
  }
}

</mosaic_0001>

<llo_original>
// kernel: cola_classifier_forward.1
$region0: #{cola_classifier_forward.1}
  #allocation0 [shape = 'u32[]', space=smem, size = 0x4, offset = 0x4, fixed_abs, tag = 'smem constant byte address 0x4 - core index']
  #allocation1 [shape = 'u32[144,128]{1,0:T(1,128)}', space=vmem, size = 0x12000, scoped, tag = 'internal scratch']
  %s0 = inlined_call_operand.vmem [shape: f32[16,32], index: 0, kind: input, shape index: {}]
  %s1 = inlined_call_operand.vmem [shape: f32[16,16], index: 1, kind: input, shape index: {}]
  %s2 = inlined_call_operand.vmem [shape: f32[17,64,128], index: 2, kind: input, shape index: {}]
  %s3 = inlined_call_operand.vmem [shape: f32[27,128], index: 3, kind: input, shape index: {}]
  %s4 = inlined_call_operand.vmem [shape: f32[16,128], index: 4, kind: output, shape index: {}]
  %s5 = sld [smem:[#allocation0]]
  $region26: #{cola_classifier_forward.1} parent=0
    _
  %s7 = ssub.s32 1, %s5
  %s8 = scalar_select 0, %s7, %s5
  // Predicated region
  $region2: #{cola_classifier_forward.1} parent=0 // pred_check
    _
  $region3: #{cola_classifier_forward.1} parent=0 // pred_check_branch
    %10 = sbr.rel (0) target = $region5
  $region4: #{cola_classifier_forward.1} parent=0 // pred_region
    _
  $region5: #{cola_classifier_forward.1} parent=0 // pred_fallthru
    _
  // Predicated region
  $region6: #{cola_classifier_forward.1} parent=0 // pred_check
    _
  $region7: #{cola_classifier_forward.1} parent=0 // pred_check_branch
    %12 = sbr.rel (0) target = $region9
  $region8: #{cola_classifier_forward.1} parent=0 // pred_region
    _
  $region9: #{cola_classifier_forward.1} parent=0 // pred_fallthru
    _
  // Predicated region
  $region10: #{cola_classifier_forward.1} parent=0 // pred_check
    _
  $region11: #{cola_classifier_forward.1} parent=0 // pred_check_branch
    %14 = sbr.rel (0) target = $region13
  $region12: #{cola_classifier_forward.1} parent=0 // pred_region
    _
  $region13: #{cola_classifier_forward.1} parent=0 // pred_fallthru
    _
  // Predicated region
  $region14: #{cola_classifier_forward.1} parent=0 // pred_check
    _
  $region15: #{cola_classifier_forward.1} parent=0 // pred_check_branch
    %16 = sbr.rel (0) target = $region17
  $region16: #{cola_classifier_forward.1} parent=0 // pred_region
    _
  $region17: #{cola_classifier_forward.1} parent=0 // pred_fallthru
    _
  %v17 = vld [vmem:[%s0] sm:$0xff]
  %v18 = vld [vmem:[%s0 + $0x8] sm:$0xff]
  %v19 = vld [vmem:[%s3] sm:$0x1]
  %v20 = vld [vmem:[%s3 + $0x1] sm:$0x1]
  %vm21 = vcmask 261120
  %v22 = vsel %vm21, %v17, 0.0
  %23 = vadd.xlane.f32.xlu0 %v22
  %v24 = vpop.xlane.xlu0 %23
  %v25 = vsel %vm21, %v18, 0.0
  %26 = vadd.xlane.f32.xlu0 %v25
  %v27 = vpop.xlane.xlu0 %26
  %v28 = vrcp.pop 32.0
  %v29 = vmul.f32 %v24, %v28
  %v30 = vmul.f32 %v27, %v28
  %v31 = vsub.f32 %v17, %v29
  %v32 = vsub.f32 %v18, %v30
  %v33 = vmul.f32 %v31, %v31
  %v34 = vmul.f32 %v32, %v32
  %v35 = vsel %vm21, %v33, 0.0
  %36 = vadd.xlane.f32.xlu0 %v35
  %v37 = vpop.xlane.xlu0 %36
  %v38 = vsel %vm21, %v34, 0.0
  %39 = vadd.xlane.f32.xlu0 %v38
  %v40 = vpop.xlane.xlu0 %39
  %v41 = vmul.f32 %v37, %v28
  %v42 = vmul.f32 %v40, %v28
  %v43 = vadd.f32 %v41, 1e-12
  %v44 = vadd.f32 %v42, 1e-12
  %v45 = vrsqrt.pop %v43
  %v46 = vrsqrt.pop %v44
  %v47 = vmul.f32 %v31, %v45
  %v48 = vmul.f32 %v32, %v46
  %v49 = vlaneseq
  %v50 = vshrl.u32 %v49, 7
  %v51 = vsub.s32 0, %v50
  %v52 = vrot.slane %v19, %v51
  %v53 = vmul.f32 %v47, %v52
  %v54 = vmul.f32 %v48, %v52
  %v55 = vlaneseq
  %v56 = vshrl.u32 %v55, 7
  %v57 = vsub.s32 0, %v56
  %v58 = vrot.slane %v20, %v57
  %v59 = vadd.f32 %v53, %v58
  %v60 = vadd.f32 %v54, %v58
  %v61 = vld [vmem:[%s1] sm:$0xff]
  %v62 = vld [vmem:[%s1 + $0x8] sm:$0xff]
  %v63 = vld [vmem:[%s2] sm:$0xff]
  %v64 = vld [vmem:[%s2 + $0x8] sm:$0xff]
  %v65 = vld [vmem:[%s2 + $0x10] sm:$0xff]
  %v66 = vld [vmem:[%s2 + $0x18] sm:$0xff]
  %v67 = vld [vmem:[%s3 + $0x3] sm:$0x1]
  %v68 = vlaneseq
  %v69 = vshrl.u32 %v68, 7
  %v70 = vsub.s32 0, %v69
  %v71 = vrot.slane %v67, %v70
  %v73 = vsel %vm21, %v59, 0
  %v76 = vsel %vm21, %v60, 0
  %78 = vmatprep.subr.mxu0 0.0
  %79 = vmatpush1.msra.mxu0 %v63
  %80 = vmatprep.subr.mxu0 0.0
  %81 = vmatpush1.msra.mxu0 %v64
  %82 = vmatprep.subr.mxu0 0.0
  %83 = vmatpush1.msra.mxu0 %v65
  %84 = vmatprep.subr.mxu0 0.0
  %85 = vmatpush1.msra.mxu0 %v66
  %86 = vmatprep.subr.mxu0 0.0
  %87 = vmatpush1.msra.mxu0 0.0
  %88 = vmatprep.subr.mxu0 0.0
  %89 = vmatpush1.msra.mxu0 0.0
  %90 = vmatprep.subr.mxu0 0.0
  %91 = vmatpush1.msra.mxu0 0.0
  %92 = vmatprep.subr.mxu0 0.0
  %93 = vmatpush1.msra.mxu0 0.0
  %94 = vmatprep.subr.mxu0 0.0
  %95 = vmatpush1.msra.mxu0 0.0
  %96 = vmatprep.subr.mxu0 0.0
  %97 = vmatpush1.msra.mxu0 0.0
  %98 = vmatprep.subr.mxu0 0.0
  %99 = vmatpush1.msra.mxu0 0.0
  %100 = vmatprep.subr.mxu0 0.0
  %101 = vmatpush1.msra.mxu0 0.0
  %102 = vmatprep.subr.mxu0 0.0
  %103 = vmatpush1.msra.mxu0 0.0
  %104 = vmatprep.subr.mxu0 0.0
  %105 = vmatpush1.msra.mxu0 0.0
  %106 = vmatprep.subr.mxu0 0.0
  %107 = vmatpush1.msra.mxu0 0.0
  %108 = vmatprep.subr.mxu0 0.0
  %109 = vmatpush1.msra.mxu0 0.0
  %110 = vmatprep.subr.mxu0 0.0
  %111 = vmatpush1.msra.mxu0 0.0
  %112 = vmatprep.subr.mxu0 0.0
  %113 = vmatpush1.msra.mxu0 0.0
  %114 = vmatprep.subr.mxu0 0.0
  %115 = vmatpush1.msra.mxu0 0.0
  %116 = vmatprep.subr.mxu0 0.0
  %117 = vmatpush1.msra.mxu0 0.0
  %118 = vmatprep.subr.mxu0 0.0
  %119 = vmatpush1.msra.mxu0 0.0
  %120 = vmatprep.subr.mxu0 0.0
  %121 = vmatpush1.msra.mxu0 0.0
  %122 = vmatprep.subr.mxu0 0.0
  %123 = vmatpush1.msra.mxu0 0.0
  %124 = vmatprep.subr.mxu0 0.0
  %125 = vmatpush1.msra.mxu0 0.0
  %126 = vmatprep.subr.mxu0 0.0
  %127 = vmatpush1.msra.mxu0 0.0
  %128 = vmatprep.subr.mxu0 0.0
  %129 = vmatpush1.msra.mxu0 0.0
  %130 = vmatprep.subr.mxu0 0.0
  %131 = vmatpush1.msra.mxu0 0.0
  %132 = vmatprep.subr.mxu0 0.0
  %133 = vmatpush1.msra.mxu0 0.0
  %134 = vmatprep.subr.mxu0 0.0
  %135 = vmatpush1.msra.mxu0 0.0
  %136 = vmatprep.subr.mxu0 0.0
  %137 = vmatpush1.msra.mxu0 0.0
  %138 = vmatprep.subr.mxu0 0.0
  %139 = vmatpush1.msra.mxu0 0.0
  %140 = vmatprep.subr.mxu0 0.0
  %141 = vmatpush1.msra.mxu0 0.0
  %142 = vmatprep.mubr.f32.mxu0 0.0
  %143 = vmatmul.mubr.f32.gmra.mrb[0].mxu0 %v73
  %v144 = vpop.f32.mrb[0].mxu0
  %v145 = vadd.f32 %v71, %v144
  %v146 = vpop.f32.mrb[0].mxu0
  %147 = vmatprep.mubr.f32.mxu0 0.0
  %148 = vmatmul.mubr.f32.gmra.mrb[0].mxu0 %v76
  %v149 = vpop.f32.mrb[0].mxu0
  %v150 = vadd.f32 %v71, %v149
  %v151 = vpop.f32.mrb[0].mxu0
  %152 = vdwg.mxu0
  %s153 = scalar_lea.vmem %s2, 64
  %v154 = vld [vmem:[%s153] sm:$0xff]
  %v155 = vld [vmem:[%s153 + $0x8] sm:$0xff]
  %v156 = vld [vmem:[%s153 + $0x10] sm:$0xff]
  %v157 = vld [vmem:[%s153 + $0x18] sm:$0xff]
  %v158 = vld [vmem:[%s3 + $0x4] sm:$0x1]
  %v159 = vlaneseq
  %v160 = vshrl.u32 %v159, 7
  %v161 = vsub.s32 0, %v160
  %v162 = vrot.slane %v158, %v161
  %163 = vmatprep.subr.mxu0 0.0
  %164 = vmatpush1.msra.mxu0 %v154
  %165 = vmatprep.subr.mxu0 0.0
  %166 = vmatpush1.msra.mxu0 %v155
  %167 = vmatprep.subr.mxu0 0.0
  %168 = vmatpush1.msra.mxu0 %v156
  %169 = vmatprep.subr.mxu0 0.0
  %170 = vmatpush1.msra.mxu0 %v157
  %171 = vmatprep.subr.mxu0 0.0
  %172 = vmatpush1.msra.mxu0 0.0
  %173 = vmatprep.subr.mxu0 0.0
  %174 = vmatpush1.msra.mxu0 0.0
  %175 = vmatprep.subr.mxu0 0.0
  %176 = vmatpush1.msra.mxu0 0.0
  %177 = vmatprep.subr.mxu0 0.0
  %178 = vmatpush1.msra.mxu0 0.0
  %179 = vmatprep.subr.mxu0 0.0
  %180 = vmatpush1.msra.mxu0 0.0
  %181 = vmatprep.subr.mxu0 0.0
  %182 = vmatpush1.msra.mxu0 0.0
  %183 = vmatprep.subr.mxu0 0.0
  %184 = vmatpush1.msra.mxu0 0.0
  %185 = vmatprep.subr.mxu0 0.0
  %186 = vmatpush1.msra.mxu0 0.0
  %187 = vmatprep.subr.mxu0 0.0
  %188 = vmatpush1.msra.mxu0 0.0
  %189 = vmatprep.subr.mxu0 0.0
  %190 = vmatpush1.msra.mxu0 0.0
  %191 = vmatprep.subr.mxu0 0.0
  %192 = vmatpush1.msra.mxu0 0.0
  %193 = vmatprep.subr.mxu0 0.0
  %194 = vmatpush1.msra.mxu0 0.0
  %195 = vmatprep.subr.mxu0 0.0
  %196 = vmatpush1.msra.mxu0 0.0
  %197 = vmatprep.subr.mxu0 0.0
  %198 = vmatpush1.msra.mxu0 0.0
  %199 = vmatprep.subr.mxu0 0.0
  %200 = vmatpush1.msra.mxu0 0.0
  %201 = vmatprep.subr.mxu0 0.0
  %202 = vmatpush1.msra.mxu0 0.0
  %203 = vmatprep.subr.mxu0 0.0
  %204 = vmatpush1.msra.mxu0 0.0
  %205 = vmatprep.subr.mxu0 0.0
  %206 = vmatpush1.msra.mxu0 0.0
  %207 = vmatprep.subr.mxu0 0.0
  %208 = vmatpush1.msra.mxu0 0.0
  %209 = vmatprep.subr.mxu0 0.0
  %210 = vmatpush1.msra.mxu0 0.0
  %211 = vmatprep.subr.mxu0 0.0
  %212 = vmatpush1.msra.mxu0 0.0
  %213 = vmatprep.subr.mxu0 0.0
  %214 = vmatpush1.msra.mxu0 0.0
  %215 = vmatprep.subr.mxu0 0.0
  %216 = vmatpush1.msra.mxu0 0.0
  %217 = vmatprep.subr.mxu0 0.0
  %218 = vmatpush1.msra.mxu0 0.0
  %219 = vmatprep.subr.mxu0 0.0
  %220 = vmatpush1.msra.mxu0 0.0
  %221 = vmatprep.subr.mxu0 0.0
  %222 = vmatpush1.msra.mxu0 0.0
  %223 = vmatprep.subr.mxu0 0.0
  %224 = vmatpush1.msra.mxu0 0.0
  %225 = vmatprep.subr.mxu0 0.0
  %226 = vmatpush1.msra.mxu0 0.0
  %227 = vmatprep.mubr.f32.mxu0 0.0
  %228 = vmatmul.mubr.f32.gmra.mrb[0].mxu0 %v73
  %v229 = vpop.f32.mrb[0].mxu0
  %v230 = vadd.f32 %v162, %v229
  %v231 = vpop.f32.mrb[0].mxu0
  %232 = vmatprep.mubr.f32.mxu0 0.0
  %233 = vmatmul.mubr.f32.gmra.mrb[0].mxu0 %v76
  %v234 = vpop.f32.mrb[0].mxu0
  %v235 = vadd.f32 %v162, %v234
  %v236 = vpop.f32.mrb[0].mxu0
  %237 = vdwg.mxu0
  %s238 = scalar_lea.vmem %s2, 192
  %v239 = vld [vmem:[%s238] sm:$0xff]
  %v240 = vld [vmem:[%s238 + $0x8] sm:$0xff]
  %v241 = vld [vmem:[%s238 + $0x10] sm:$0xff]
  %v242 = vld [vmem:[%s238 + $0x18] sm:$0xff]
  %v243 = vld [vmem:[%s3 + $0x6] sm:$0x1]
  %v244 = vlaneseq
  %v245 = vshrl.u32 %v244, 7
  %v246 = vsub.s32 0, %v245
  %v247 = vrot.slane %v243, %v246
  %248 = vmatprep.subr.mxu0 0.0
  %249 = vmatpush1.msra.mxu0 %v239
  %250 = vmatprep.subr.mxu0 0.0
  %251 = vmatpush1.msra.mxu0 %v240
  %252 = vmatprep.subr.mxu0 0.0
  %253 = vmatpush1.msra.mxu0 %v241
  %254 = vmatprep.subr.mxu0 0.0
  %255 = vmatpush1.msra.mxu0 %v242
  %256 = vmatprep.subr.mxu0 0.0
  %257 = vmatpush1.msra.mxu0 0.0
  %258 = vmatprep.subr.mxu0 0.0
  %259 = vmatpush1.msra.mxu0 0.0
  %260 = vmatprep.subr.mxu0 0.0
  %261 = vmatpush1.msra.mxu0 0.0
  %262 = vmatprep.subr.mxu0 0.0
  %263 = vmatpush1.msra.mxu0 0.0
  %264 = vmatprep.subr.mxu0 0.0
  %265 = vmatpush1.msra.mxu0 0.0
  %266 = vmatprep.subr.mxu0 0.0
  %267 = vmatpush1.msra.mxu0 0.0
  %268 = vmatprep.subr.mxu0 0.0
  %269 = vmatpush1.msra.mxu0 0.0
  %270 = vmatprep.subr.mxu0 0.0
  %271 = vmatpush1.msra.mxu0 0.0
  %272 = vmatprep.subr.mxu0 0.0
  %273 = vmatpush1.msra.mxu0 0.0
  %274 = vmatprep.subr.mxu0 0.0
  %275 = vmatpush1.msra.mxu0 0.0
  %276 = vmatprep.subr.mxu0 0.0
  %277 = vmatpush1.msra.mxu0 0.0
  %278 = vmatprep.subr.mxu0 0.0
  %279 = vmatpush1.msra.mxu0 0.0
  %280 = vmatprep.subr.mxu0 0.0
  %281 = vmatpush1.msra.mxu0 0.0
  %282 = vmatprep.subr.mxu0 0.0
  %283 = vmatpush1.msra.mxu0 0.0
  %284 = vmatprep.subr.mxu0 0.0
  %285 = vmatpush1.msra.mxu0 0.0
  %286 = vmatprep.subr.mxu0 0.0
  %287 = vmatpush1.msra.mxu0 0.0
  %288 = vmatprep.subr.mxu0 0.0
  %289 = vmatpush1.msra.mxu0 0.0
  %290 = vmatprep.subr.mxu0 0.0
  %291 = vmatpush1.msra.mxu0 0.0
  %292 = vmatprep.subr.mxu0 0.0
  %293 = vmatpush1.msra.mxu0 0.0
  %294 = vmatprep.subr.mxu0 0.0
  %295 = vmatpush1.msra.mxu0 0.0
  %296 = vmatprep.subr.mxu0 0.0
  %297 = vmatpush1.msra.mxu0 0.0
  %298 = vmatprep.subr.mxu0 0.0
  %299 = vmatpush1.msra.mxu0 0.0
  %300 = vmatprep.subr.mxu0 0.0
  %301 = vmatpush1.msra.mxu0 0.0
  %302 = vmatprep.subr.mxu0 0.0
  %303 = vmatpush1.msra.mxu0 0.0
  %304 = vmatprep.subr.mxu0 0.0
  %305 = vmatpush1.msra.mxu0 0.0
  %306 = vmatprep.subr.mxu0 0.0
  %307 = vmatpush1.msra.mxu0 0.0
  %308 = vmatprep.subr.mxu0 0.0
  %309 = vmatpush1.msra.mxu0 0.0
  %310 = vmatprep.subr.mxu0 0.0
  %311 = vmatpush1.msra.mxu0 0.0
  %312 = vmatprep.mubr.f32.mxu0 0.0
  %313 = vmatmul.mubr.f32.gmra.mrb[0].mxu0 %v73
  %v314 = vpop.f32.mrb[0].mxu0
  %v315 = vadd.f32 %v247, %v314
  %v316 = vpop.f32.mrb[0].mxu0
  %317 = vmatprep.mubr.f32.mxu0 0.0
  %318 = vmatmul.mubr.f32.gmra.mrb[0].mxu0 %v76
  %v319 = vpop.f32.mrb[0].mxu0
  %v320 = vadd.f32 %v247, %v319
  %v321 = vpop.f32.mrb[0].mxu0
  %322 = vdwg.mxu0
  %v324 = vsel %vm21, %v145, 0
  %v327 = vsel %vm21, %v150, 0
  %v330 = vsel %vm21, %v230, 0
  %v333 = vsel %vm21, %v235, 0
  %335 = vmatprep.subr.mxu0 0.0
  %336 = vmatpush1.xpose.msra.mxu0 %v330
  %337 = vmatprep.subr.mxu0 0.0
  %338 = vmatpush1.xpose.msra.mxu0 %v333
  %339 = vmatprep.subr.mxu0 0.0
  %340 = vmatpush1.xpose.msra.mxu0 0.0
  %341 = vmatprep.subr.mxu0 0.0
  %342 = vmatpush1.xpose.msra.mxu0 0.0
  %343 = vmatprep.subr.mxu0 0.0
  %344 = vmatpush1.xpose.msra.mxu0 0.0
  %345 = vmatprep.subr.mxu0 0.0
  %346 = vmatpush1.xpose.msra.mxu0 0.0
  %347 = vmatprep.subr.mxu0 0.0
  %348 = vmatpush1.xpose.msra.mxu0 0.0
  %349 = vmatprep.subr.mxu0 0.0
  %350 = vmatpush1.xpose.msra.mxu0 0.0
  %351 = vmatprep.subr.mxu0 0.0
  %352 = vmatpush1.xpose.msra.mxu0 0.0
  %353 = vmatprep.subr.mxu0 0.0
  %354 = vmatpush1.xpose.msra.mxu0 0.0
  %355 = vmatprep.subr.mxu0 0.0
  %356 = vmatpush1.xpose.msra.mxu0 0.0
  %357 = vmatprep.subr.mxu0 0.0
  %358 = vmatpush1.xpose.msra.mxu0 0.0
  %359 = vmatprep.subr.mxu0 0.0
  %360 = vmatpush1.xpose.msra.mxu0 0.0
  %361 = vmatprep.subr.mxu0 0.0
  %362 = vmatpush1.xpose.msra.mxu0 0.0
  %363 = vmatprep.subr.mxu0 0.0
  %364 = vmatpush1.xpose.msra.mxu0 0.0
  %365 = vmatprep.subr.mxu0 0.0
  %366 = vmatpush1.xpose.msra.mxu0 0.0
  %367 = vmatprep.subr.mxu0 0.0
  %368 = vmatpush1.xpose.msra.mxu0 0.0
  %369 = vmatprep.subr.mxu0 0.0
  %370 = vmatpush1.xpose.msra.mxu0 0.0
  %371 = vmatprep.subr.mxu0 0.0
  %372 = vmatpush1.xpose.msra.mxu0 0.0
  %373 = vmatprep.subr.mxu0 0.0
  %374 = vmatpush1.xpose.msra.mxu0 0.0
  %375 = vmatprep.subr.mxu0 0.0
  %376 = vmatpush1.xpose.msra.mxu0 0.0
  %377 = vmatprep.subr.mxu0 0.0
  %378 = vmatpush1.xpose.msra.mxu0 0.0
  %379 = vmatprep.subr.mxu0 0.0
  %380 = vmatpush1.xpose.msra.mxu0 0.0
  %381 = vmatprep.subr.mxu0 0.0
  %382 = vmatpush1.xpose.msra.mxu0 0.0
  %383 = vmatprep.subr.mxu0 0.0
  %384 = vmatpush1.xpose.msra.mxu0 0.0
  %385 = vmatprep.subr.mxu0 0.0
  %386 = vmatpush1.xpose.msra.mxu0 0.0
  %387 = vmatprep.subr.mxu0 0.0
  %388 = vmatpush1.xpose.msra.mxu0 0.0
  %389 = vmatprep.subr.mxu0 0.0
  %390 = vmatpush1.xpose.msra.mxu0 0.0
  %391 = vmatprep.subr.mxu0 0.0
  %392 = vmatpush1.xpose.msra.mxu0 0.0
  %393 = vmatprep.subr.mxu0 0.0
  %394 = vmatpush1.xpose.msra.mxu0 0.0
  %395 = vmatprep.subr.mxu0 0.0
  %396 = vmatpush1.xpose.msra.mxu0 0.0
  %397 = vmatprep.subr.mxu0 0.0
  %398 = vmatpush1.xpose.msra.mxu0 0.0
  %399 = vmatprep.mubr.f32.mxu0 0.0
  %400 = vmatmul.mubr.f32.gmra.mrb[0].mxu0 %v324
  %v401 = vpop.f32.mrb[0].mxu0
  %v402 = vadd.f32 %v61, %v401
  %v403 = vpop.f32.mrb[0].mxu0
  %404 = vmatprep.mubr.f32.mxu0 0.0
  %405 = vmatmul.mubr.f32.gmra.mrb[0].mxu0 %v327
  %v406 = vpop.f32.mrb[0].mxu0
  %v407 = vadd.f32 %v62, %v406
  %v408 = vpop.f32.mrb[0].mxu0
  %409 = vdwg.mxu0
  %vm410 = vcmask 130048
  %v411 = vsel %vm410, %v402, -inf
  %412 = vmax.xlane.f32.xlu0 %v411
  %v413 = vpop.xlane.xlu0 %412
  %v414 = vsel %vm410, %v407, -inf
  %415 = vmax.xlane.f32.xlu0 %v414
  %v416 = vpop.xlane.xlu0 %415
  %v417 = vsub.f32 %v402, %v413
  %v418 = vsub.f32 %v407, %v416
  %v419 = vmul.f32 %v417, 1.442695
  %v420 = vpow.pop %v419
  %v421 = vmul.f32 %v418, 1.442695
  %v422 = vpow.pop %v421
  %v423 = vsel %vm410, %v420, 0.0
  %424 = vadd.xlane.f32.xlu0 %v423
  %v425 = vpop.xlane.xlu0 %424
  %v426 = vsel %vm410, %v422, 0.0
  %427 = vadd.xlane.f32.xlu0 %v426
  %v428 = vpop.xlane.xlu0 %427
  %v429 = vrcp.pop %v425
  %v430 = vrcp.pop %v428
  %v431 = vmul.f32 %v420, %v429
  %v432 = vmul.f32 %v422, %v430
  %s433 = scalar_lea.vmem %s2, 128
  %v434 = vld [vmem:[%s433] sm:$0xff]
  %v435 = vld [vmem:[%s433 + $0x8] sm:$0xff]
  %v436 = vld [vmem:[%s433 + $0x10] sm:$0xff]
  %v437 = vld [vmem:[%s433 + $0x18] sm:$0xff]
  %v438 = vld [vmem:[%s3 + $0x5] sm:$0x1]
  %v439 = vlaneseq
  %v440 = vshrl.u32 %v439, 7
  %v441 = vsub.s32 0, %v440
  %v442 = vrot.slane %v438, %v441
  %443 = vmatprep.subr.mxu0 0.0
  %444 = vmatpush1.msra.mxu0 %v434
  %445 = vmatprep.subr.mxu0 0.0
  %446 = vmatpush1.msra.mxu0 %v435
  %447 = vmatprep.subr.mxu0 0.0
  %448 = vmatpush1.msra.mxu0 %v436
  %449 = vmatprep.subr.mxu0 0.0
  %450 = vmatpush1.msra.mxu0 %v437
  %451 = vmatprep.subr.mxu0 0.0
  %452 = vmatpush1.msra.mxu0 0.0
  %453 = vmatprep.subr.mxu0 0.0
  %454 = vmatpush1.msra.mxu0 0.0
  %455 = vmatprep.subr.mxu0 0.0
  %456 = vmatpush1.msra.mxu0 0.0
  %457 = vmatprep.subr.mxu0 0.0
  %458 = vmatpush1.msra.mxu0 0.0
  %459 = vmatprep.subr.mxu0 0.0
  %460 = vmatpush1.msra.mxu0 0.0
  %461 = vmatprep.subr.mxu0 0.0
  %462 = vmatpush1.msra.mxu0 0.0
  %463 = vmatprep.subr.mxu0 0.0
  %464 = vmatpush1.msra.mxu0 0.0
  %465 = vmatprep.subr.mxu0 0.0
  %466 = vmatpush1.msra.mxu0 0.0
  %467 = vmatprep.subr.mxu0 0.0
  %468 = vmatpush1.msra.mxu0 0.0
  %469 = vmatprep.subr.mxu0 0.0
  %470 = vmatpush1.msra.mxu0 0.0
  %471 = vmatprep.subr.mxu0 0.0
  %472 = vmatpush1.msra.mxu0 0.0
  %473 = vmatprep.subr.mxu0 0.0
  %474 = vmatpush1.msra.mxu0 0.0
  %475 = vmatprep.subr.mxu0 0.0
  %476 = vmatpush1.msra.mxu0 0.0
  %477 = vmatprep.subr.mxu0 0.0
  %478 = vmatpush1.msra.mxu0 0.0
  %479 = vmatprep.subr.mxu0 0.0
  %480 = vmatpush1.msra.mxu0 0.0
  %481 = vmatprep.subr.mxu0 0.0
  %482 = vmatpush1.msra.mxu0 0.0
  %483 = vmatprep.subr.mxu0 0.0
  %484 = vmatpush1.msra.mxu0 0.0
  %485 = vmatprep.subr.mxu0 0.0
  %486 = vmatpush1.msra.mxu0 0.0
  %487 = vmatprep.subr.mxu0 0.0
  %488 = vmatpush1.msra.mxu0 0.0
  %489 = vmatprep.subr.mxu0 0.0
  %490 = vmatpush1.msra.mxu0 0.0
  %491 = vmatprep.subr.mxu0 0.0
  %492 = vmatpush1.msra.mxu0 0.0
  %493 = vmatprep.subr.mxu0 0.0
  %494 = vmatpush1.msra.mxu0 0.0
  %495 = vmatprep.subr.mxu0 0.0
  %496 = vmatpush1.msra.mxu0 0.0
  %497 = vmatprep.subr.mxu0 0.0
  %498 = vmatpush1.msra.mxu0 0.0
  %499 = vmatprep.subr.mxu0 0.0
  %500 = vmatpush1.msra.mxu0 0.0
  %501 = vmatprep.subr.mxu0 0.0
  %502 = vmatpush1.msra.mxu0 0.0
  %503 = vmatprep.subr.mxu0 0.0
  %504 = vmatpush1.msra.mxu0 0.0
  %505 = vmatprep.subr.mxu0 0.0
  %506 = vmatpush1.msra.mxu0 0.0
  %507 = vmatprep.mubr.f32.mxu0 0.0
  %508 = vmatmul.mubr.f32.gmra.mrb[0].mxu0 %v73
  %v509 = vpop.f32.mrb[0].mxu0
  %v510 = vadd.f32 %v442, %v509
  %v511 = vpop.f32.mrb[0].mxu0
  %512 = vmatprep.mubr.f32.mxu0 0.0
  %513 = vmatmul.mubr.f32.gmra.mrb[0].mxu0 %v76
  %v514 = vpop.f32.mrb[0].mxu0
  %v515 = vadd.f32 %v442, %v514
  %v516 = vpop.f32.mrb[0].mxu0
  %517 = vdwg.mxu0
  %s518 = scalar_lea.vmem %s2, 256
  %v519 = vld [vmem:[%s518] sm:$0xff]
  %v520 = vld [vmem:[%s518 + $0x8] sm:$0xff]
  %v521 = vld [vmem:[%s518 + $0x10] sm:$0xff]
  %v522 = vld [vmem:[%s518 + $0x18] sm:$0xff]
  %v523 = vld [vmem:[%s3 + $0x7] sm:$0x1]
  %v524 = vlaneseq
  %v525 = vshrl.u32 %v524, 7
  %v526 = vsub.s32 0, %v525
  %v527 = vrot.slane %v523, %v526
  %528 = vmatprep.subr.mxu0 0.0
  %529 = vmatpush1.msra.mxu0 %v519
  %530 = vmatprep.subr.mxu0 0.0
  %531 = vmatpush1.msra.mxu0 %v520
  %532 = vmatprep.subr.mxu0 0.0
  %533 = vmatpush1.msra.mxu0 %v521
  %534 = vmatprep.subr.mxu0 0.0
  %535 = vmatpush1.msra.mxu0 %v522
  %536 = vmatprep.subr.mxu0 0.0
  %537 = vmatpush1.msra.mxu0 0.0
  %538 = vmatprep.subr.mxu0 0.0
  %539 = vmatpush1.msra.mxu0 0.0
  %540 = vmatprep.subr.mxu0 0.0
  %541 = vmatpush1.msra.mxu0 0.0
  %542 = vmatprep.subr.mxu0 0.0
  %543 = vmatpush1.msra.mxu0 0.0
  %544 = vmatprep.subr.mxu0 0.0
  %545 = vmatpush1.msra.mxu0 0.0
  %546 = vmatprep.subr.mxu0 0.0
  %547 = vmatpush1.msra.mxu0 0.0
  %548 = vmatprep.subr.mxu0 0.0
  %549 = vmatpush1.msra.mxu0 0.0
  %550 = vmatprep.subr.mxu0 0.0
  %551 = vmatpush1.msra.mxu0 0.0
  %552 = vmatprep.subr.mxu0 0.0
  %553 = vmatpush1.msra.mxu0 0.0
  %554 = vmatprep.subr.mxu0 0.0
  %555 = vmatpush1.msra.mxu0 0.0
  %556 = vmatprep.subr.mxu0 0.0
  %557 = vmatpush1.msra.mxu0 0.0
  %558 = vmatprep.subr.mxu0 0.0
  %559 = vmatpush1.msra.mxu0 0.0
  %560 = vmatprep.subr.mxu0 0.0
  %561 = vmatpush1.msra.mxu0 0.0
  %562 = vmatprep.subr.mxu0 0.0
  %563 = vmatpush1.msra.mxu0 0.0
  %564 = vmatprep.subr.mxu0 0.0
  %565 = vmatpush1.msra.mxu0 0.0
  %566 = vmatprep.subr.mxu0 0.0
  %567 = vmatpush1.msra.mxu0 0.0
  %568 = vmatprep.subr.mxu0 0.0
  %569 = vmatpush1.msra.mxu0 0.0
  %570 = vmatprep.subr.mxu0 0.0
  %571 = vmatpush1.msra.mxu0 0.0
  %572 = vmatprep.subr.mxu0 0.0
  %573 = vmatpush1.msra.mxu0 0.0
  %574 = vmatprep.subr.mxu0 0.0
  %575 = vmatpush1.msra.mxu0 0.0
  %576 = vmatprep.subr.mxu0 0.0
  %577 = vmatpush1.msra.mxu0 0.0
  %578 = vmatprep.subr.mxu0 0.0
  %579 = vmatpush1.msra.mxu0 0.0
  %580 = vmatprep.subr.mxu0 0.0
  %581 = vmatpush1.msra.mxu0 0.0
  %582 = vmatprep.subr.mxu0 0.0
  %583 = vmatpush1.msra.mxu0 0.0
  %584 = vmatprep.subr.mxu0 0.0
  %585 = vmatpush1.msra.mxu0 0.0
  %586 = vmatprep.subr.mxu0 0.0
  %587 = vmatpush1.msra.mxu0 0.0
  %588 = vmatprep.subr.mxu0 0.0
  %589 = vmatpush1.msra.mxu0 0.0
  %590 = vmatprep.subr.mxu0 0.0
  %591 = vmatpush1.msra.mxu0 0.0
  %592 = vmatprep.mubr.f32.mxu0 0.0
  %593 = vmatmul.mubr.f32.gmra.mrb[0].mxu0 %v73
  %v594 = vpop.f32.mrb[0].mxu0
  %v595 = vadd.f32 %v527, %v594
  %v596 = vpop.f32.mrb[0].mxu0
  %597 = vmatprep.mubr.f32.mxu0 0.0
  %598 = vmatmul.mubr.f32.gmra.mrb[0].mxu0 %v76
  %v599 = vpop.f32.mrb[0].mxu0
  %v600 = vadd.f32 %v527, %v599
  %v601 = vpop.f32.mrb[0].mxu0
  %602 = vdwg.mxu0
  %v604 = vsel %vm21, %v510, 0
  %v607 = vsel %vm21, %v515, 0
  %609 = vmatprep.subr.mxu0 0.0
  %610 = vmatpush1.xpose.msra.mxu0 %v604
  %611 = vmatprep.subr.mxu0 0.0
  %612 = vmatpush1.xpose.msra.mxu0 %v607
  %613 = vmatprep.subr.mxu0 0.0
  %614 = vmatpush1.xpose.msra.mxu0 0.0
  %615 = vmatprep.subr.mxu0 0.0
  %616 = vmatpush1.xpose.msra.mxu0 0.0
  %617 = vmatprep.subr.mxu0 0.0
  %618 = vmatpush1.xpose.msra.mxu0 0.0
  %619 = vmatprep.subr.mxu0 0.0
  %620 = vmatpush1.xpose.msra.mxu0 0.0
  %621 = vmatprep.subr.mxu0 0.0
  %622 = vmatpush1.xpose.msra.mxu0 0.0
  %623 = vmatprep.subr.mxu0 0.0
  %624 = vmatpush1.xpose.msra.mxu0 0.0
  %625 = vmatprep.subr.mxu0 0.0
  %626 = vmatpush1.xpose.msra.mxu0 0.0
  %627 = vmatprep.subr.mxu0 0.0
  %628 = vmatpush1.xpose.msra.mxu0 0.0
  %629 = vmatprep.subr.mxu0 0.0
  %630 = vmatpush1.xpose.msra.mxu0 0.0
  %631 = vmatprep.subr.mxu0 0.0
  %632 = vmatpush1.xpose.msra.mxu0 0.0
  %633 = vmatprep.subr.mxu0 0.0
  %634 = vmatpush1.xpose.msra.mxu0 0.0
  %635 = vmatprep.subr.mxu0 0.0
  %636 = vmatpush1.xpose.msra.mxu0 0.0
  %637 = vmatprep.subr.mxu0 0.0
  %638 = vmatpush1.xpose.msra.mxu0 0.0
  %639 = vmatprep.subr.mxu0 0.0
  %640 = vmatpush1.xpose.msra.mxu0 0.0
  %641 = vmatprep.subr.mxu0 0.0
  %642 = vmatpush1.xpose.msra.mxu0 0.0
  %643 = vmatprep.subr.mxu0 0.0
  %644 = vmatpush1.xpose.msra.mxu0 0.0
  %645 = vmatprep.subr.mxu0 0.0
  %646 = vmatpush1.xpose.msra.mxu0 0.0
  %647 = vmatprep.subr.mxu0 0.0
  %648 = vmatpush1.xpose.msra.mxu0 0.0
  %649 = vmatprep.subr.mxu0 0.0
  %650 = vmatpush1.xpose.msra.mxu0 0.0
  %651 = vmatprep.subr.mxu0 0.0
  %652 = vmatpush1.xpose.msra.mxu0 0.0
  %653 = vmatprep.subr.mxu0 0.0
  %654 = vmatpush1.xpose.msra.mxu0 0.0
  %655 = vmatprep.subr.mxu0 0.0
  %656 = vmatpush1.xpose.msra.mxu0 0.0
  %657 = vmatprep.subr.mxu0 0.0
  %658 = vmatpush1.xpose.msra.mxu0 0.0
  %659 = vmatprep.subr.mxu0 0.0
  %660 = vmatpush1.xpose.msra.mxu0 0.0
  %661 = vmatprep.subr.mxu0 0.0
  %662 = vmatpush1.xpose.msra.mxu0 0.0
  %663 = vmatprep.subr.mxu0 0.0
  %664 = vmatpush1.xpose.msra.mxu0 0.0
  %665 = vmatprep.subr.mxu0 0.0
  %666 = vmatpush1.xpose.msra.mxu0 0.0
  %667 = vmatprep.subr.mxu0 0.0
  %668 = vmatpush1.xpose.msra.mxu0 0.0
  %669 = vmatprep.subr.mxu0 0.0
  %670 = vmatpush1.xpose.msra.mxu0 0.0
  %671 = vmatprep.subr.mxu0 0.0
  %672 = vmatpush1.xpose.msra.mxu0 0.0
  %673 = vmatprep.mubr.f32.mxu0 0.0
  %674 = vmatmul.mubr.f32.gmra.mrb[0].mxu0 %v324
  %v675 = vpop.f32.mrb[0].mxu0
  %v676 = vadd.f32 %v61, %v675
  %v677 = vpop.f32.mrb[0].mxu0
  %678 = vmatprep.mubr.f32.mxu0 0.0
  %679 = vmatmul.mubr.f32.gmra.mrb[0].mxu0 %v327
  %v680 = vpop.f32.mrb[0].mxu0
  %v681 = vadd.f32 %v62, %v680
  %v682 = vpop.f32.mrb[0].mxu0
  %683 = vdwg.mxu0
  %v684 = vsel %vm410, %v676, -inf
  %685 = vmax.xlane.f32.xlu0 %v684
  %v686 = vpop.xlane.xlu0 %685
  %v687 = vsel %vm410, %v681, -inf
  %688 = vmax.xlane.f32.xlu0 %v687
  %v689 = vpop.xlane.xlu0 %688
  %v690 = vsub.f32 %v676, %v686
  %v691 = vsub.f32 %v681, %v689
  %v692 = vmul.f32 %v690, 1.442695
  %v693 = vpow.pop %v692
  %v694 = vmul.f32 %v691, 1.442695
  %v695 = vpow.pop %v694
  %v696 = vsel %vm410, %v693, 0.0
  %697 = vadd.xlane.f32.xlu0 %v696
  %v698 = vpop.xlane.xlu0 %697
  %v699 = vsel %vm410, %v695, 0.0
  %700 = vadd.xlane.f32.xlu0 %v699
  %v701 = vpop.xlane.xlu0 %700
  %v702 = vrcp.pop %v698
  %v703 = vrcp.pop %v701
  %v704 = vmul.f32 %v693, %v702
  %v705 = vmul.f32 %v695, %v703
  %v707 = vsel %vm410, %v704, 0
  %v710 = vsel %vm410, %v705, 0
  %712 = vmatprep.subr.mxu0 0.0
  %713 = vmatpush1.msra.mxu0 %v595
  %714 = vmatprep.subr.mxu0 0.0
  %715 = vmatpush1.msra.mxu0 %v600
  %716 = vmatprep.subr.mxu0 0.0
  %717 = vmatpush1.msra.mxu0 0.0
  %718 = vmatprep.subr.mxu0 0.0
  %719 = vmatpush1.msra.mxu0 0.0
  %720 = vmatprep.subr.mxu0 0.0
  %721 = vmatpush1.msra.mxu0 0.0
  %722 = vmatprep.subr.mxu0 0.0
  %723 = vmatpush1.msra.mxu0 0.0
  %724 = vmatprep.subr.mxu0 0.0
  %725 = vmatpush1.msra.mxu0 0.0
  %726 = vmatprep.subr.mxu0 0.0
  %727 = vmatpush1.msra.mxu0 0.0
  %728 = vmatprep.subr.mxu0 0.0
  %729 = vmatpush1.msra.mxu0 0.0
  %730 = vmatprep.subr.mxu0 0.0
  %731 = vmatpush1.msra.mxu0 0.0
  %732 = vmatprep.subr.mxu0 0.0
  %733 = vmatpush1.msra.mxu0 0.0
  %734 = vmatprep.subr.mxu0 0.0
  %735 = vmatpush1.msra.mxu0 0.0
  %736 = vmatprep.subr.mxu0 0.0
  %737 = vmatpush1.msra.mxu0 0.0
  %738 = vmatprep.subr.mxu0 0.0
  %739 = vmatpush1.msra.mxu0 0.0
  %740 = vmatprep.subr.mxu0 0.0
  %741 = vmatpush1.msra.mxu0 0.0
  %742 = vmatprep.subr.mxu0 0.0
  %743 = vmatpush1.msra.mxu0 0.0
  %744 = vmatprep.subr.mxu0 0.0
  %745 = vmatpush1.msra.mxu0 0.0
  %746 = vmatprep.subr.mxu0 0.0
  %747 = vmatpush1.msra.mxu0 0.0
  %748 = vmatprep.subr.mxu0 0.0
  %749 = vmatpush1.msra.mxu0 0.0
  %750 = vmatprep.subr.mxu0 0.0
  %751 = vmatpush1.msra.mxu0 0.0
  %752 = vmatprep.subr.mxu0 0.0
  %753 = vmatpush1.msra.mxu0 0.0
  %754 = vmatprep.subr.mxu0 0.0
  %755 = vmatpush1.msra.mxu0 0.0
  %756 = vmatprep.subr.mxu0 0.0
  %757 = vmatpush1.msra.mxu0 0.0
  %758 = vmatprep.subr.mxu0 0.0
  %759 = vmatpush1.msra.mxu0 0.0
  %760 = vmatprep.subr.mxu0 0.0
  %761 = vmatpush1.msra.mxu0 0.0
  %762 = vmatprep.subr.mxu0 0.0
  %763 = vmatpush1.msra.mxu0 0.0
  %764 = vmatprep.subr.mxu0 0.0
  %765 = vmatpush1.msra.mxu0 0.0
  %766 = vmatprep.subr.mxu0 0.0
  %767 = vmatpush1.msra.mxu0 0.0
  %768 = vmatprep.subr.mxu0 0.0
  %769 = vmatpush1.msra.mxu0 0.0
  %770 = vmatprep.subr.mxu0 0.0
  %771 = vmatpush1.msra.mxu0 0.0
  %772 = vmatprep.subr.mxu0 0.0
  %773 = vmatpush1.msra.mxu0 0.0
  %774 = vmatprep.subr.mxu0 0.0
  %775 = vmatpush1.msra.mxu0 0.0
  %776 = vmatprep.mubr.f32.mxu0 0.0
  %777 = vmatmul.mubr.f32.gmra.mrb[0].mxu0 %v707
  %v778 = vpop.f32.mrb[0].mxu0
  %v779 = vadd.f32 0.0, %v778
  %v780 = vpop.f32.mrb[0].mxu0
  %781 = vmatprep.mubr.f32.mxu0 0.0
  %782 = vmatmul.mubr.f32.gmra.mrb[0].mxu0 %v710
  %v783 = vpop.f32.mrb[0].mxu0
  %v784 = vadd.f32 0.0, %v783
  %v785 = vpop.f32.mrb[0].mxu0
  %786 = vdwg.mxu0
  %v788 = vsel %vm410, %v431, 0
  %v791 = vsel %vm410, %v432, 0
  %793 = vmatprep.subr.mxu0 0.0
  %794 = vmatpush1.msra.mxu0 %v315
  %795 = vmatprep.subr.mxu0 0.0
  %796 = vmatpush1.msra.mxu0 %v320
  %797 = vmatprep.subr.mxu0 0.0
  %798 = vmatpush1.msra.mxu0 0.0
  %799 = vmatprep.subr.mxu0 0.0
  %800 = vmatpush1.msra.mxu0 0.0
  %801 = vmatprep.subr.mxu0 0.0
  %802 = vmatpush1.msra.mxu0 0.0
  %803 = vmatprep.subr.mxu0 0.0
  %804 = vmatpush1.msra.mxu0 0.0
  %805 = vmatprep.subr.mxu0 0.0
  %806 = vmatpush1.msra.mxu0 0.0
  %807 = vmatprep.subr.mxu0 0.0
  %808 = vmatpush1.msra.mxu0 0.0
  %809 = vmatprep.subr.mxu0 0.0
  %810 = vmatpush1.msra.mxu0 0.0
  %811 = vmatprep.subr.mxu0 0.0
  %812 = vmatpush1.msra.mxu0 0.0
  %813 = vmatprep.subr.mxu0 0.0
  %814 = vmatpush1.msra.mxu0 0.0
  %815 = vmatprep.subr.mxu0 0.0
  %816 = vmatpush1.msra.mxu0 0.0
  %817 = vmatprep.subr.mxu0 0.0
  %818 = vmatpush1.msra.mxu0 0.0
  %819 = vmatprep.subr.mxu0 0.0
  %820 = vmatpush1.msra.mxu0 0.0
  %821 = vmatprep.subr.mxu0 0.0
  %822 = vmatpush1.msra.mxu0 0.0
  %823 = vmatprep.subr.mxu0 0.0
  %824 = vmatpush1.msra.mxu0 0.0
  %825 = vmatprep.subr.mxu0 0.0
  %826 = vmatpush1.msra.mxu0 0.0
  %827 = vmatprep.subr.mxu0 0.0
  %828 = vmatpush1.msra.mxu0 0.0
  %829 = vmatprep.subr.mxu0 0.0
  %830 = vmatpush1.msra.mxu0 0.0
  %831 = vmatprep.subr.mxu0 0.0
  %832 = vmatpush1.msra.mxu0 0.0
  %833 = vmatprep.subr.mxu0 0.0
  %834 = vmatpush1.msra.mxu0 0.0
  %835 = vmatprep.subr.mxu0 0.0
  %836 = vmatpush1.msra.mxu0 0.0
  %837 = vmatprep.subr.mxu0 0.0
  %838 = vmatpush1.msra.mxu0 0.0
  %839 = vmatprep.subr.mxu0 0.0
  %840 = vmatpush1.msra.mxu0 0.0
  %841 = vmatprep.subr.mxu0 0.0
  %842 = vmatpush1.msra.mxu0 0.0
  %843 = vmatprep.subr.mxu0 0.0
  %844 = vmatpush1.msra.mxu0 0.0
  %845 = vmatprep.subr.mxu0 0.0
  %846 = vmatpush1.msra.mxu0 0.0
  %847 = vmatprep.subr.mxu0 0.0
  %848 = vmatpush1.msra.mxu0 0.0
  %849 = vmatprep.subr.mxu0 0.0
  %850 = vmatpush1.msra.mxu0 0.0
  %851 = vmatprep.subr.mxu0 0.0
  %852 = vmatpush1.msra.mxu0 0.0
  %853 = vmatprep.subr.mxu0 0.0
  %854 = vmatpush1.msra.mxu0 0.0
  %855 = vmatprep.subr.mxu0 0.0
  %856 = vmatpush1.msra.mxu0 0.0
  %857 = vmatprep.mubr.f32.mxu0 0.0
  %858 = vmatmul.mubr.f32.gmra.mrb[0].mxu0 %v788
  %v859 = vpop.f32.mrb[0].mxu0
  %v860 = vadd.f32 %v779, %v859
  %v861 = vpop.f32.mrb[0].mxu0
  %862 = vmatprep.mubr.f32.mxu0 0.0
  %863 = vmatmul.mubr.f32.gmra.mrb[0].mxu0 %v791
  %v864 = vpop.f32.mrb[0].mxu0
  %v865 = vadd.f32 %v784, %v864
  %v866 = vpop.f32.mrb[0].mxu0
  %867 = vdwg.mxu0
  %s868 = scalar_lea.vmem %s2, 320
  %v869 = vld [vmem:[%s868] sm:$0xff]
  %v870 = vld [vmem:[%s868 + $0x8] sm:$0xff]
  %v871 = vld [vmem:[%s868 + $0x10] sm:$0xff]
  %v872 = vld [vmem:[%s868 + $0x18] sm:$0xff]
  %v873 = vld [vmem:[%s3 + $0x8] sm:$0x1]
  %v874 = vlaneseq
  %v875 = vshrl.u32 %v874, 7
  %v876 = vsub.s32 0, %v875
  %v877 = vrot.slane %v873, %v876
  %v879 = vsel %vm21, %v860, 0
  %v882 = vsel %vm21, %v865, 0
  %884 = vmatprep.subr.mxu0 0.0
  %885 = vmatpush1.msra.mxu0 %v869
  %886 = vmatprep.subr.mxu0 0.0
  %887 = vmatpush1.msra.mxu0 %v870
  %888 = vmatprep.subr.mxu0 0.0
  %889 = vmatpush1.msra.mxu0 %v871
  %890 = vmatprep.subr.mxu0 0.0
  %891 = vmatpush1.msra.mxu0 %v872
  %892 = vmatprep.subr.mxu0 0.0
  %893 = vmatpush1.msra.mxu0 0.0
  %894 = vmatprep.subr.mxu0 0.0
  %895 = vmatpush1.msra.mxu0 0.0
  %896 = vmatprep.subr.mxu0 0.0
  %897 = vmatpush1.msra.mxu0 0.0
  %898 = vmatprep.subr.mxu0 0.0
  %899 = vmatpush1.msra.mxu0 0.0
  %900 = vmatprep.subr.mxu0 0.0
  %901 = vmatpush1.msra.mxu0 0.0
  %902 = vmatprep.subr.mxu0 0.0
  %903 = vmatpush1.msra.mxu0 0.0
  %904 = vmatprep.subr.mxu0 0.0
  %905 = vmatpush1.msra.mxu0 0.0
  %906 = vmatprep.subr.mxu0 0.0
  %907 = vmatpush1.msra.mxu0 0.0
  %908 = vmatprep.subr.mxu0 0.0
  %909 = vmatpush1.msra.mxu0 0.0
  %910 = vmatprep.subr.mxu0 0.0
  %911 = vmatpush1.msra.mxu0 0.0
  %912 = vmatprep.subr.mxu0 0.0
  %913 = vmatpush1.msra.mxu0 0.0
  %914 = vmatprep.subr.mxu0 0.0
  %915 = vmatpush1.msra.mxu0 0.0
  %916 = vmatprep.subr.mxu0 0.0
  %917 = vmatpush1.msra.mxu0 0.0
  %918 = vmatprep.subr.mxu0 0.0
  %919 = vmatpush1.msra.mxu0 0.0
  %920 = vmatprep.subr.mxu0 0.0
  %921 = vmatpush1.msra.mxu0 0.0
  %922 = vmatprep.subr.mxu0 0.0
  %923 = vmatpush1.msra.mxu0 0.0
  %924 = vmatprep.subr.mxu0 0.0
  %925 = vmatpush1.msra.mxu0 0.0
  %926 = vmatprep.subr.mxu0 0.0
  %927 = vmatpush1.msra.mxu0 0.0
  %928 = vmatprep.subr.mxu0 0.0
  %929 = vmatpush1.msra.mxu0 0.0
  %930 = vmatprep.subr.mxu0 0.0
  %931 = vmatpush1.msra.mxu0 0.0
  %932 = vmatprep.subr.mxu0 0.0
  %933 = vmatpush1.msra.mxu0 0.0
  %934 = vmatprep.subr.mxu0 0.0
  %935 = vmatpush1.msra.mxu0 0.0
  %936 = vmatprep.subr.mxu0 0.0
  %937 = vmatpush1.msra.mxu0 0.0
  %938 = vmatprep.subr.mxu0 0.0
  %939 = vmatpush1.msra.mxu0 0.0
  %940 = vmatprep.subr.mxu0 0.0
  %941 = vmatpush1.msra.mxu0 0.0
  %942 = vmatprep.subr.mxu0 0.0
  %943 = vmatpush1.msra.mxu0 0.0
  %944 = vmatprep.subr.mxu0 0.0
  %945 = vmatpush1.msra.mxu0 0.0
  %946 = vmatprep.subr.mxu0 0.0
  %947 = vmatpush1.msra.mxu0 0.0
  %948 = vmatprep.mubr.f32.mxu0 0.0
  %949 = vmatmul.mubr.f32.gmra.mrb[0].mxu0 %v879
  %v950 = vpop.f32.mrb[0].mxu0
  %v951 = vadd.f32 %v877, %v950
  %v952 = vpop.f32.mrb[0].mxu0
  %953 = vmatprep.mubr.f32.mxu0 0.0
  %954 = vmatmul.mubr.f32.gmra.mrb[0].mxu0 %v882
  %v955 = vpop.f32.mrb[0].mxu0
  %v956 = vadd.f32 %v877, %v955
  %v957 = vpop.f32.mrb[0].mxu0
  %958 = vdwg.mxu0
  %v959 = vadd.f32 %v59, %v951
  %v960 = vadd.f32 %v60, %v956
  %v961 = vld [vmem:[%s3 + $0xb] sm:$0x1]
  %v962 = vld [vmem:[%s3 + $0xc] sm:$0x1]
  %v963 = vsel %vm21, %v959, 0.0
  %964 = vadd.xlane.f32.xlu0 %v963
  %v965 = vpop.xlane.xlu0 %964
  %v966 = vsel %vm21, %v960, 0.0
  %967 = vadd.xlane.f32.xlu0 %v966
  %v968 = vpop.xlane.xlu0 %967
  %v969 = vmul.f32 %v965, %v28
  %v970 = vmul.f32 %v968, %v28
  %v971 = vsub.f32 %v959, %v969
  %v972 = vsub.f32 %v960, %v970
  %v973 = vmul.f32 %v971, %v971
  %v974 = vmul.f32 %v972, %v972
  %v975 = vsel %vm21, %v973, 0.0
  %976 = vadd.xlane.f32.xlu0 %v975
  %v977 = vpop.xlane.xlu0 %976
  %v978 = vsel %vm21, %v974, 0.0
  %979 = vadd.xlane.f32.xlu0 %v978
  %v980 = vpop.xlane.xlu0 %979
  %v981 = vmul.f32 %v977, %v28
  %v982 = vmul.f32 %v980, %v28
  %v983 = vadd.f32 %v981, 1e-12
  %v984 = vadd.f32 %v982, 1e-12
  %v985 = vrsqrt.pop %v983
  %v986 = vrsqrt.pop %v984
  %v987 = vmul.f32 %v971, %v985
  %v988 = vmul.f32 %v972, %v986
  %v989 = vlaneseq
  %v990 = vshrl.u32 %v989, 7
  %v991 = vsub.s32 0, %v990
  %v992 = vrot.slane %v961, %v991
  %v993 = vmul.f32 %v987, %v992
  %v994 = vmul.f32 %v988, %v992
  %v995 = vlaneseq
  %v996 = vshrl.u32 %v995, 7
  %v997 = vsub.s32 0, %v996
  %v998 = vrot.slane %v962, %v997
  %v999 = vadd.f32 %v993, %v998
  %v1000 = vadd.f32 %v994, %v998
  %s1001 = scalar_lea.vmem %s2, 384
  %v1002 = vld [vmem:[%s1001] sm:$0xff]
  %v1003 = vld [vmem:[%s1001 + $0x8] sm:$0xff]
  %v1004 = vld [vmem:[%s1001 + $0x10] sm:$0xff]
  %v1005 = vld [vmem:[%s1001 + $0x18] sm:$0xff]
  %v1006 = vld [vmem:[%s3 + $0x9] sm:$0x1]
  %v1007 = vlaneseq
  %v1008 = vshrl.u32 %v1007, 7
  %v1009 = vsub.s32 0, %v1008
  %v1010 = vrot.slane %v1006, %v1009
  %v1012 = vsel %vm21, %v999, 0
  %v1015 = vsel %vm21, %v1000, 0
  %1017 = vmatprep.subr.mxu0 0.0
  %1018 = vmatpush1.msra.mxu0 %v1002
  %1019 = vmatprep.subr.mxu0 0.0
  %1020 = vmatpush1.msra.mxu0 %v1003
  %1021 = vmatprep.subr.mxu0 0.0
  %1022 = vmatpush1.msra.mxu0 %v1004
  %1023 = vmatprep.subr.mxu0 0.0
  %1024 = vmatpush1.msra.mxu0 %v1005
  %1025 = vmatprep.subr.mxu0 0.0
  %1026 = vmatpush1.msra.mxu0 0.0
  %1027 = vmatprep.subr.mxu0 0.0
  %1028 = vmatpush1.msra.mxu0 0.0
  %1029 = vmatprep.subr.mxu0 0.0
  %1030 = vmatpush1.msra.mxu0 0.0
  %1031 = vmatprep.subr.mxu0 0.0
  %1032 = vmatpush1.msra.mxu0 0.0
  %1033 = vmatprep.subr.mxu0 0.0
  %1034 = vmatpush1.msra.mxu0 0.0
  %1035 = vmatprep.subr.mxu0 0.0
  %1036 = vmatpush1.msra.mxu0 0.0
  %1037 = vmatprep.subr.mxu0 0.0
  %1038 = vmatpush1.msra.mxu0 0.0
  %1039 = vmatprep.subr.mxu0 0.0
  %1040 = vmatpush1.msra.mxu0 0.0
  %1041 = vmatprep.subr.mxu0 0.0
  %1042 = vmatpush1.msra.mxu0 0.0
  %1043 = vmatprep.subr.mxu0 0.0
  %1044 = vmatpush1.msra.mxu0 0.0
  %1045 = vmatprep.subr.mxu0 0.0
  %1046 = vmatpush1.msra.mxu0 0.0
  %1047 = vmatprep.subr.mxu0 0.0
  %1048 = vmatpush1.msra.mxu0 0.0
  %1049 = vmatprep.subr.mxu0 0.0
  %1050 = vmatpush1.msra.mxu0 0.0
  %1051 = vmatprep.subr.mxu0 0.0
  %1052 = vmatpush1.msra.mxu0 0.0
  %1053 = vmatprep.subr.mxu0 0.0
  %1054 = vmatpush1.msra.mxu0 0.0
  %1055 = vmatprep.subr.mxu0 0.0
  %1056 = vmatpush1.msra.mxu0 0.0
  %1057 = vmatprep.subr.mxu0 0.0
  %1058 = vmatpush1.msra.mxu0 0.0
  %1059 = vmatprep.subr.mxu0 0.0
  %1060 = vmatpush1.msra.mxu0 0.0
  %1061 = vmatprep.subr.mxu0 0.0
  %1062 = vmatpush1.msra.mxu0 0.0
  %1063 = vmatprep.subr.mxu0 0.0
  %1064 = vmatpush1.msra.mxu0 0.0
  %1065 = vmatprep.subr.mxu0 0.0
  %1066 = vmatpush1.msra.mxu0 0.0
  %1067 = vmatprep.subr.mxu0 0.0
  %1068 = vmatpush1.msra.mxu0 0.0
  %1069 = vmatprep.subr.mxu0 0.0
  %1070 = vmatpush1.msra.mxu0 0.0
  %1071 = vmatprep.subr.mxu0 0.0
  %1072 = vmatpush1.msra.mxu0 0.0
  %1073 = vmatprep.subr.mxu0 0.0
  %1074 = vmatpush1.msra.mxu0 0.0
  %1075 = vmatprep.subr.mxu0 0.0
  %1076 = vmatpush1.msra.mxu0 0.0
  %1077 = vmatprep.subr.mxu0 0.0
  %1078 = vmatpush1.msra.mxu0 0.0
  %1079 = vmatprep.subr.mxu0 0.0
  %1080 = vmatpush1.msra.mxu0 0.0
  %1081 = vmatprep.mubr.f32.mxu0 0.0
  %1082 = vmatmul.mubr.f32.gmra.mrb[0].mxu0 %v1012
  %v1083 = vpop.f32.mrb[0].mxu0
  %v1084 = vadd.f32 %v1010, %v1083
  %v1085 = vpop.f32.mrb[0].mxu0
  %1086 = vmatprep.mubr.f32.mxu0 0.0
  %1087 = vmatmul.mubr.f32.gmra.mrb[0].mxu0 %v1015
  %v1088 = vpop.f32.mrb[0].mxu0
  %v1089 = vadd.f32 %v1010, %v1088
  %v1090 = vpop.f32.mrb[0].mxu0
  %1091 = vdwg.mxu0
  %v1092 = vmul.f32 %v1084, 0.5
  %v1093 = vmul.f32 %v1089, 0.5
  %v1094 = vrcp.pop 1.4142135
  %v1095 = vmul.f32 %v1084, %v1094
  %v1096 = vmul.f32 %v1089, %v1094
  %v1097 = verf.f32.pop %v1095
  %v1098 = verf.f32.pop %v1096
  %v1099 = vadd.f32 %v1097, 1.0
  %v1100 = vadd.f32 %v1098, 1.0
  %v1101 = vmul.f32 %v1092, %v1099
  %v1102 = vmul.f32 %v1093, %v1100
  %s1103 = scalar_lea.vmem %s2, 448
  %v1104 = vld [vmem:[%s1103] sm:$0xff]
  %v1105 = vld [vmem:[%s1103 + $0x8] sm:$0xff]
  %v1106 = vld [vmem:[%s1103 + $0x10] sm:$0xff]
  %v1107 = vld [vmem:[%s1103 + $0x18] sm:$0xff]
  %v1108 = vld [vmem:[%s1103 + $0x20] sm:$0xff]
  %v1109 = vld [vmem:[%s1103 + $0x28] sm:$0xff]
  %v1110 = vld [vmem:[%s1103 + $0x30] sm:$0xff]
  %v1111 = vld [vmem:[%s1103 + $0x38] sm:$0xff]
  %v1112 = vld [vmem:[%s3 + $0xa] sm:$0x1]
  %v1113 = vlaneseq
  %v1114 = vshrl.u32 %v1113, 7
  %v1115 = vsub.s32 0, %v1114
  %v1116 = vrot.slane %v1112, %v1115
  %vm1117 = vcmask 523264
  %v1119 = vsel %vm1117, %v1101, 0
  %v1122 = vsel %vm1117, %v1102, 0
  %1124 = vmatprep.subr.mxu0 0.0
  %1125 = vmatpush1.msra.mxu0 %v1104
  %1126 = vmatprep.subr.mxu0 0.0
  %1127 = vmatpush1.msra.mxu0 %v1105
  %1128 = vmatprep.subr.mxu0 0.0
  %1129 = vmatpush1.msra.mxu0 %v1106
  %1130 = vmatprep.subr.mxu0 0.0
  %1131 = vmatpush1.msra.mxu0 %v1107
  %1132 = vmatprep.subr.mxu0 0.0
  %1133 = vmatpush1.msra.mxu0 %v1108
  %1134 = vmatprep.subr.mxu0 0.0
  %1135 = vmatpush1.msra.mxu0 %v1109
  %1136 = vmatprep.subr.mxu0 0.0
  %1137 = vmatpush1.msra.mxu0 %v1110
  %1138 = vmatprep.subr.mxu0 0.0
  %1139 = vmatpush1.msra.mxu0 %v1111
  %1140 = vmatprep.subr.mxu0 0.0
  %1141 = vmatpush1.msra.mxu0 0.0
  %1142 = vmatprep.subr.mxu0 0.0
  %1143 = vmatpush1.msra.mxu0 0.0
  %1144 = vmatprep.subr.mxu0 0.0
  %1145 = vmatpush1.msra.mxu0 0.0
  %1146 = vmatprep.subr.mxu0 0.0
  %1147 = vmatpush1.msra.mxu0 0.0
  %1148 = vmatprep.subr.mxu0 0.0
  %1149 = vmatpush1.msra.mxu0 0.0
  %1150 = vmatprep.subr.mxu0 0.0
  %1151 = vmatpush1.msra.mxu0 0.0
  %1152 = vmatprep.subr.mxu0 0.0
  %1153 = vmatpush1.msra.mxu0 0.0
  %1154 = vmatprep.subr.mxu0 0.0
  %1155 = vmatpush1.msra.mxu0 0.0
  %1156 = vmatprep.subr.mxu0 0.0
  %1157 = vmatpush1.msra.mxu0 0.0
  %1158 = vmatprep.subr.mxu0 0.0
  %1159 = vmatpush1.msra.mxu0 0.0
  %1160 = vmatprep.subr.mxu0 0.0
  %1161 = vmatpush1.msra.mxu0 0.0
  %1162 = vmatprep.subr.mxu0 0.0
  %1163 = vmatpush1.msra.mxu0 0.0
  %1164 = vmatprep.subr.mxu0 0.0
  %1165 = vmatpush1.msra.mxu0 0.0
  %1166 = vmatprep.subr.mxu0 0.0
  %1167 = vmatpush1.msra.mxu0 0.0
  %1168 = vmatprep.subr.mxu0 0.0
  %1169 = vmatpush1.msra.mxu0 0.0
  %1170 = vmatprep.subr.mxu0 0.0
  %1171 = vmatpush1.msra.mxu0 0.0
  %1172 = vmatprep.subr.mxu0 0.0
  %1173 = vmatpush1.msra.mxu0 0.0
  %1174 = vmatprep.subr.mxu0 0.0
  %1175 = vmatpush1.msra.mxu0 0.0
  %1176 = vmatprep.subr.mxu0 0.0
  %1177 = vmatpush1.msra.mxu0 0.0
  %1178 = vmatprep.subr.mxu0 0.0
  %1179 = vmatpush1.msra.mxu0 0.0
  %1180 = vmatprep.subr.mxu0 0.0
  %1181 = vmatpush1.msra.mxu0 0.0
  %1182 = vmatprep.subr.mxu0 0.0
  %1183 = vmatpush1.msra.mxu0 0.0
  %1184 = vmatprep.subr.mxu0 0.0
  %1185 = vmatpush1.msra.mxu0 0.0
  %1186 = vmatprep.subr.mxu0 0.0
  %1187 = vmatpush1.msra.mxu0 0.0
  %1188 = vmatprep.mubr.f32.mxu0 0.0
  %1189 = vmatmul.mubr.f32.gmra.mrb[0].mxu0 %v1119
  %v1190 = vpop.f32.mrb[0].mxu0
  %v1191 = vadd.f32 %v1116, %v1190
  %v1192 = vpop.f32.mrb[0].mxu0
  %1193 = vmatprep.mubr.f32.mxu0 0.0
  %1194 = vmatmul.mubr.f32.gmra.mrb[0].mxu0 %v1122
  %v1195 = vpop.f32.mrb[0].mxu0
  %v1196 = vadd.f32 %v1116, %v1195
  %v1197 = vpop.f32.mrb[0].mxu0
  %1198 = vdwg.mxu0
  %v1199 = vadd.f32 %v999, %v1191
  %v1200 = vadd.f32 %v1000, %v1196
  %v1201 = vld [vmem:[%s3 + $0xd] sm:$0x1]
  %v1202 = vld [vmem:[%s3 + $0xe] sm:$0x1]
  %v1203 = vsel %vm21, %v1199, 0.0
  %1204 = vadd.xlane.f32.xlu0 %v1203
  %v1205 = vpop.xlane.xlu0 %1204
  %v1206 = vsel %vm21, %v1200, 0.0
  %1207 = vadd.xlane.f32.xlu0 %v1206
  %v1208 = vpop.xlane.xlu0 %1207
  %v1209 = vmul.f32 %v1205, %v28
  %v1210 = vmul.f32 %v1208, %v28
  %v1211 = vsub.f32 %v1199, %v1209
  %v1212 = vsub.f32 %v1200, %v1210
  %v1213 = vmul.f32 %v1211, %v1211
  %v1214 = vmul.f32 %v1212, %v1212
  %v1215 = vsel %vm21, %v1213, 0.0
  %1216 = vadd.xlane.f32.xlu0 %v1215
  %v1217 = vpop.xlane.xlu0 %1216
  %v1218 = vsel %vm21, %v1214, 0.0
  %1219 = vadd.xlane.f32.xlu0 %v1218
  %v1220 = vpop.xlane.xlu0 %1219
  %v1221 = vmul.f32 %v1217, %v28
  %v1222 = vmul.f32 %v1220, %v28
  %v1223 = vadd.f32 %v1221, 1e-12
  %v1224 = vadd.f32 %v1222, 1e-12
  %v1225 = vrsqrt.pop %v1223
  %v1226 = vrsqrt.pop %v1224
  %v1227 = vmul.f32 %v1211, %v1225
  %v1228 = vmul.f32 %v1212, %v1226
  %v1229 = vlaneseq
  %v1230 = vshrl.u32 %v1229, 7
  %v1231 = vsub.s32 0, %v1230
  %v1232 = vrot.slane %v1201, %v1231
  %v1233 = vmul.f32 %v1227, %v1232
  %v1234 = vmul.f32 %v1228, %v1232
  %v1235 = vlaneseq
  %v1236 = vshrl.u32 %v1235, 7
  %v1237 = vsub.s32 0, %v1236
  %v1238 = vrot.slane %v1202, %v1237
  %v1239 = vadd.f32 %v1233, %v1238
  %v1240 = vadd.f32 %v1234, %v1238
  %s1241 = scalar_lea.vmem %s2, 512
  %v1242 = vld [vmem:[%s1241] sm:$0xff]
  %v1243 = vld [vmem:[%s1241 + $0x8] sm:$0xff]
  %v1244 = vld [vmem:[%s1241 + $0x10] sm:$0xff]
  %v1245 = vld [vmem:[%s1241 + $0x18] sm:$0xff]
  %v1246 = vld [vmem:[%s3 + $0xf] sm:$0x1]
  %v1247 = vlaneseq
  %v1248 = vshrl.u32 %v1247, 7
  %v1249 = vsub.s32 0, %v1248
  %v1250 = vrot.slane %v1246, %v1249
  %v1252 = vsel %vm21, %v1239, 0
  %v1255 = vsel %vm21, %v1240, 0
  %1257 = vmatprep.subr.mxu0 0.0
  %1258 = vmatpush1.msra.mxu0 %v1242
  %1259 = vmatprep.subr.mxu0 0.0
  %1260 = vmatpush1.msra.mxu0 %v1243
  %1261 = vmatprep.subr.mxu0 0.0
  %1262 = vmatpush1.msra.mxu0 %v1244
  %1263 = vmatprep.subr.mxu0 0.0
  %1264 = vmatpush1.msra.mxu0 %v1245
  %1265 = vmatprep.subr.mxu0 0.0
  %1266 = vmatpush1.msra.mxu0 0.0
  %1267 = vmatprep.subr.mxu0 0.0
  %1268 = vmatpush1.msra.mxu0 0.0
  %1269 = vmatprep.subr.mxu0 0.0
  %1270 = vmatpush1.msra.mxu0 0.0
  %1271 = vmatprep.subr.mxu0 0.0
  %1272 = vmatpush1.msra.mxu0 0.0
  %1273 = vmatprep.subr.mxu0 0.0
  %1274 = vmatpush1.msra.mxu0 0.0
  %1275 = vmatprep.subr.mxu0 0.0
  %1276 = vmatpush1.msra.mxu0 0.0
  %1277 = vmatprep.subr.mxu0 0.0
  %1278 = vmatpush1.msra.mxu0 0.0
  %1279 = vmatprep.subr.mxu0 0.0
  %1280 = vmatpush1.msra.mxu0 0.0
  %1281 = vmatprep.subr.mxu0 0.0
  %1282 = vmatpush1.msra.mxu0 0.0
  %1283 = vmatprep.subr.mxu0 0.0
  %1284 = vmatpush1.msra.mxu0 0.0
  %1285 = vmatprep.subr.mxu0 0.0
  %1286 = vmatpush1.msra.mxu0 0.0
  %1287 = vmatprep.subr.mxu0 0.0
  %1288 = vmatpush1.msra.mxu0 0.0
  %1289 = vmatprep.subr.mxu0 0.0
  %1290 = vmatpush1.msra.mxu0 0.0
  %1291 = vmatprep.subr.mxu0 0.0
  %1292 = vmatpush1.msra.mxu0 0.0
  %1293 = vmatprep.subr.mxu0 0.0
  %1294 = vmatpush1.msra.mxu0 0.0
  %1295 = vmatprep.subr.mxu0 0.0
  %1296 = vmatpush1.msra.mxu0 0.0
  %1297 = vmatprep.subr.mxu0 0.0
  %1298 = vmatpush1.msra.mxu0 0.0
  %1299 = vmatprep.subr.mxu0 0.0
  %1300 = vmatpush1.msra.mxu0 0.0
  %1301 = vmatprep.subr.mxu0 0.0
  %1302 = vmatpush1.msra.mxu0 0.0
  %1303 = vmatprep.subr.mxu0 0.0
  %1304 = vmatpush1.msra.mxu0 0.0
  %1305 = vmatprep.subr.mxu0 0.0
  %1306 = vmatpush1.msra.mxu0 0.0
  %1307 = vmatprep.subr.mxu0 0.0
  %1308 = vmatpush1.msra.mxu0 0.0
  %1309 = vmatprep.subr.mxu0 0.0
  %1310 = vmatpush1.msra.mxu0 0.0
  %1311 = vmatprep.subr.mxu0 0.0
  %1312 = vmatpush1.msra.mxu0 0.0
  %1313 = vmatprep.subr.mxu0 0.0
  %1314 = vmatpush1.msra.mxu0 0.0
  %1315 = vmatprep.subr.mxu0 0.0
  %1316 = vmatpush1.msra.mxu0 0.0
  %1317 = vmatprep.subr.mxu0 0.0
  %1318 = vmatpush1.msra.mxu0 0.0
  %1319 = vmatprep.subr.mxu0 0.0
  %1320 = vmatpush1.msra.mxu0 0.0
  %1321 = vmatprep.mubr.f32.mxu0 0.0
  %1322 = vmatmul.mubr.f32.gmra.mrb[0].mxu0 %v1252
  %v1323 = vpop.f32.mrb[0].mxu0
  %v1324 = vadd.f32 %v1250, %v1323
  %v1325 = vpop.f32.mrb[0].mxu0
  %1326 = vmatprep.mubr.f32.mxu0 0.0
  %1327 = vmatmul.mubr.f32.gmra.mrb[0].mxu0 %v1255
  %v1328 = vpop.f32.mrb[0].mxu0
  %v1329 = vadd.f32 %v1250, %v1328
  %v1330 = vpop.f32.mrb[0].mxu0
  %1331 = vdwg.mxu0
  %s1332 = scalar_lea.vmem %s2, 576
  %v1333 = vld [vmem:[%s1332] sm:$0xff]
  %v1334 = vld [vmem:[%s1332 + $0x8] sm:$0xff]
  %v1335 = vld [vmem:[%s1332 + $0x10] sm:$0xff]
  %v1336 = vld [vmem:[%s1332 + $0x18] sm:$0xff]
  %v1337 = vld [vmem:[%s3 + $0x10] sm:$0x1]
  %v1338 = vlaneseq
  %v1339 = vshrl.u32 %v1338, 7
  %v1340 = vsub.s32 0, %v1339
  %v1341 = vrot.slane %v1337, %v1340
  %1342 = vmatprep.subr.mxu0 0.0
  %1343 = vmatpush1.msra.mxu0 %v1333
  %1344 = vmatprep.subr.mxu0 0.0
  %1345 = vmatpush1.msra.mxu0 %v1334
  %1346 = vmatprep.subr.mxu0 0.0
  %1347 = vmatpush1.msra.mxu0 %v1335
  %1348 = vmatprep.subr.mxu0 0.0
  %1349 = vmatpush1.msra.mxu0 %v1336
  %1350 = vmatprep.subr.mxu0 0.0
  %1351 = vmatpush1.msra.mxu0 0.0
  %1352 = vmatprep.subr.mxu0 0.0
  %1353 = vmatpush1.msra.mxu0 0.0
  %1354 = vmatprep.subr.mxu0 0.0
  %1355 = vmatpush1.msra.mxu0 0.0
  %1356 = vmatprep.subr.mxu0 0.0
  %1357 = vmatpush1.msra.mxu0 0.0
  %1358 = vmatprep.subr.mxu0 0.0
  %1359 = vmatpush1.msra.mxu0 0.0
  %1360 = vmatprep.subr.mxu0 0.0
  %1361 = vmatpush1.msra.mxu0 0.0
  %1362 = vmatprep.subr.mxu0 0.0
  %1363 = vmatpush1.msra.mxu0 0.0
  %1364 = vmatprep.subr.mxu0 0.0
  %1365 = vmatpush1.msra.mxu0 0.0
  %1366 = vmatprep.subr.mxu0 0.0
  %1367 = vmatpush1.msra.mxu0 0.0
  %1368 = vmatprep.subr.mxu0 0.0
  %1369 = vmatpush1.msra.mxu0 0.0
  %1370 = vmatprep.subr.mxu0 0.0
  %1371 = vmatpush1.msra.mxu0 0.0
  %1372 = vmatprep.subr.mxu0 0.0
  %1373 = vmatpush1.msra.mxu0 0.0
  %1374 = vmatprep.subr.mxu0 0.0
  %1375 = vmatpush1.msra.mxu0 0.0
  %1376 = vmatprep.subr.mxu0 0.0
  %1377 = vmatpush1.msra.mxu0 0.0
  %1378 = vmatprep.subr.mxu0 0.0
  %1379 = vmatpush1.msra.mxu0 0.0
  %1380 = vmatprep.subr.mxu0 0.0
  %1381 = vmatpush1.msra.mxu0 0.0
  %1382 = vmatprep.subr.mxu0 0.0
  %1383 = vmatpush1.msra.mxu0 0.0
  %1384 = vmatprep.subr.mxu0 0.0
  %1385 = vmatpush1.msra.mxu0 0.0
  %1386 = vmatprep.subr.mxu0 0.0
  %1387 = vmatpush1.msra.mxu0 0.0
  %1388 = vmatprep.subr.mxu0 0.0
  %1389 = vmatpush1.msra.mxu0 0.0
  %1390 = vmatprep.subr.mxu0 0.0
  %1391 = vmatpush1.msra.mxu0 0.0
  %1392 = vmatprep.subr.mxu0 0.0
  %1393 = vmatpush1.msra.mxu0 0.0
  %1394 = vmatprep.subr.mxu0 0.0
  %1395 = vmatpush1.msra.mxu0 0.0
  %1396 = vmatprep.subr.mxu0 0.0
  %1397 = vmatpush1.msra.mxu0 0.0
  %1398 = vmatprep.subr.mxu0 0.0
  %1399 = vmatpush1.msra.mxu0 0.0
  %1400 = vmatprep.subr.mxu0 0.0
  %1401 = vmatpush1.msra.mxu0 0.0
  %1402 = vmatprep.subr.mxu0 0.0
  %1403 = vmatpush1.msra.mxu0 0.0
  %1404 = vmatprep.subr.mxu0 0.0
  %1405 = vmatpush1.msra.mxu0 0.0
  %1406 = vmatprep.mubr.f32.mxu0 0.0
  %1407 = vmatmul.mubr.f32.gmra.mrb[0].mxu0 %v1252
  %v1408 = vpop.f32.mrb[0].mxu0
  %v1409 = vadd.f32 %v1341, %v1408
  %v1410 = vpop.f32.mrb[0].mxu0
  %1411 = vmatprep.mubr.f32.mxu0 0.0
  %1412 = vmatmul.mubr.f32.gmra.mrb[0].mxu0 %v1255
  %v1413 = vpop.f32.mrb[0].mxu0
  %v1414 = vadd.f32 %v1341, %v1413
  %v1415 = vpop.f32.mrb[0].mxu0
  %1416 = vdwg.mxu0
  %s1417 = scalar_lea.vmem %s2, 704
  %v1418 = vld [vmem:[%s1417] sm:$0xff]
  %v1419 = vld [vmem:[%s1417 + $0x8] sm:$0xff]
  %v1420 = vld [vmem:[%s1417 + $0x10] sm:$0xff]
  %v1421 = vld [vmem:[%s1417 + $0x18] sm:$0xff]
  %v1422 = vld [vmem:[%s3 + $0x12] sm:$0x1]
  %v1423 = vlaneseq
  %v1424 = vshrl.u32 %v1423, 7
  %v1425 = vsub.s32 0, %v1424
  %v1426 = vrot.slane %v1422, %v1425
  %1427 = vmatprep.subr.mxu0 0.0
  %1428 = vmatpush1.msra.mxu0 %v1418
  %1429 = vmatprep.subr.mxu0 0.0
  %1430 = vmatpush1.msra.mxu0 %v1419
  %1431 = vmatprep.subr.mxu0 0.0
  %1432 = vmatpush1.msra.mxu0 %v1420
  %1433 = vmatprep.subr.mxu0 0.0
  %1434 = vmatpush1.msra.mxu0 %v1421
  %1435 = vmatprep.subr.mxu0 0.0
  %1436 = vmatpush1.msra.mxu0 0.0
  %1437 = vmatprep.subr.mxu0 0.0
  %1438 = vmatpush1.msra.mxu0 0.0
  %1439 = vmatprep.subr.mxu0 0.0
  %1440 = vmatpush1.msra.mxu0 0.0
  %1441 = vmatprep.subr.mxu0 0.0
  %1442 = vmatpush1.msra.mxu0 0.0
  %1443 = vmatprep.subr.mxu0 0.0
  %1444 = vmatpush1.msra.mxu0 0.0
  %1445 = vmatprep.subr.mxu0 0.0
  %1446 = vmatpush1.msra.mxu0 0.0
  %1447 = vmatprep.subr.mxu0 0.0
  %1448 = vmatpush1.msra.mxu0 0.0
  %1449 = vmatprep.subr.mxu0 0.0
  %1450 = vmatpush1.msra.mxu0 0.0
  %1451 = vmatprep.subr.mxu0 0.0
  %1452 = vmatpush1.msra.mxu0 0.0
  %1453 = vmatprep.subr.mxu0 0.0
  %1454 = vmatpush1.msra.mxu0 0.0
  %1455 = vmatprep.subr.mxu0 0.0
  %1456 = vmatpush1.msra.mxu0 0.0
  %1457 = vmatprep.subr.mxu0 0.0
  %1458 = vmatpush1.msra.mxu0 0.0
  %1459 = vmatprep.subr.mxu0 0.0
  %1460 = vmatpush1.msra.mxu0 0.0
  %1461 = vmatprep.subr.mxu0 0.0
  %1462 = vmatpush1.msra.mxu0 0.0
  %1463 = vmatprep.subr.mxu0 0.0
  %1464 = vmatpush1.msra.mxu0 0.0
  %1465 = vmatprep.subr.mxu0 0.0
  %1466 = vmatpush1.msra.mxu0 0.0
  %1467 = vmatprep.subr.mxu0 0.0
  %1468 = vmatpush1.msra.mxu0 0.0
  %1469 = vmatprep.subr.mxu0 0.0
  %1470 = vmatpush1.msra.mxu0 0.0
  %1471 = vmatprep.subr.mxu0 0.0
  %1472 = vmatpush1.msra.mxu0 0.0
  %1473 = vmatprep.subr.mxu0 0.0
  %1474 = vmatpush1.msra.mxu0 0.0
  %1475 = vmatprep.subr.mxu0 0.0
  %1476 = vmatpush1.msra.mxu0 0.0
  %1477 = vmatprep.subr.mxu0 0.0
  %1478 = vmatpush1.msra.mxu0 0.0
  %1479 = vmatprep.subr.mxu0 0.0
  %1480 = vmatpush1.msra.mxu0 0.0
  %1481 = vmatprep.subr.mxu0 0.0
  %1482 = vmatpush1.msra.mxu0 0.0
  %1483 = vmatprep.subr.mxu0 0.0
  %1484 = vmatpush1.msra.mxu0 0.0
  %1485 = vmatprep.subr.mxu0 0.0
  %1486 = vmatpush1.msra.mxu0 0.0
  %1487 = vmatprep.subr.mxu0 0.0
  %1488 = vmatpush1.msra.mxu0 0.0
  %1489 = vmatprep.subr.mxu0 0.0
  %1490 = vmatpush1.msra.mxu0 0.0
  %1491 = vmatprep.mubr.f32.mxu0 0.0
  %1492 = vmatmul.mubr.f32.gmra.mrb[0].mxu0 %v1252
  %v1493 = vpop.f32.mrb[0].mxu0
  %v1494 = vadd.f32 %v1426, %v1493
  %v1495 = vpop.f32.mrb[0].mxu0
  %1496 = vmatprep.mubr.f32.mxu0 0.0
  %1497 = vmatmul.mubr.f32.gmra.mrb[0].mxu0 %v1255
  %v1498 = vpop.f32.mrb[0].mxu0
  %v1499 = vadd.f32 %v1426, %v1498
  %v1500 = vpop.f32.mrb[0].mxu0
  %1501 = vdwg.mxu0
  %v1503 = vsel %vm21, %v1324, 0
  %v1506 = vsel %vm21, %v1329, 0
  %v1509 = vsel %vm21, %v1409, 0
  %v1512 = vsel %vm21, %v1414, 0
  %1514 = vmatprep.subr.mxu0 0.0
  %1515 = vmatpush1.xpose.msra.mxu0 %v1509
  %1516 = vmatprep.subr.mxu0 0.0
  %1517 = vmatpush1.xpose.msra.mxu0 %v1512
  %1518 = vmatprep.subr.mxu0 0.0
  %1519 = vmatpush1.xpose.msra.mxu0 0.0
  %1520 = vmatprep.subr.mxu0 0.0
  %1521 = vmatpush1.xpose.msra.mxu0 0.0
  %1522 = vmatprep.subr.mxu0 0.0
  %1523 = vmatpush1.xpose.msra.mxu0 0.0
  %1524 = vmatprep.subr.mxu0 0.0
  %1525 = vmatpush1.xpose.msra.mxu0 0.0
  %1526 = vmatprep.subr.mxu0 0.0
  %1527 = vmatpush1.xpose.msra.mxu0 0.0
  %1528 = vmatprep.subr.mxu0 0.0
  %1529 = vmatpush1.xpose.msra.mxu0 0.0
  %1530 = vmatprep.subr.mxu0 0.0
  %1531 = vmatpush1.xpose.msra.mxu0 0.0
  %1532 = vmatprep.subr.mxu0 0.0
  %1533 = vmatpush1.xpose.msra.mxu0 0.0
  %1534 = vmatprep.subr.mxu0 0.0
  %1535 = vmatpush1.xpose.msra.mxu0 0.0
  %1536 = vmatprep.subr.mxu0 0.0
  %1537 = vmatpush1.xpose.msra.mxu0 0.0
  %1538 = vmatprep.subr.mxu0 0.0
  %1539 = vmatpush1.xpose.msra.mxu0 0.0
  %1540 = vmatprep.subr.mxu0 0.0
  %1541 = vmatpush1.xpose.msra.mxu0 0.0
  %1542 = vmatprep.subr.mxu0 0.0
  %1543 = vmatpush1.xpose.msra.mxu0 0.0
  %1544 = vmatprep.subr.mxu0 0.0
  %1545 = vmatpush1.xpose.msra.mxu0 0.0
  %1546 = vmatprep.subr.mxu0 0.0
  %1547 = vmatpush1.xpose.msra.mxu0 0.0
  %1548 = vmatprep.subr.mxu0 0.0
  %1549 = vmatpush1.xpose.msra.mxu0 0.0
  %1550 = vmatprep.subr.mxu0 0.0
  %1551 = vmatpush1.xpose.msra.mxu0 0.0
  %1552 = vmatprep.subr.mxu0 0.0
  %1553 = vmatpush1.xpose.msra.mxu0 0.0
  %1554 = vmatprep.subr.mxu0 0.0
  %1555 = vmatpush1.xpose.msra.mxu0 0.0
  %1556 = vmatprep.subr.mxu0 0.0
  %1557 = vmatpush1.xpose.msra.mxu0 0.0
  %1558 = vmatprep.subr.mxu0 0.0
  %1559 = vmatpush1.xpose.msra.mxu0 0.0
  %1560 = vmatprep.subr.mxu0 0.0
  %1561 = vmatpush1.xpose.msra.mxu0 0.0
  %1562 = vmatprep.subr.mxu0 0.0
  %1563 = vmatpush1.xpose.msra.mxu0 0.0
  %1564 = vmatprep.subr.mxu0 0.0
  %1565 = vmatpush1.xpose.msra.mxu0 0.0
  %1566 = vmatprep.subr.mxu0 0.0
  %1567 = vmatpush1.xpose.msra.mxu0 0.0
  %1568 = vmatprep.subr.mxu0 0.0
  %1569 = vmatpush1.xpose.msra.mxu0 0.0
  %1570 = vmatprep.subr.mxu0 0.0
  %1571 = vmatpush1.xpose.msra.mxu0 0.0
  %1572 = vmatprep.subr.mxu0 0.0
  %1573 = vmatpush1.xpose.msra.mxu0 0.0
  %1574 = vmatprep.subr.mxu0 0.0
  %1575 = vmatpush1.xpose.msra.mxu0 0.0
  %1576 = vmatprep.subr.mxu0 0.0
  %1577 = vmatpush1.xpose.msra.mxu0 0.0
  %1578 = vmatprep.mubr.f32.mxu0 0.0
  %1579 = vmatmul.mubr.f32.gmra.mrb[0].mxu0 %v1503
  %v1580 = vpop.f32.mrb[0].mxu0
  %v1581 = vadd.f32 %v61, %v1580
  %v1582 = vpop.f32.mrb[0].mxu0
  %1583 = vmatprep.mubr.f32.mxu0 0.0
  %1584 = vmatmul.mubr.f32.gmra.mrb[0].mxu0 %v1506
  %v1585 = vpop.f32.mrb[0].mxu0
  %v1586 = vadd.f32 %v62, %v1585
  %v1587 = vpop.f32.mrb[0].mxu0
  %1588 = vdwg.mxu0
  %v1589 = vsel %vm410, %v1581, -inf
  %1590 = vmax.xlane.f32.xlu0 %v1589
  %v1591 = vpop.xlane.xlu0 %1590
  %v1592 = vsel %vm410, %v1586, -inf
  %1593 = vmax.xlane.f32.xlu0 %v1592
  %v1594 = vpop.xlane.xlu0 %1593
  %v1595 = vsub.f32 %v1581, %v1591
  %v1596 = vsub.f32 %v1586, %v1594
  %v1597 = vmul.f32 %v1595, 1.442695
  %v1598 = vpow.pop %v1597
  %v1599 = vmul.f32 %v1596, 1.442695
  %v1600 = vpow.pop %v1599
  %v1601 = vsel %vm410, %v1598, 0.0
  %1602 = vadd.xlane.f32.xlu0 %v1601
  %v1603 = vpop.xlane.xlu0 %1602
  %v1604 = vsel %vm410, %v1600, 0.0
  %1605 = vadd.xlane.f32.xlu0 %v1604
  %v1606 = vpop.xlane.xlu0 %1605
  %v1607 = vrcp.pop %v1603
  %v1608 = vrcp.pop %v1606
  %v1609 = vmul.f32 %v1598, %v1607
  %v1610 = vmul.f32 %v1600, %v1608
  %s1611 = scalar_lea.vmem %s2, 640
  %v1612 = vld [vmem:[%s1611] sm:$0xff]
  %v1613 = vld [vmem:[%s1611 + $0x8] sm:$0xff]
  %v1614 = vld [vmem:[%s1611 + $0x10] sm:$0xff]
  %v1615 = vld [vmem:[%s1611 + $0x18] sm:$0xff]
  %v1616 = vld [vmem:[%s3 + $0x11] sm:$0x1]
  %v1617 = vlaneseq
  %v1618 = vshrl.u32 %v1617, 7
  %v1619 = vsub.s32 0, %v1618
  %v1620 = vrot.slane %v1616, %v1619
  %1621 = vmatprep.subr.mxu0 0.0
  %1622 = vmatpush1.msra.mxu0 %v1612
  %1623 = vmatprep.subr.mxu0 0.0
  %1624 = vmatpush1.msra.mxu0 %v1613
  %1625 = vmatprep.subr.mxu0 0.0
  %1626 = vmatpush1.msra.mxu0 %v1614
  %1627 = vmatprep.subr.mxu0 0.0
  %1628 = vmatpush1.msra.mxu0 %v1615
  %1629 = vmatprep.subr.mxu0 0.0
  %1630 = vmatpush1.msra.mxu0 0.0
  %1631 = vmatprep.subr.mxu0 0.0
  %1632 = vmatpush1.msra.mxu0 0.0
  %1633 = vmatprep.subr.mxu0 0.0
  %1634 = vmatpush1.msra.mxu0 0.0
  %1635 = vmatprep.subr.mxu0 0.0
  %1636 = vmatpush1.msra.mxu0 0.0
  %1637 = vmatprep.subr.mxu0 0.0
  %1638 = vmatpush1.msra.mxu0 0.0
  %1639 = vmatprep.subr.mxu0 0.0
  %1640 = vmatpush1.msra.mxu0 0.0
  %1641 = vmatprep.subr.mxu0 0.0
  %1642 = vmatpush1.msra.mxu0 0.0
  %1643 = vmatprep.subr.mxu0 0.0
  %1644 = vmatpush1.msra.mxu0 0.0
  %1645 = vmatprep.subr.mxu0 0.0
  %1646 = vmatpush1.msra.mxu0 0.0
  %1647 = vmatprep.subr.mxu0 0.0
  %1648 = vmatpush1.msra.mxu0 0.0
  %1649 = vmatprep.subr.mxu0 0.0
  %1650 = vmatpush1.msra.mxu0 0.0
  %1651 = vmatprep.subr.mxu0 0.0
  %1652 = vmatpush1.msra.mxu0 0.0
  %1653 = vmatprep.subr.mxu0 0.0
  %1654 = vmatpush1.msra.mxu0 0.0
  %1655 = vmatprep.subr.mxu0 0.0
  %1656 = vmatpush1.msra.mxu0 0.0
  %1657 = vmatprep.subr.mxu0 0.0
  %1658 = vmatpush1.msra.mxu0 0.0
  %1659 = vmatprep.subr.mxu0 0.0
  %1660 = vmatpush1.msra.mxu0 0.0
  %1661 = vmatprep.subr.mxu0 0.0
  %1662 = vmatpush1.msra.mxu0 0.0
  %1663 = vmatprep.subr.mxu0 0.0
  %1664 = vmatpush1.msra.mxu0 0.0
  %1665 = vmatprep.subr.mxu0 0.0
  %1666 = vmatpush1.msra.mxu0 0.0
  %1667 = vmatprep.subr.mxu0 0.0
  %1668 = vmatpush1.msra.mxu0 0.0
  %1669 = vmatprep.subr.mxu0 0.0
  %1670 = vmatpush1.msra.mxu0 0.0
  %1671 = vmatprep.subr.mxu0 0.0
  %1672 = vmatpush1.msra.mxu0 0.0
  %1673 = vmatprep.subr.mxu0 0.0
  %1674 = vmatpush1.msra.mxu0 0.0
  %1675 = vmatprep.subr.mxu0 0.0
  %1676 = vmatpush1.msra.mxu0 0.0
  %1677 = vmatprep.subr.mxu0 0.0
  %1678 = vmatpush1.msra.mxu0 0.0
  %1679 = vmatprep.subr.mxu0 0.0
  %1680 = vmatpush1.msra.mxu0 0.0
  %1681 = vmatprep.subr.mxu0 0.0
  %1682 = vmatpush1.msra.mxu0 0.0
  %1683 = vmatprep.subr.mxu0 0.0
  %1684 = vmatpush1.msra.mxu0 0.0
  %1685 = vmatprep.mubr.f32.mxu0 0.0
  %1686 = vmatmul.mubr.f32.gmra.mrb[0].mxu0 %v1252
  %v1687 = vpop.f32.mrb[0].mxu0
  %v1688 = vadd.f32 %v1620, %v1687
  %v1689 = vpop.f32.mrb[0].mxu0
  %1690 = vmatprep.mubr.f32.mxu0 0.0
  %1691 = vmatmul.mubr.f32.gmra.mrb[0].mxu0 %v1255
  %v1692 = vpop.f32.mrb[0].mxu0
  %v1693 = vadd.f32 %v1620, %v1692
  %v1694 = vpop.f32.mrb[0].mxu0
  %1695 = vdwg.mxu0
  %s1696 = scalar_lea.vmem %s2, 768
  %v1697 = vld [vmem:[%s1696] sm:$0xff]
  %v1698 = vld [vmem:[%s1696 + $0x8] sm:$0xff]
  %v1699 = vld [vmem:[%s1696 + $0x10] sm:$0xff]
  %v1700 = vld [vmem:[%s1696 + $0x18] sm:$0xff]
  %v1701 = vld [vmem:[%s3 + $0x13] sm:$0x1]
  %v1702 = vlaneseq
  %v1703 = vshrl.u32 %v1702, 7
  %v1704 = vsub.s32 0, %v1703
  %v1705 = vrot.slane %v1701, %v1704
  %1706 = vmatprep.subr.mxu0 0.0
  %1707 = vmatpush1.msra.mxu0 %v1697
  %1708 = vmatprep.subr.mxu0 0.0
  %1709 = vmatpush1.msra.mxu0 %v1698
  %1710 = vmatprep.subr.mxu0 0.0
  %1711 = vmatpush1.msra.mxu0 %v1699
  %1712 = vmatprep.subr.mxu0 0.0
  %1713 = vmatpush1.msra.mxu0 %v1700
  %1714 = vmatprep.subr.mxu0 0.0
  %1715 = vmatpush1.msra.mxu0 0.0
  %1716 = vmatprep.subr.mxu0 0.0
  %1717 = vmatpush1.msra.mxu0 0.0
  %1718 = vmatprep.subr.mxu0 0.0
  %1719 = vmatpush1.msra.mxu0 0.0
  %1720 = vmatprep.subr.mxu0 0.0
  %1721 = vmatpush1.msra.mxu0 0.0
  %1722 = vmatprep.subr.mxu0 0.0
  %1723 = vmatpush1.msra.mxu0 0.0
  %1724 = vmatprep.subr.mxu0 0.0
  %1725 = vmatpush1.msra.mxu0 0.0
  %1726 = vmatprep.subr.mxu0 0.0
  %1727 = vmatpush1.msra.mxu0 0.0
  %1728 = vmatprep.subr.mxu0 0.0
  %1729 = vmatpush1.msra.mxu0 0.0
  %1730 = vmatprep.subr.mxu0 0.0
  %1731 = vmatpush1.msra.mxu0 0.0
  %1732 = vmatprep.subr.mxu0 0.0
  %1733 = vmatpush1.msra.mxu0 0.0
  %1734 = vmatprep.subr.mxu0 0.0
  %1735 = vmatpush1.msra.mxu0 0.0
  %1736 = vmatprep.subr.mxu0 0.0
  %1737 = vmatpush1.msra.mxu0 0.0
  %1738 = vmatprep.subr.mxu0 0.0
  %1739 = vmatpush1.msra.mxu0 0.0
  %1740 = vmatprep.subr.mxu0 0.0
  %1741 = vmatpush1.msra.mxu0 0.0
  %1742 = vmatprep.subr.mxu0 0.0
  %1743 = vmatpush1.msra.mxu0 0.0
  %1744 = vmatprep.subr.mxu0 0.0
  %1745 = vmatpush1.msra.mxu0 0.0
  %1746 = vmatprep.subr.mxu0 0.0
  %1747 = vmatpush1.msra.mxu0 0.0
  %1748 = vmatprep.subr.mxu0 0.0
  %1749 = vmatpush1.msra.mxu0 0.0
  %1750 = vmatprep.subr.mxu0 0.0
  %1751 = vmatpush1.msra.mxu0 0.0
  %1752 = vmatprep.subr.mxu0 0.0
  %1753 = vmatpush1.msra.mxu0 0.0
  %1754 = vmatprep.subr.mxu0 0.0
  %1755 = vmatpush1.msra.mxu0 0.0
  %1756 = vmatprep.subr.mxu0 0.0
  %1757 = vmatpush1.msra.mxu0 0.0
  %1758 = vmatprep.subr.mxu0 0.0
  %1759 = vmatpush1.msra.mxu0 0.0
  %1760 = vmatprep.subr.mxu0 0.0
  %1761 = vmatpush1.msra.mxu0 0.0
  %1762 = vmatprep.subr.mxu0 0.0
  %1763 = vmatpush1.msra.mxu0 0.0
  %1764 = vmatprep.subr.mxu0 0.0
  %1765 = vmatpush1.msra.mxu0 0.0
  %1766 = vmatprep.subr.mxu0 0.0
  %1767 = vmatpush1.msra.mxu0 0.0
  %1768 = vmatprep.subr.mxu0 0.0
  %1769 = vmatpush1.msra.mxu0 0.0
  %1770 = vmatprep.mubr.f32.mxu0 0.0
  %1771 = vmatmul.mubr.f32.gmra.mrb[0].mxu0 %v1252
  %v1772 = vpop.f32.mrb[0].mxu0
  %v1773 = vadd.f32 %v1705, %v1772
  %v1774 = vpop.f32.mrb[0].mxu0
  %1775 = vmatprep.mubr.f32.mxu0 0.0
  %1776 = vmatmul.mubr.f32.gmra.mrb[0].mxu0 %v1255
  %v1777 = vpop.f32.mrb[0].mxu0
  %v1778 = vadd.f32 %v1705, %v1777
  %v1779 = vpop.f32.mrb[0].mxu0
  %1780 = vdwg.mxu0
  %v1782 = vsel %vm21, %v1688, 0
  %v1785 = vsel %vm21, %v1693, 0
  %1787 = vmatprep.subr.mxu0 0.0
  %1788 = vmatpush1.xpose.msra.mxu0 %v1782
  %1789 = vmatprep.subr.mxu0 0.0
  %1790 = vmatpush1.xpose.msra.mxu0 %v1785
  %1791 = vmatprep.subr.mxu0 0.0
  %1792 = vmatpush1.xpose.msra.mxu0 0.0
  %1793 = vmatprep.subr.mxu0 0.0
  %1794 = vmatpush1.xpose.msra.mxu0 0.0
  %1795 = vmatprep.subr.mxu0 0.0
  %1796 = vmatpush1.xpose.msra.mxu0 0.0
  %1797 = vmatprep.subr.mxu0 0.0
  %1798 = vmatpush1.xpose.msra.mxu0 0.0
  %1799 = vmatprep.subr.mxu0 0.0
  %1800 = vmatpush1.xpose.msra.mxu0 0.0
  %1801 = vmatprep.subr.mxu0 0.0
  %1802 = vmatpush1.xpose.msra.mxu0 0.0
  %1803 = vmatprep.subr.mxu0 0.0
  %1804 = vmatpush1.xpose.msra.mxu0 0.0
  %1805 = vmatprep.subr.mxu0 0.0
  %1806 = vmatpush1.xpose.msra.mxu0 0.0
  %1807 = vmatprep.subr.mxu0 0.0
  %1808 = vmatpush1.xpose.msra.mxu0 0.0
  %1809 = vmatprep.subr.mxu0 0.0
  %1810 = vmatpush1.xpose.msra.mxu0 0.0
  %1811 = vmatprep.subr.mxu0 0.0
  %1812 = vmatpush1.xpose.msra.mxu0 0.0
  %1813 = vmatprep.subr.mxu0 0.0
  %1814 = vmatpush1.xpose.msra.mxu0 0.0
  %1815 = vmatprep.subr.mxu0 0.0
  %1816 = vmatpush1.xpose.msra.mxu0 0.0
  %1817 = vmatprep.subr.mxu0 0.0
  %1818 = vmatpush1.xpose.msra.mxu0 0.0
  %1819 = vmatprep.subr.mxu0 0.0
  %1820 = vmatpush1.xpose.msra.mxu0 0.0
  %1821 = vmatprep.subr.mxu0 0.0
  %1822 = vmatpush1.xpose.msra.mxu0 0.0
  %1823 = vmatprep.subr.mxu0 0.0
  %1824 = vmatpush1.xpose.msra.mxu0 0.0
  %1825 = vmatprep.subr.mxu0 0.0
  %1826 = vmatpush1.xpose.msra.mxu0 0.0
  %1827 = vmatprep.subr.mxu0 0.0
  %1828 = vmatpush1.xpose.msra.mxu0 0.0
  %1829 = vmatprep.subr.mxu0 0.0
  %1830 = vmatpush1.xpose.msra.mxu0 0.0
  %1831 = vmatprep.subr.mxu0 0.0
  %1832 = vmatpush1.xpose.msra.mxu0 0.0
  %1833 = vmatprep.subr.mxu0 0.0
  %1834 = vmatpush1.xpose.msra.mxu0 0.0
  %1835 = vmatprep.subr.mxu0 0.0
  %1836 = vmatpush1.xpose.msra.mxu0 0.0
  %1837 = vmatprep.subr.mxu0 0.0
  %1838 = vmatpush1.xpose.msra.mxu0 0.0
  %1839 = vmatprep.subr.mxu0 0.0
  %1840 = vmatpush1.xpose.msra.mxu0 0.0
  %1841 = vmatprep.subr.mxu0 0.0
  %1842 = vmatpush1.xpose.msra.mxu0 0.0
  %1843 = vmatprep.subr.mxu0 0.0
  %1844 = vmatpush1.xpose.msra.mxu0 0.0
  %1845 = vmatprep.subr.mxu0 0.0
  %1846 = vmatpush1.xpose.msra.mxu0 0.0
  %1847 = vmatprep.subr.mxu0 0.0
  %1848 = vmatpush1.xpose.msra.mxu0 0.0
  %1849 = vmatprep.subr.mxu0 0.0
  %1850 = vmatpush1.xpose.msra.mxu0 0.0
  %1851 = vmatprep.mubr.f32.mxu0 0.0
  %1852 = vmatmul.mubr.f32.gmra.mrb[0].mxu0 %v1503
  %v1853 = vpop.f32.mrb[0].mxu0
  %v1854 = vadd.f32 %v61, %v1853
  %v1855 = vpop.f32.mrb[0].mxu0
  %1856 = vmatprep.mubr.f32.mxu0 0.0
  %1857 = vmatmul.mubr.f32.gmra.mrb[0].mxu0 %v1506
  %v1858 = vpop.f32.mrb[0].mxu0
  %v1859 = vadd.f32 %v62, %v1858
  %v1860 = vpop.f32.mrb[0].mxu0
  %1861 = vdwg.mxu0
  %v1862 = vsel %vm410, %v1854, -inf
  %1863 = vmax.xlane.f32.xlu0 %v1862
  %v1864 = vpop.xlane.xlu0 %1863
  %v1865 = vsel %vm410, %v1859, -inf
  %1866 = vmax.xlane.f32.xlu0 %v1865
  %v1867 = vpop.xlane.xlu0 %1866
  %v1868 = vsub.f32 %v1854, %v1864
  %v1869 = vsub.f32 %v1859, %v1867
  %v1870 = vmul.f32 %v1868, 1.442695
  %v1871 = vpow.pop %v1870
  %v1872 = vmul.f32 %v1869, 1.442695
  %v1873 = vpow.pop %v1872
  %v1874 = vsel %vm410, %v1871, 0.0
  %1875 = vadd.xlane.f32.xlu0 %v1874
  %v1876 = vpop.xlane.xlu0 %1875
  %v1877 = vsel %vm410, %v1873, 0.0
  %1878 = vadd.xlane.f32.xlu0 %v1877
  %v1879 = vpop.xlane.xlu0 %1878
  %v1880 = vrcp.pop %v1876
  %v1881 = vrcp.pop %v1879
  %v1882 = vmul.f32 %v1871, %v1880
  %v1883 = vmul.f32 %v1873, %v1881
  %v1885 = vsel %vm410, %v1882, 0
  %v1888 = vsel %vm410, %v1883, 0
  %1890 = vmatprep.subr.mxu0 0.0
  %1891 = vmatpush1.msra.mxu0 %v1773
  %1892 = vmatprep.subr.mxu0 0.0
  %1893 = vmatpush1.msra.mxu0 %v1778
  %1894 = vmatprep.subr.mxu0 0.0
  %1895 = vmatpush1.msra.mxu0 0.0
  %1896 = vmatprep.subr.mxu0 0.0
  %1897 = vmatpush1.msra.mxu0 0.0
  %1898 = vmatprep.subr.mxu0 0.0
  %1899 = vmatpush1.msra.mxu0 0.0
  %1900 = vmatprep.subr.mxu0 0.0
  %1901 = vmatpush1.msra.mxu0 0.0
  %1902 = vmatprep.subr.mxu0 0.0
  %1903 = vmatpush1.msra.mxu0 0.0
  %1904 = vmatprep.subr.mxu0 0.0
  %1905 = vmatpush1.msra.mxu0 0.0
  %1906 = vmatprep.subr.mxu0 0.0
  %1907 = vmatpush1.msra.mxu0 0.0
  %1908 = vmatprep.subr.mxu0 0.0
  %1909 = vmatpush1.msra.mxu0 0.0
  %1910 = vmatprep.subr.mxu0 0.0
  %1911 = vmatpush1.msra.mxu0 0.0
  %1912 = vmatprep.subr.mxu0 0.0
  %1913 = vmatpush1.msra.mxu0 0.0
  %1914 = vmatprep.subr.mxu0 0.0
  %1915 = vmatpush1.msra.mxu0 0.0
  %1916 = vmatprep.subr.mxu0 0.0
  %1917 = vmatpush1.msra.mxu0 0.0
  %1918 = vmatprep.subr.mxu0 0.0
  %1919 = vmatpush1.msra.mxu0 0.0
  %1920 = vmatprep.subr.mxu0 0.0
  %1921 = vmatpush1.msra.mxu0 0.0
  %1922 = vmatprep.subr.mxu0 0.0
  %1923 = vmatpush1.msra.mxu0 0.0
  %1924 = vmatprep.subr.mxu0 0.0
  %1925 = vmatpush1.msra.mxu0 0.0
  %1926 = vmatprep.subr.mxu0 0.0
  %1927 = vmatpush1.msra.mxu0 0.0
  %1928 = vmatprep.subr.mxu0 0.0
  %1929 = vmatpush1.msra.mxu0 0.0
  %1930 = vmatprep.subr.mxu0 0.0
  %1931 = vmatpush1.msra.mxu0 0.0
  %1932 = vmatprep.subr.mxu0 0.0
  %1933 = vmatpush1.msra.mxu0 0.0
  %1934 = vmatprep.subr.mxu0 0.0
  %1935 = vmatpush1.msra.mxu0 0.0
  %1936 = vmatprep.subr.mxu0 0.0
  %1937 = vmatpush1.msra.mxu0 0.0
  %1938 = vmatprep.subr.mxu0 0.0
  %1939 = vmatpush1.msra.mxu0 0.0
  %1940 = vmatprep.subr.mxu0 0.0
  %1941 = vmatpush1.msra.mxu0 0.0
  %1942 = vmatprep.subr.mxu0 0.0
  %1943 = vmatpush1.msra.mxu0 0.0
  %1944 = vmatprep.subr.mxu0 0.0
  %1945 = vmatpush1.msra.mxu0 0.0
  %1946 = vmatprep.subr.mxu0 0.0
  %1947 = vmatpush1.msra.mxu0 0.0
  %1948 = vmatprep.subr.mxu0 0.0
  %1949 = vmatpush1.msra.mxu0 0.0
  %1950 = vmatprep.subr.mxu0 0.0
  %1951 = vmatpush1.msra.mxu0 0.0
  %1952 = vmatprep.subr.mxu0 0.0
  %1953 = vmatpush1.msra.mxu0 0.0
  %1954 = vmatprep.mubr.f32.mxu0 0.0
  %1955 = vmatmul.mubr.f32.gmra.mrb[0].mxu0 %v1885
  %v1956 = vpop.f32.mrb[0].mxu0
  %v1957 = vadd.f32 0.0, %v1956
  %v1958 = vpop.f32.mrb[0].mxu0
  %1959 = vmatprep.mubr.f32.mxu0 0.0
  %1960 = vmatmul.mubr.f32.gmra.mrb[0].mxu0 %v1888
  %v1961 = vpop.f32.mrb[0].mxu0
  %v1962 = vadd.f32 0.0, %v1961
  %v1963 = vpop.f32.mrb[0].mxu0
  %1964 = vdwg.mxu0
  %v1966 = vsel %vm410, %v1609, 0
  %v1969 = vsel %vm410, %v1610, 0
  %1971 = vmatprep.subr.mxu0 0.0
  %1972 = vmatpush1.msra.mxu0 %v1494
  %1973 = vmatprep.subr.mxu0 0.0
  %1974 = vmatpush1.msra.mxu0 %v1499
  %1975 = vmatprep.subr.mxu0 0.0
  %1976 = vmatpush1.msra.mxu0 0.0
  %1977 = vmatprep.subr.mxu0 0.0
  %1978 = vmatpush1.msra.mxu0 0.0
  %1979 = vmatprep.subr.mxu0 0.0
  %1980 = vmatpush1.msra.mxu0 0.0
  %1981 = vmatprep.subr.mxu0 0.0
  %1982 = vmatpush1.msra.mxu0 0.0
  %1983 = vmatprep.subr.mxu0 0.0
  %1984 = vmatpush1.msra.mxu0 0.0
  %1985 = vmatprep.subr.mxu0 0.0
  %1986 = vmatpush1.msra.mxu0 0.0
  %1987 = vmatprep.subr.mxu0 0.0
  %1988 = vmatpush1.msra.mxu0 0.0
  %1989 = vmatprep.subr.mxu0 0.0
  %1990 = vmatpush1.msra.mxu0 0.0
  %1991 = vmatprep.subr.mxu0 0.0
  %1992 = vmatpush1.msra.mxu0 0.0
  %1993 = vmatprep.subr.mxu0 0.0
  %1994 = vmatpush1.msra.mxu0 0.0
  %1995 = vmatprep.subr.mxu0 0.0
  %1996 = vmatpush1.msra.mxu0 0.0
  %1997 = vmatprep.subr.mxu0 0.0
  %1998 = vmatpush1.msra.mxu0 0.0
  %1999 = vmatprep.subr.mxu0 0.0
  %2000 = vmatpush1.msra.mxu0 0.0
  %2001 = vmatprep.subr.mxu0 0.0
  %2002 = vmatpush1.msra.mxu0 0.0
  %2003 = vmatprep.subr.mxu0 0.0
  %2004 = vmatpush1.msra.mxu0 0.0
  %2005 = vmatprep.subr.mxu0 0.0
  %2006 = vmatpush1.msra.mxu0 0.0
  %2007 = vmatprep.subr.mxu0 0.0
  %2008 = vmatpush1.msra.mxu0 0.0
  %2009 = vmatprep.subr.mxu0 0.0
  %2010 = vmatpush1.msra.mxu0 0.0
  %2011 = vmatprep.subr.mxu0 0.0
  %2012 = vmatpush1.msra.mxu0 0.0
  %2013 = vmatprep.subr.mxu0 0.0
  %2014 = vmatpush1.msra.mxu0 0.0
  %2015 = vmatprep.subr.mxu0 0.0
  %2016 = vmatpush1.msra.mxu0 0.0
  %2017 = vmatprep.subr.mxu0 0.0
  %2018 = vmatpush1.msra.mxu0 0.0
  %2019 = vmatprep.subr.mxu0 0.0
  %2020 = vmatpush1.msra.mxu0 0.0
  %2021 = vmatprep.subr.mxu0 0.0
  %2022 = vmatpush1.msra.mxu0 0.0
  %2023 = vmatprep.subr.mxu0 0.0
  %2024 = vmatpush1.msra.mxu0 0.0
  %2025 = vmatprep.subr.mxu0 0.0
  %2026 = vmatpush1.msra.mxu0 0.0
  %2027 = vmatprep.subr.mxu0 0.0
  %2028 = vmatpush1.msra.mxu0 0.0
  %2029 = vmatprep.subr.mxu0 0.0
  %2030 = vmatpush1.msra.mxu0 0.0
  %2031 = vmatprep.subr.mxu0 0.0
  %2032 = vmatpush1.msra.mxu0 0.0
  %2033 = vmatprep.subr.mxu0 0.0
  %2034 = vmatpush1.msra.mxu0 0.0
  %2035 = vmatprep.mubr.f32.mxu0 0.0
  %2036 = vmatmul.mubr.f32.gmra.mrb[0].mxu0 %v1966
  %v2037 = vpop.f32.mrb[0].mxu0
  %v2038 = vadd.f32 %v1957, %v2037
  %v2039 = vpop.f32.mrb[0].mxu0
  %2040 = vmatprep.mubr.f32.mxu0 0.0
  %2041 = vmatmul.mubr.f32.gmra.mrb[0].mxu0 %v1969
  %v2042 = vpop.f32.mrb[0].mxu0
  %v2043 = vadd.f32 %v1962, %v2042
  %v2044 = vpop.f32.mrb[0].mxu0
  %2045 = vdwg.mxu0
  %s2046 = scalar_lea.vmem %s2, 832
  %v2047 = vld [vmem:[%s2046] sm:$0xff]
  %v2048 = vld [vmem:[%s2046 + $0x8] sm:$0xff]
  %v2049 = vld [vmem:[%s2046 + $0x10] sm:$0xff]
  %v2050 = vld [vmem:[%s2046 + $0x18] sm:$0xff]
  %v2051 = vld [vmem:[%s3 + $0x14] sm:$0x1]
  %v2052 = vlaneseq
  %v2053 = vshrl.u32 %v2052, 7
  %v2054 = vsub.s32 0, %v2053
  %v2055 = vrot.slane %v2051, %v2054
  %v2057 = vsel %vm21, %v2038, 0
  %v2060 = vsel %vm21, %v2043, 0
  %2062 = vmatprep.subr.mxu0 0.0
  %2063 = vmatpush1.msra.mxu0 %v2047
  %2064 = vmatprep.subr.mxu0 0.0
  %2065 = vmatpush1.msra.mxu0 %v2048
  %2066 = vmatprep.subr.mxu0 0.0
  %2067 = vmatpush1.msra.mxu0 %v2049
  %2068 = vmatprep.subr.mxu0 0.0
  %2069 = vmatpush1.msra.mxu0 %v2050
  %2070 = vmatprep.subr.mxu0 0.0
  %2071 = vmatpush1.msra.mxu0 0.0
  %2072 = vmatprep.subr.mxu0 0.0
  %2073 = vmatpush1.msra.mxu0 0.0
  %2074 = vmatprep.subr.mxu0 0.0
  %2075 = vmatpush1.msra.mxu0 0.0
  %2076 = vmatprep.subr.mxu0 0.0
  %2077 = vmatpush1.msra.mxu0 0.0
  %2078 = vmatprep.subr.mxu0 0.0
  %2079 = vmatpush1.msra.mxu0 0.0
  %2080 = vmatprep.subr.mxu0 0.0
  %2081 = vmatpush1.msra.mxu0 0.0
  %2082 = vmatprep.subr.mxu0 0.0
  %2083 = vmatpush1.msra.mxu0 0.0
  %2084 = vmatprep.subr.mxu0 0.0
  %2085 = vmatpush1.msra.mxu0 0.0
  %2086 = vmatprep.subr.mxu0 0.0
  %2087 = vmatpush1.msra.mxu0 0.0
  %2088 = vmatprep.subr.mxu0 0.0
  %2089 = vmatpush1.msra.mxu0 0.0
  %2090 = vmatprep.subr.mxu0 0.0
  %2091 = vmatpush1.msra.mxu0 0.0
  %2092 = vmatprep.subr.mxu0 0.0
  %2093 = vmatpush1.msra.mxu0 0.0
  %2094 = vmatprep.subr.mxu0 0.0
  %2095 = vmatpush1.msra.mxu0 0.0
  %2096 = vmatprep.subr.mxu0 0.0
  %2097 = vmatpush1.msra.mxu0 0.0
  %2098 = vmatprep.subr.mxu0 0.0
  %2099 = vmatpush1.msra.mxu0 0.0
  %2100 = vmatprep.subr.mxu0 0.0
  %2101 = vmatpush1.msra.mxu0 0.0
  %2102 = vmatprep.subr.mxu0 0.0
  %2103 = vmatpush1.msra.mxu0 0.0
  %2104 = vmatprep.subr.mxu0 0.0
  %2105 = vmatpush1.msra.mxu0 0.0
  %2106 = vmatprep.subr.mxu0 0.0
  %2107 = vmatpush1.msra.mxu0 0.0
  %2108 = vmatprep.subr.mxu0 0.0
  %2109 = vmatpush1.msra.mxu0 0.0
  %2110 = vmatprep.subr.mxu0 0.0
  %2111 = vmatpush1.msra.mxu0 0.0
  %2112 = vmatprep.subr.mxu0 0.0
  %2113 = vmatpush1.msra.mxu0 0.0
  %2114 = vmatprep.subr.mxu0 0.0
  %2115 = vmatpush1.msra.mxu0 0.0
  %2116 = vmatprep.subr.mxu0 0.0
  %2117 = vmatpush1.msra.mxu0 0.0
  %2118 = vmatprep.subr.mxu0 0.0
  %2119 = vmatpush1.msra.mxu0 0.0
  %2120 = vmatprep.subr.mxu0 0.0
  %2121 = vmatpush1.msra.mxu0 0.0
  %2122 = vmatprep.subr.mxu0 0.0
  %2123 = vmatpush1.msra.mxu0 0.0
  %2124 = vmatprep.subr.mxu0 0.0
  %2125 = vmatpush1.msra.mxu0 0.0
  %2126 = vmatprep.mubr.f32.mxu0 0.0
  %2127 = vmatmul.mubr.f32.gmra.mrb[0].mxu0 %v2057
  %v2128 = vpop.f32.mrb[0].mxu0
  %v2129 = vadd.f32 %v2055, %v2128
  %v2130 = vpop.f32.mrb[0].mxu0
  %2131 = vmatprep.mubr.f32.mxu0 0.0
  %2132 = vmatmul.mubr.f32.gmra.mrb[0].mxu0 %v2060
  %v2133 = vpop.f32.mrb[0].mxu0
  %v2134 = vadd.f32 %v2055, %v2133
  %v2135 = vpop.f32.mrb[0].mxu0
  %2136 = vdwg.mxu0
  %v2137 = vadd.f32 %v1239, %v2129
  %v2138 = vadd.f32 %v1240, %v2134
  %v2139 = vld [vmem:[%s3 + $0x17] sm:$0x1]
  %v2140 = vld [vmem:[%s3 + $0x18] sm:$0x1]
  %v2141 = vsel %vm21, %v2137, 0.0
  %2142 = vadd.xlane.f32.xlu0 %v2141
  %v2143 = vpop.xlane.xlu0 %2142
  %v2144 = vsel %vm21, %v2138, 0.0
  %2145 = vadd.xlane.f32.xlu0 %v2144
  %v2146 = vpop.xlane.xlu0 %2145
  %v2147 = vmul.f32 %v2143, %v28
  %v2148 = vmul.f32 %v2146, %v28
  %v2149 = vsub.f32 %v2137, %v2147
  %v2150 = vsub.f32 %v2138, %v2148
  %v2151 = vmul.f32 %v2149, %v2149
  %v2152 = vmul.f32 %v2150, %v2150
  %v2153 = vsel %vm21, %v2151, 0.0
  %2154 = vadd.xlane.f32.xlu0 %v2153
  %v2155 = vpop.xlane.xlu0 %2154
  %v2156 = vsel %vm21, %v2152, 0.0
  %2157 = vadd.xlane.f32.xlu0 %v2156
  %v2158 = vpop.xlane.xlu0 %2157
  %v2159 = vmul.f32 %v2155, %v28
  %v2160 = vmul.f32 %v2158, %v28
  %v2161 = vadd.f32 %v2159, 1e-12
  %v2162 = vadd.f32 %v2160, 1e-12
  %v2163 = vrsqrt.pop %v2161
  %v2164 = vrsqrt.pop %v2162
  %v2165 = vmul.f32 %v2149, %v2163
  %v2166 = vmul.f32 %v2150, %v2164
  %v2167 = vlaneseq
  %v2168 = vshrl.u32 %v2167, 7
  %v2169 = vsub.s32 0, %v2168
  %v2170 = vrot.slane %v2139, %v2169
  %v2171 = vmul.f32 %v2165, %v2170
  %v2172 = vmul.f32 %v2166, %v2170
  %v2173 = vlaneseq
  %v2174 = vshrl.u32 %v2173, 7
  %v2175 = vsub.s32 0, %v2174
  %v2176 = vrot.slane %v2140, %v2175
  %v2177 = vadd.f32 %v2171, %v2176
  %v2178 = vadd.f32 %v2172, %v2176
  %s2179 = scalar_lea.vmem %s2, 896
  %v2180 = vld [vmem:[%s2179] sm:$0xff]
  %v2181 = vld [vmem:[%s2179 + $0x8] sm:$0xff]
  %v2182 = vld [vmem:[%s2179 + $0x10] sm:$0xff]
  %v2183 = vld [vmem:[%s2179 + $0x18] sm:$0xff]
  %v2184 = vld [vmem:[%s3 + $0x15] sm:$0x1]
  %v2185 = vlaneseq
  %v2186 = vshrl.u32 %v2185, 7
  %v2187 = vsub.s32 0, %v2186
  %v2188 = vrot.slane %v2184, %v2187
  %v2190 = vsel %vm21, %v2177, 0
  %v2193 = vsel %vm21, %v2178, 0
  %2195 = vmatprep.subr.mxu0 0.0
  %2196 = vmatpush1.msra.mxu0 %v2180
  %2197 = vmatprep.subr.mxu0 0.0
  %2198 = vmatpush1.msra.mxu0 %v2181
  %2199 = vmatprep.subr.mxu0 0.0
  %2200 = vmatpush1.msra.mxu0 %v2182
  %2201 = vmatprep.subr.mxu0 0.0
  %2202 = vmatpush1.msra.mxu0 %v2183
  %2203 = vmatprep.subr.mxu0 0.0
  %2204 = vmatpush1.msra.mxu0 0.0
  %2205 = vmatprep.subr.mxu0 0.0
  %2206 = vmatpush1.msra.mxu0 0.0
  %2207 = vmatprep.subr.mxu0 0.0
  %2208 = vmatpush1.msra.mxu0 0.0
  %2209 = vmatprep.subr.mxu0 0.0
  %2210 = vmatpush1.msra.mxu0 0.0
  %2211 = vmatprep.subr.mxu0 0.0
  %2212 = vmatpush1.msra.mxu0 0.0
  %2213 = vmatprep.subr.mxu0 0.0
  %2214 = vmatpush1.msra.mxu0 0.0
  %2215 = vmatprep.subr.mxu0 0.0
  %2216 = vmatpush1.msra.mxu0 0.0
  %2217 = vmatprep.subr.mxu0 0.0
  %2218 = vmatpush1.msra.mxu0 0.0
  %2219 = vmatprep.subr.mxu0 0.0
  %2220 = vmatpush1.msra.mxu0 0.0
  %2221 = vmatprep.subr.mxu0 0.0
  %2222 = vmatpush1.msra.mxu0 0.0
  %2223 = vmatprep.subr.mxu0 0.0
  %2224 = vmatpush1.msra.mxu0 0.0
  %2225 = vmatprep.subr.mxu0 0.0
  %2226 = vmatpush1.msra.mxu0 0.0
  %2227 = vmatprep.subr.mxu0 0.0
  %2228 = vmatpush1.msra.mxu0 0.0
  %2229 = vmatprep.subr.mxu0 0.0
  %2230 = vmatpush1.msra.mxu0 0.0
  %2231 = vmatprep.subr.mxu0 0.0
  %2232 = vmatpush1.msra.mxu0 0.0
  %2233 = vmatprep.subr.mxu0 0.0
  %2234 = vmatpush1.msra.mxu0 0.0
  %2235 = vmatprep.subr.mxu0 0.0
  %2236 = vmatpush1.msra.mxu0 0.0
  %2237 = vmatprep.subr.mxu0 0.0
  %2238 = vmatpush1.msra.mxu0 0.0
  %2239 = vmatprep.subr.mxu0 0.0
  %2240 = vmatpush1.msra.mxu0 0.0
  %2241 = vmatprep.subr.mxu0 0.0
  %2242 = vmatpush1.msra.mxu0 0.0
  %2243 = vmatprep.subr.mxu0 0.0
  %2244 = vmatpush1.msra.mxu0 0.0
  %2245 = vmatprep.subr.mxu0 0.0
  %2246 = vmatpush1.msra.mxu0 0.0
  %2247 = vmatprep.subr.mxu0 0.0
  %2248 = vmatpush1.msra.mxu0 0.0
  %2249 = vmatprep.subr.mxu0 0.0
  %2250 = vmatpush1.msra.mxu0 0.0
  %2251 = vmatprep.subr.mxu0 0.0
  %2252 = vmatpush1.msra.mxu0 0.0
  %2253 = vmatprep.subr.mxu0 0.0
  %2254 = vmatpush1.msra.mxu0 0.0
  %2255 = vmatprep.subr.mxu0 0.0
  %2256 = vmatpush1.msra.mxu0 0.0
  %2257 = vmatprep.subr.mxu0 0.0
  %2258 = vmatpush1.msra.mxu0 0.0
  %2259 = vmatprep.mubr.f32.mxu0 0.0
  %2260 = vmatmul.mubr.f32.gmra.mrb[0].mxu0 %v2190
  %v2261 = vpop.f32.mrb[0].mxu0
  %v2262 = vadd.f32 %v2188, %v2261
  %v2263 = vpop.f32.mrb[0].mxu0
  %2264 = vmatprep.mubr.f32.mxu0 0.0
  %2265 = vmatmul.mubr.f32.gmra.mrb[0].mxu0 %v2193
  %v2266 = vpop.f32.mrb[0].mxu0
  %v2267 = vadd.f32 %v2188, %v2266
  %v2268 = vpop.f32.mrb[0].mxu0
  %2269 = vdwg.mxu0
  %v2270 = vmul.f32 %v2262, 0.5
  %v2271 = vmul.f32 %v2267, 0.5
  %v2272 = vmul.f32 %v2262, %v1094
  %v2273 = vmul.f32 %v2267, %v1094
  %v2274 = verf.f32.pop %v2272
  %v2275 = verf.f32.pop %v2273
  %v2276 = vadd.f32 %v2274, 1.0
  %v2277 = vadd.f32 %v2275, 1.0
  %v2278 = vmul.f32 %v2270, %v2276
  %v2279 = vmul.f32 %v2271, %v2277
  %s2280 = scalar_lea.vmem %s2, 960
  %v2281 = vld [vmem:[%s2280] sm:$0xff]
  %v2282 = vld [vmem:[%s2280 + $0x8] sm:$0xff]
  %v2283 = vld [vmem:[%s2280 + $0x10] sm:$0xff]
  %v2284 = vld [vmem:[%s2280 + $0x18] sm:$0xff]
  %v2285 = vld [vmem:[%s2280 + $0x20] sm:$0xff]
  %v2286 = vld [vmem:[%s2280 + $0x28] sm:$0xff]
  %v2287 = vld [vmem:[%s2280 + $0x30] sm:$0xff]
  %v2288 = vld [vmem:[%s2280 + $0x38] sm:$0xff]
  %v2289 = vld [vmem:[%s3 + $0x16] sm:$0x1]
  %v2290 = vlaneseq
  %v2291 = vshrl.u32 %v2290, 7
  %v2292 = vsub.s32 0, %v2291
  %v2293 = vrot.slane %v2289, %v2292
  %v2295 = vsel %vm1117, %v2278, 0
  %v2298 = vsel %vm1117, %v2279, 0
  %2300 = vmatprep.subr.mxu0 0.0
  %2301 = vmatpush1.msra.mxu0 %v2281
  %2302 = vmatprep.subr.mxu0 0.0
  %2303 = vmatpush1.msra.mxu0 %v2282
  %2304 = vmatprep.subr.mxu0 0.0
  %2305 = vmatpush1.msra.mxu0 %v2283
  %2306 = vmatprep.subr.mxu0 0.0
  %2307 = vmatpush1.msra.mxu0 %v2284
  %2308 = vmatprep.subr.mxu0 0.0
  %2309 = vmatpush1.msra.mxu0 %v2285
  %2310 = vmatprep.subr.mxu0 0.0
  %2311 = vmatpush1.msra.mxu0 %v2286
  %2312 = vmatprep.subr.mxu0 0.0
  %2313 = vmatpush1.msra.mxu0 %v2287
  %2314 = vmatprep.subr.mxu0 0.0
  %2315 = vmatpush1.msra.mxu0 %v2288
  %2316 = vmatprep.subr.mxu0 0.0
  %2317 = vmatpush1.msra.mxu0 0.0
  %2318 = vmatprep.subr.mxu0 0.0
  %2319 = vmatpush1.msra.mxu0 0.0
  %2320 = vmatprep.subr.mxu0 0.0
  %2321 = vmatpush1.msra.mxu0 0.0
  %2322 = vmatprep.subr.mxu0 0.0
  %2323 = vmatpush1.msra.mxu0 0.0
  %2324 = vmatprep.subr.mxu0 0.0
  %2325 = vmatpush1.msra.mxu0 0.0
  %2326 = vmatprep.subr.mxu0 0.0
  %2327 = vmatpush1.msra.mxu0 0.0
  %2328 = vmatprep.subr.mxu0 0.0
  %2329 = vmatpush1.msra.mxu0 0.0
  %2330 = vmatprep.subr.mxu0 0.0
  %2331 = vmatpush1.msra.mxu0 0.0
  %2332 = vmatprep.subr.mxu0 0.0
  %2333 = vmatpush1.msra.mxu0 0.0
  %2334 = vmatprep.subr.mxu0 0.0
  %2335 = vmatpush1.msra.mxu0 0.0
  %2336 = vmatprep.subr.mxu0 0.0
  %2337 = vmatpush1.msra.mxu0 0.0
  %2338 = vmatprep.subr.mxu0 0.0
  %2339 = vmatpush1.msra.mxu0 0.0
  %2340 = vmatprep.subr.mxu0 0.0
  %2341 = vmatpush1.msra.mxu0 0.0
  %2342 = vmatprep.subr.mxu0 0.0
  %2343 = vmatpush1.msra.mxu0 0.0
  %2344 = vmatprep.subr.mxu0 0.0
  %2345 = vmatpush1.msra.mxu0 0.0
  %2346 = vmatprep.subr.mxu0 0.0
  %2347 = vmatpush1.msra.mxu0 0.0
  %2348 = vmatprep.subr.mxu0 0.0
  %2349 = vmatpush1.msra.mxu0 0.0
  %2350 = vmatprep.subr.mxu0 0.0
  %2351 = vmatpush1.msra.mxu0 0.0
  %2352 = vmatprep.subr.mxu0 0.0
  %2353 = vmatpush1.msra.mxu0 0.0
  %2354 = vmatprep.subr.mxu0 0.0
  %2355 = vmatpush1.msra.mxu0 0.0
  %2356 = vmatprep.subr.mxu0 0.0
  %2357 = vmatpush1.msra.mxu0 0.0
  %2358 = vmatprep.subr.mxu0 0.0
  %2359 = vmatpush1.msra.mxu0 0.0
  %2360 = vmatprep.subr.mxu0 0.0
  %2361 = vmatpush1.msra.mxu0 0.0
  %2362 = vmatprep.subr.mxu0 0.0
  %2363 = vmatpush1.msra.mxu0 0.0
  %2364 = vmatprep.mubr.f32.mxu0 0.0
  %2365 = vmatmul.mubr.f32.gmra.mrb[0].mxu0 %v2295
  %v2366 = vpop.f32.mrb[0].mxu0
  %v2367 = vadd.f32 %v2293, %v2366
  %v2368 = vpop.f32.mrb[0].mxu0
  %2369 = vmatprep.mubr.f32.mxu0 0.0
  %2370 = vmatmul.mubr.f32.gmra.mrb[0].mxu0 %v2298
  %v2371 = vpop.f32.mrb[0].mxu0
  %v2372 = vadd.f32 %v2293, %v2371
  %v2373 = vpop.f32.mrb[0].mxu0
  %2374 = vdwg.mxu0
  %v2375 = vadd.f32 %v2177, %v2367
  %v2376 = vadd.f32 %v2178, %v2372
  %v2377 = vld [vmem:[%s3 + $0x19] sm:$0x1]
  %v2378 = vld [vmem:[%s3 + $0x1a] sm:$0x1]
  %v2379 = vsel %vm21, %v2375, 0.0
  %2380 = vadd.xlane.f32.xlu0 %v2379
  %v2381 = vpop.xlane.xlu0 %2380
  %v2382 = vsel %vm21, %v2376, 0.0
  %2383 = vadd.xlane.f32.xlu0 %v2382
  %v2384 = vpop.xlane.xlu0 %2383
  %v2385 = vmul.f32 %v2381, %v28
  %v2386 = vmul.f32 %v2384, %v28
  %v2387 = vsub.f32 %v2375, %v2385
  %v2388 = vsub.f32 %v2376, %v2386
  %v2389 = vmul.f32 %v2387, %v2387
  %v2390 = vmul.f32 %v2388, %v2388
  %v2391 = vsel %vm21, %v2389, 0.0
  %2392 = vadd.xlane.f32.xlu0 %v2391
  %v2393 = vpop.xlane.xlu0 %2392
  %v2394 = vsel %vm21, %v2390, 0.0
  %2395 = vadd.xlane.f32.xlu0 %v2394
  %v2396 = vpop.xlane.xlu0 %2395
  %v2397 = vmul.f32 %v2393, %v28
  %v2398 = vmul.f32 %v2396, %v28
  %v2399 = vadd.f32 %v2397, 1e-12
  %v2400 = vadd.f32 %v2398, 1e-12
  %v2401 = vrsqrt.pop %v2399
  %v2402 = vrsqrt.pop %v2400
  %v2403 = vmul.f32 %v2387, %v2401
  %v2404 = vmul.f32 %v2388, %v2402
  %v2405 = vlaneseq
  %v2406 = vshrl.u32 %v2405, 7
  %v2407 = vsub.s32 0, %v2406
  %v2408 = vrot.slane %v2377, %v2407
  %v2409 = vmul.f32 %v2403, %v2408
  %v2410 = vmul.f32 %v2404, %v2408
  %v2411 = vlaneseq
  %v2412 = vshrl.u32 %v2411, 7
  %v2413 = vsub.s32 0, %v2412
  %v2414 = vrot.slane %v2378, %v2413
  %v2415 = vadd.f32 %v2409, %v2414
  %v2416 = vadd.f32 %v2410, %v2414
  %s2417 = scalar_lea.vmem %s2, 1024
  %v2418 = vld [vmem:[%s2417] sm:$0xff]
  %v2419 = vld [vmem:[%s2417 + $0x8] sm:$0xff]
  %v2420 = vld [vmem:[%s2417 + $0x10] sm:$0xff]
  %v2421 = vld [vmem:[%s2417 + $0x18] sm:$0xff]
  %v2422 = vld [vmem:[%s3 + $0x2] sm:$0x1]
  %v2423 = vlaneseq
  %v2424 = vshrl.u32 %v2423, 7
  %v2425 = vsub.s32 0, %v2424
  %v2426 = vrot.slane %v2422, %v2425
  %v2428 = vsel %vm21, %v2415, 0
  %v2431 = vsel %vm21, %v2416, 0
  %2433 = vmatprep.subr.mxu0 0.0
  %2434 = vmatpush1.msra.mxu0 %v2418
  %2435 = vmatprep.subr.mxu0 0.0
  %2436 = vmatpush1.msra.mxu0 %v2419
  %2437 = vmatprep.subr.mxu0 0.0
  %2438 = vmatpush1.msra.mxu0 %v2420
  %2439 = vmatprep.subr.mxu0 0.0
  %2440 = vmatpush1.msra.mxu0 %v2421
  %2441 = vmatprep.subr.mxu0 0.0
  %2442 = vmatpush1.msra.mxu0 0.0
  %2443 = vmatprep.subr.mxu0 0.0
  %2444 = vmatpush1.msra.mxu0 0.0
  %2445 = vmatprep.subr.mxu0 0.0
  %2446 = vmatpush1.msra.mxu0 0.0
  %2447 = vmatprep.subr.mxu0 0.0
  %2448 = vmatpush1.msra.mxu0 0.0
  %2449 = vmatprep.subr.mxu0 0.0
  %2450 = vmatpush1.msra.mxu0 0.0
  %2451 = vmatprep.subr.mxu0 0.0
  %2452 = vmatpush1.msra.mxu0 0.0
  %2453 = vmatprep.subr.mxu0 0.0
  %2454 = vmatpush1.msra.mxu0 0.0
  %2455 = vmatprep.subr.mxu0 0.0
  %2456 = vmatpush1.msra.mxu0 0.0
  %2457 = vmatprep.subr.mxu0 0.0
  %2458 = vmatpush1.msra.mxu0 0.0
  %2459 = vmatprep.subr.mxu0 0.0
  %2460 = vmatpush1.msra.mxu0 0.0
  %2461 = vmatprep.subr.mxu0 0.0
  %2462 = vmatpush1.msra.mxu0 0.0
  %2463 = vmatprep.subr.mxu0 0.0
  %2464 = vmatpush1.msra.mxu0 0.0
  %2465 = vmatprep.subr.mxu0 0.0
  %2466 = vmatpush1.msra.mxu0 0.0
  %2467 = vmatprep.subr.mxu0 0.0
  %2468 = vmatpush1.msra.mxu0 0.0
  %2469 = vmatprep.subr.mxu0 0.0
  %2470 = vmatpush1.msra.mxu0 0.0
  %2471 = vmatprep.subr.mxu0 0.0
  %2472 = vmatpush1.msra.mxu0 0.0
  %2473 = vmatprep.subr.mxu0 0.0
  %2474 = vmatpush1.msra.mxu0 0.0
  %2475 = vmatprep.subr.mxu0 0.0
  %2476 = vmatpush1.msra.mxu0 0.0
  %2477 = vmatprep.subr.mxu0 0.0
  %2478 = vmatpush1.msra.mxu0 0.0
  %2479 = vmatprep.subr.mxu0 0.0
  %2480 = vmatpush1.msra.mxu0 0.0
  %2481 = vmatprep.subr.mxu0 0.0
  %2482 = vmatpush1.msra.mxu0 0.0
  %2483 = vmatprep.subr.mxu0 0.0
  %2484 = vmatpush1.msra.mxu0 0.0
  %2485 = vmatprep.subr.mxu0 0.0
  %2486 = vmatpush1.msra.mxu0 0.0
  %2487 = vmatprep.subr.mxu0 0.0
  %2488 = vmatpush1.msra.mxu0 0.0
  %2489 = vmatprep.subr.mxu0 0.0
  %2490 = vmatpush1.msra.mxu0 0.0
  %2491 = vmatprep.subr.mxu0 0.0
  %2492 = vmatpush1.msra.mxu0 0.0
  %2493 = vmatprep.subr.mxu0 0.0
  %2494 = vmatpush1.msra.mxu0 0.0
  %2495 = vmatprep.subr.mxu0 0.0
  %2496 = vmatpush1.msra.mxu0 0.0
  %2497 = vmatprep.mubr.f32.mxu0 0.0
  %2498 = vmatmul.mubr.f32.gmra.mrb[0].mxu0 %v2428
  %v2499 = vpop.f32.mrb[0].mxu0
  %v2500 = vadd.f32 %v2426, %v2499
  %v2501 = vpop.f32.mrb[0].mxu0
  %2502 = vmatprep.mubr.f32.mxu0 0.0
  %2503 = vmatmul.mubr.f32.gmra.mrb[0].mxu0 %v2431
  %v2504 = vpop.f32.mrb[0].mxu0
  %v2505 = vadd.f32 %v2426, %v2504
  %v2506 = vpop.f32.mrb[0].mxu0
  %2507 = vdwg.mxu0
  %2508 = vst [vmem:[%s4] sm:$0xff] %v2500
  %2509 = vst [vmem:[%s4 + $0x8] sm:$0xff] %v2505
  // Predicated region
  $region18: #{cola_classifier_forward.1} parent=0 // pred_check
    _
  $region19: #{cola_classifier_forward.1} parent=0 // pred_check_branch
    %2511 = sbr.rel (0) target = $region21
  $region20: #{cola_classifier_forward.1} parent=0 // pred_region
    _
  $region21: #{cola_classifier_forward.1} parent=0 // pred_fallthru
    _
  // Predicated region
  $region22: #{cola_classifier_forward.1} parent=0 // pred_check
    _
  $region23: #{cola_classifier_forward.1} parent=0 // pred_check_branch
    %2513 = sbr.rel (0) target = $region25
  $region24: #{cola_classifier_forward.1} parent=0 // pred_region
    _
  $region25: #{cola_classifier_forward.1} parent=0 // pred_fallthru
    _

</llo_original>
